<compile_context>
chip_gen: v6e
topology: v6e:2x2x1
jax: 0.10.0
libtpu: 0.0.40
codegen_flags: <defaults>
</compile_context>

<pallas_src>
import jax
import jax.numpy as jnp
from jax.experimental import pallas as pl
from jax.experimental.pallas import tpu as pltpu

_LN_EPS = 1e-5
_MIB = 1024 * 1024


def _make_fcblock_kernel(is_fclayer, widths, true_fouts, param_cols, compute_dtype):
    """Kernel factory.  All layer metadata is static (Python) so the layer loop
    fully unrolls.  `widths[li]` is the (possibly padded) out-width of layer li,
    `true_fouts[li]` the real nn.Linear out_features."""
    n_layers = len(is_fclayer)

    def kernel(*refs):
        x_ref = refs[0]                      # (tile_b, Fin0), compute_dtype
        p_ref = refs[1]                      # (L, 3, param_cols) f32: [bias;gamma;beta]
        w_refs = refs[2:2 + n_layers]        # per-layer (Fin_l, width_l) compute_dtype
        o_ref = refs[-1]                     # (tile_b, width_last)

        h = x_ref[...]
        for li in range(n_layers):           # static unroll over layers
            wl = widths[li]
            # MXU matmul, f32 accumulation.
            y = jnp.dot(h.astype(compute_dtype), w_refs[li][...],
                        preferred_element_type=jnp.float32)
            p = p_ref[li]                    # (3, param_cols) f32
            if wl < param_cols:
                p = p[:, :wl]
            y = y + p[0:1, :]                # bias (padded lanes add exactly 0)
            if is_fclayer[li]:
                n_true = float(true_fouts[li])
                if wl != true_fouts[li]:
                    # Padded lanes are exactly zero (zero W columns, zero bias),
                    # so plain sums over the padded width divided by n_true give
                    # the true-feature moments.  Biased variance, eps in rsqrt
                    # -> matches torch.nn.LayerNorm.
                    mean = jnp.sum(y, axis=-1, keepdims=True) / n_true
                    var = jnp.sum(y * y, axis=-1, keepdims=True) / n_true - mean * mean
                else:
                    mean = jnp.mean(y, axis=-1, keepdims=True)
                    var = jnp.mean((y - mean) ** 2, axis=-1, keepdims=True)
                y = (y - mean) * jax.lax.rsqrt(var + _LN_EPS)
                y = y * p[1:2, :] + p[2:3, :]
                # Sigmoid: exp on the EUP; reciprocal also on the EUP (frees VALU).
                y = pl.reciprocal(1.0 + jnp.exp(-y), approx=True)
            h = y
        o_ref[...] = h.astype(o_ref.dtype)

    return kernel


def _tpu_vmem_caps():
    """Returns (physical_vmem, usable_cap, prefer_even_grid).

    v7x-class chips (<=64 MiB per-core VMEM, 2 TensorCores) want scheduling
    headroom and an even grid; v5e/v6e (128 MiB, 1 TC) can use a much larger
    scoped limit and happily run grid=1."""
    phys = 64 * _MIB
    try:
        phys = int(pltpu.get_tpu_info().vmem_capacity_bytes)
    except Exception:
        pass
    if phys <= 64 * _MIB:
        return phys, 52 * _MIB, True
    return phys, min(100 * _MIB, phys - 16 * _MIB), False


def _divisor_tiles(batch, cap):
    return [c for c in range(8, min(cap, batch) + 1, 8) if batch % c == 0]


def _pick_tile_b(batch, *, max_tile_b=1024, prefer_even_grid=False):
    """Largest multiple-of-8 tile dividing `batch` (weights are resident, so
    fewer grid steps = less fixed overhead).  On v7x-class chips keep grid >= 2
    so both TensorCores get work."""
    cap = min(max_tile_b, batch)
    if prefer_even_grid and batch >= 16:
        cap = min(cap, max(8, batch // 2))
    cands = _divisor_tiles(batch, cap)
    return cands[-1] if cands else batch     # fallback: whole batch, 1 tile


def fc_block(x, weights, params, is_fclayer, *, tile_b=None,
             compute_dtype=jnp.bfloat16, out_dtype=jnp.float32,
             pad_output_lanes=True):
    """Fused FCBlock forward.

    x:          (B, Fin0)
    weights:    list of (Fin_l, Fout_l) matrices (y = x @ W + b layout)
    params:     list of (3, Fout_l) arrays, rows = [bias, ln_gamma, ln_beta]
    is_fclayer: list[bool]; True -> Linear+LayerNorm+Sigmoid, False -> Linear only
    """
    batch, fin0 = x.shape
    n_layers = len(weights)
    true_fouts = tuple(int(w.shape[1]) for w in weights)
    fout_last = true_fouts[-1]

    # Lane-dense output: pad the final layer to a multiple of 128 lanes.
    fout_pad = ((fout_last + 127) // 128) * 128 if pad_output_lanes else fout_last
    widths = true_fouts[:-1] + (fout_pad,)
    param_cols = max(widths)

    _, vmem_cap, prefer_even = _tpu_vmem_caps()
    if tile_b is None:
        tile_b = _pick_tile_b(batch, prefer_even_grid=prefer_even)
    assert batch % tile_b == 0, "batch must be divisible by tile_b"

    # bf16 inputs halve HBM DMA bytes; accumulation stays f32.
    x_c = x.astype(compute_dtype)
    w_list = []
    for li, w in enumerate(weights):
        w = w.astype(compute_dtype)
        if widths[li] != w.shape[1]:
            w = jnp.pad(w, ((0, 0), (0, widths[li] - w.shape[1])))   # zero cols
        w_list.append(w)
    p_rows = []
    for p in params:
        p = p.astype(jnp.float32)
        if p.shape[1] < param_cols:
            p = jnp.pad(p, ((0, 0), (0, param_cols - p.shape[1])))   # zero bias/gamma/beta
        p_rows.append(p)
    p_all = jnp.stack(p_rows, axis=0)        # (L, 3, param_cols) grid-invariant

    out_itemsize = jnp.dtype(out_dtype).itemsize

    def vmem_est(tb):
        est = 2 * tb * fin0 * x_c.dtype.itemsize          # x tiles (double-buffered)
        est += 2 * tb * fout_pad * out_itemsize            # out tiles (double-buffered)
        est += 2 * sum(w.size * w.dtype.itemsize for w in w_list)  # resident weights (conservative)
        est += 2 * n_layers * 8 * param_cols * 4            # resident params (sublane-padded)
        est += 4 * tb * max(widths) * 4                     # f32 activation temporaries
        return est

    # Shrink tile_b only if the estimate would not fit the generation's cap.
    while tile_b > 8 and 1.4 * vmem_est(tile_b) > vmem_cap:
        smaller = _divisor_tiles(batch, tile_b - 1)
        if not smaller:
            break
        tile_b = smaller[-1]

    vmem_limit = int(min(vmem_cap, max(16 * _MIB, 1.4 * vmem_est(tile_b))))

    def resident_spec(shape, index_map):
        # Grid-invariant block: one VMEM buffer is enough.
        if hasattr(pl, "Buffered"):
            try:
                return pl.BlockSpec(shape, index_map, pipeline_mode=pl.Buffered(1))
            except TypeError:
                pass
        return pl.BlockSpec(shape, index_map)

    kernel = _make_fcblock_kernel(tuple(is_fclayer), widths, true_fouts,
                                  param_cols, compute_dtype)

    def build(single_buffer_residents):
        mk = resident_spec if single_buffer_residents else pl.BlockSpec
        in_specs = [pl.BlockSpec((tile_b, fin0), lambda i: (i, 0)),
                    mk(p_all.shape, lambda i: (0, 0, 0))]
        for w in w_list:
            in_specs.append(mk(w.shape, lambda i: (0, 0)))
        return pl.pallas_call(
            kernel,
            out_shape=jax.ShapeDtypeStruct((batch, fout_pad), out_dtype),
            grid_spec=pltpu.PrefetchScalarGridSpec(
                num_scalar_prefetch=0,
                grid=(batch // tile_b,),
                in_specs=in_specs,
                out_specs=pl.BlockSpec((tile_b, fout_pad), lambda i: (i, 0)),
            ),
            compiler_params=pltpu.CompilerParams(
                dimension_semantics=("parallel",),      # batch axis shards across TCs
                vmem_limit_bytes=vmem_limit,
            ),
        )

    args = [x_c, p_all] + w_list
    try:
        out = build(True)(*args)
    except Exception:
        # Fallback: default double-buffered resident blocks (still correct).
        out = build(False)(*args)

    if fout_pad != fout_last:
        out = out[:, :fout_last]             # drop lane padding outside the kernel
    return out


def _ref_forward_f32(x, weights, params, is_fclayer):
    """True fp32 reference (PyTorch FCBlock semantics)."""
    h = x.astype(jnp.float32)
    for w, p, fc in zip(weights, params, is_fclayer):
        y = h @ w.astype(jnp.float32) + p[0].astype(jnp.float32)
        if fc:
            mu = jnp.mean(y, axis=-1, keepdims=True)
            var = jnp.mean((y - mu) ** 2, axis=-1, keepdims=True)
            y = (y - mu) * jax.lax.rsqrt(var + _LN_EPS)
            y = y * p[1] + p[2]
            y = jax.nn.sigmoid(y)
        h = y
    return h


def _ref_forward_bf16(x, weights, params, is_fclayer):
    """Plain-JAX reference mirroring the kernel's dtype choices (bf16 matmul,
    f32 accumulation and epilogue, exact sigmoid)."""
    h = x.astype(jnp.bfloat16)
    for w, p, fc in zip(weights, params, is_fclayer):
        y = jnp.dot(h.astype(jnp.bfloat16), w.astype(jnp.bfloat16),
                    preferred_element_type=jnp.float32)
        y = y + p[0].astype(jnp.float32)
        if fc:
            mu = jnp.mean(y, axis=-1, keepdims=True)
            var = jnp.mean((y - mu) ** 2, axis=-1, keepdims=True)
            y = (y - mu) * jax.lax.rsqrt(var + _LN_EPS)
            y = y * p[1] + p[2]
            y = jax.nn.sigmoid(y)
        h = y
    return h.astype(jnp.float32)


if __name__ == "__main__":
    # FCBlock(hidden_ch=128, num_hidden_layers=2, in_features=32,
    #         out_features=64, outermost_linear=False)
    B, in_features, hidden_ch = 256, 32, 128
    num_hidden_layers, out_features = 2, 64
    outermost_linear = False

    layer_dims = [(in_features, hidden_ch)]
    layer_dims += [(hidden_ch, hidden_ch)] * num_hidden_layers
    layer_dims += [(hidden_ch, out_features)]
    is_fclayer = [True] * (num_hidden_layers + 1) + [not outermost_linear]

    key = jax.random.PRNGKey(0)
    key, kx = jax.random.split(key)
    x = jax.random.normal(kx, (B, in_features), dtype=jnp.float32)

    weights, params = [], []
    for fin, fout in layer_dims:
        key, kw, kb = jax.random.split(key, 3)
        bound = 1.0 / (fin ** 0.5)                 # PyTorch Linear init bounds
        w = jax.random.uniform(kw, (fin, fout), minval=-bound, maxval=bound,
                               dtype=jnp.float32)
        b = jax.random.uniform(kb, (fout,), minval=-bound, maxval=bound,
                               dtype=jnp.float32)
        gamma = jnp.ones((fout,), jnp.float32)     # LayerNorm default weight
        beta = jnp.zeros((fout,), jnp.float32)     # LayerNorm default bias
        weights.append(w)
        params.append(jnp.stack([b, gamma, beta], axis=0))  # folded (3, Fout)

    out = fc_block(x, weights, params, is_fclayer)
    out = jax.block_until_ready(out)
    assert out.shape == (B, out_features), out.shape

    ref_bf16 = _ref_forward_bf16(x, weights, params, is_fclayer)
    ref_f32 = _ref_forward_f32(x, weights, params, is_fclayer)
    err_bf16 = float(jnp.max(jnp.abs(out - ref_bf16)))
    err_f32 = float(jnp.max(jnp.abs(out - ref_f32)))
    assert err_bf16 < 1e-2, f"bf16-mirrored ref max abs error {err_bf16}"
    assert err_f32 < 5e-2, f"f32 reference max abs error {err_f32}"

    print("KERNEL_OK")
</pallas_src>

<mosaic_0001>
module attributes {stable_mosaic.version = 11 : i64} {
  func.func @kernel(%arg0: i32, %arg1: memref<128x32xbf16, #tpu.memory_space<vmem>>, %arg2: memref<4x3x128xf32, #tpu.memory_space<vmem>>, %arg3: memref<32x128xbf16, #tpu.memory_space<vmem>>, %arg4: memref<128x128xbf16, #tpu.memory_space<vmem>>, %arg5: memref<128x128xbf16, #tpu.memory_space<vmem>>, %arg6: memref<128x128xbf16, #tpu.memory_space<vmem>>, %arg7: memref<128x128xf32, #tpu.memory_space<vmem>>) attributes {dimension_semantics = [#tpu.dimension_semantics<parallel>], iteration_bounds = array<i64: 2>, scalar_prefetch = 0 : i64, scratch_operands = 0 : i64, tpu.core_type = #tpu.core_type<tc>, window_params = [{transform_indices = @transform_0, window_bounds = array<i64: 128, 32>}, {pipeline_mode = #tpu.pipeline_mode<synchronous>, transform_indices = @transform_1, window_bounds = array<i64: 4, 3, 128>}, {pipeline_mode = #tpu.pipeline_mode<synchronous>, transform_indices = @transform_2, window_bounds = array<i64: 32, 128>}, {pipeline_mode = #tpu.pipeline_mode<synchronous>, transform_indices = @transform_3, window_bounds = array<i64: 128, 128>}, {pipeline_mode = #tpu.pipeline_mode<synchronous>, transform_indices = @transform_4, window_bounds = array<i64: 128, 128>}, {pipeline_mode = #tpu.pipeline_mode<synchronous>, transform_indices = @transform_5, window_bounds = array<i64: 128, 128>}, {transform_indices = @transform_6, window_bounds = array<i64: 128, 128>}]} {
    %c0 = arith.constant 0 : index
    %c0_0 = arith.constant 0 : index
    %0 = vector.load %arg1[%c0, %c0_0] : memref<128x32xbf16, #tpu.memory_space<vmem>>, vector<128x32xbf16>
    %c0_1 = arith.constant 0 : index
    %c0_2 = arith.constant 0 : index
    %1 = vector.load %arg3[%c0_1, %c0_2] : memref<32x128xbf16, #tpu.memory_space<vmem>>, vector<32x128xbf16>
    %cst = arith.constant dense<0.000000e+00> : vector<128x128xf32>
    %2 = tpu.matmul %0, %1, %cst {dimension_numbers = #tpu.dot_dimension_numbers<[1], [0], [0], [1], [0, 0, 1, 1], [], []>} : vector<128x32xbf16>, vector<32x128xbf16>, vector<128x128xf32> -> vector<128x128xf32>
    %c0_3 = arith.constant 0 : index
    %c0_4 = arith.constant 0 : index
    %c0_5 = arith.constant 0 : index
    %3 = vector.load %arg2[%c0_3, %c0_4, %c0_5] : memref<4x3x128xf32, #tpu.memory_space<vmem>>, vector<1x3x128xf32>
    %4 = vector.shape_cast %3 : vector<1x3x128xf32> to vector<3x128xf32>
    %5 = vector.extract_strided_slice %4 {offsets = [0, 0], sizes = [1, 128], strides = [1, 1]} : vector<3x128xf32> to vector<1x128xf32>
    %6 = vector.broadcast %5 : vector<1x128xf32> to vector<128x128xf32>
    %7 = arith.addf %2, %6 : vector<128x128xf32>
    %cst_6 = arith.constant dense<0.000000e+00> : vector<128xf32>
    %8 = vector.multi_reduction <add>, %7, %cst_6 [1] : vector<128x128xf32> to vector<128xf32>
    %9 = vector.shape_cast %8 : vector<128xf32> to vector<128x1xf32>
    %cst_7 = arith.constant 1.280000e+02 : f32
    %10 = vector.broadcast %cst_7 : f32 to vector<128x1xf32>
    %11 = arith.divf %9, %10 : vector<128x1xf32>
    %12 = vector.broadcast %11 : vector<128x1xf32> to vector<128x128xf32>
    %13 = arith.subf %7, %12 : vector<128x128xf32>
    %14 = arith.mulf %13, %13 : vector<128x128xf32>
    %cst_8 = arith.constant dense<0.000000e+00> : vector<128xf32>
    %15 = vector.multi_reduction <add>, %14, %cst_8 [1] : vector<128x128xf32> to vector<128xf32>
    %16 = vector.shape_cast %15 : vector<128xf32> to vector<128x1xf32>
    %cst_9 = arith.constant 1.280000e+02 : f32
    %17 = vector.broadcast %cst_9 : f32 to vector<128x1xf32>
    %18 = arith.divf %16, %17 : vector<128x1xf32>
    %19 = vector.broadcast %11 : vector<128x1xf32> to vector<128x128xf32>
    %20 = arith.subf %7, %19 : vector<128x128xf32>
    %cst_10 = arith.constant 9.99999974E-6 : f32
    %21 = vector.broadcast %cst_10 : f32 to vector<128x1xf32>
    %22 = arith.addf %18, %21 : vector<128x1xf32>
    %23 = math.rsqrt %22 : vector<128x1xf32>
    %24 = vector.broadcast %23 : vector<128x1xf32> to vector<128x128xf32>
    %25 = arith.mulf %20, %24 : vector<128x128xf32>
    %26 = vector.extract_strided_slice %4 {offsets = [1, 0], sizes = [1, 128], strides = [1, 1]} : vector<3x128xf32> to vector<1x128xf32>
    %27 = vector.broadcast %26 : vector<1x128xf32> to vector<128x128xf32>
    %28 = arith.mulf %25, %27 : vector<128x128xf32>
    %29 = vector.extract_strided_slice %4 {offsets = [2, 0], sizes = [1, 128], strides = [1, 1]} : vector<3x128xf32> to vector<1x128xf32>
    %30 = vector.broadcast %29 : vector<1x128xf32> to vector<128x128xf32>
    %31 = arith.addf %28, %30 : vector<128x128xf32>
    %cst_11 = arith.constant 0.000000e+00 : f32
    %32 = vector.broadcast %cst_11 : f32 to vector<128x128xf32>
    %33 = arith.subf %32, %31 : vector<128x128xf32>
    %34 = math.exp %33 : vector<128x128xf32>
    %cst_12 = arith.constant 1.000000e+00 : f32
    %35 = vector.broadcast %cst_12 : f32 to vector<128x128xf32>
    %36 = arith.addf %35, %34 : vector<128x128xf32>
    %37 = tpu.reciprocal %36 {approx = true} : vector<128x128xf32> -> vector<128x128xf32>
    %38 = arith.truncf %37 : vector<128x128xf32> to vector<128x128xbf16>
    %c0_13 = arith.constant 0 : index
    %c0_14 = arith.constant 0 : index
    %39 = vector.load %arg4[%c0_13, %c0_14] : memref<128x128xbf16, #tpu.memory_space<vmem>>, vector<128x128xbf16>
    %cst_15 = arith.constant dense<0.000000e+00> : vector<128x128xf32>
    %40 = tpu.matmul %38, %39, %cst_15 {dimension_numbers = #tpu.dot_dimension_numbers<[1], [0], [0], [1], [0, 0, 1, 1], [], []>} : vector<128x128xbf16>, vector<128x128xbf16>, vector<128x128xf32> -> vector<128x128xf32>
    %c1 = arith.constant 1 : index
    %c0_16 = arith.constant 0 : index
    %c0_17 = arith.constant 0 : index
    %41 = vector.load %arg2[%c1, %c0_16, %c0_17] : memref<4x3x128xf32, #tpu.memory_space<vmem>>, vector<1x3x128xf32>
    %42 = vector.shape_cast %41 : vector<1x3x128xf32> to vector<3x128xf32>
    %43 = vector.extract_strided_slice %42 {offsets = [0, 0], sizes = [1, 128], strides = [1, 1]} : vector<3x128xf32> to vector<1x128xf32>
    %44 = vector.broadcast %43 : vector<1x128xf32> to vector<128x128xf32>
    %45 = arith.addf %40, %44 : vector<128x128xf32>
    %cst_18 = arith.constant dense<0.000000e+00> : vector<128xf32>
    %46 = vector.multi_reduction <add>, %45, %cst_18 [1] : vector<128x128xf32> to vector<128xf32>
    %47 = vector.shape_cast %46 : vector<128xf32> to vector<128x1xf32>
    %cst_19 = arith.constant 1.280000e+02 : f32
    %48 = vector.broadcast %cst_19 : f32 to vector<128x1xf32>
    %49 = arith.divf %47, %48 : vector<128x1xf32>
    %50 = vector.broadcast %49 : vector<128x1xf32> to vector<128x128xf32>
    %51 = arith.subf %45, %50 : vector<128x128xf32>
    %52 = arith.mulf %51, %51 : vector<128x128xf32>
    %cst_20 = arith.constant dense<0.000000e+00> : vector<128xf32>
    %53 = vector.multi_reduction <add>, %52, %cst_20 [1] : vector<128x128xf32> to vector<128xf32>
    %54 = vector.shape_cast %53 : vector<128xf32> to vector<128x1xf32>
    %cst_21 = arith.constant 1.280000e+02 : f32
    %55 = vector.broadcast %cst_21 : f32 to vector<128x1xf32>
    %56 = arith.divf %54, %55 : vector<128x1xf32>
    %57 = vector.broadcast %49 : vector<128x1xf32> to vector<128x128xf32>
    %58 = arith.subf %45, %57 : vector<128x128xf32>
    %cst_22 = arith.constant 9.99999974E-6 : f32
    %59 = vector.broadcast %cst_22 : f32 to vector<128x1xf32>
    %60 = arith.addf %56, %59 : vector<128x1xf32>
    %61 = math.rsqrt %60 : vector<128x1xf32>
    %62 = vector.broadcast %61 : vector<128x1xf32> to vector<128x128xf32>
    %63 = arith.mulf %58, %62 : vector<128x128xf32>
    %64 = vector.extract_strided_slice %42 {offsets = [1, 0], sizes = [1, 128], strides = [1, 1]} : vector<3x128xf32> to vector<1x128xf32>
    %65 = vector.broadcast %64 : vector<1x128xf32> to vector<128x128xf32>
    %66 = arith.mulf %63, %65 : vector<128x128xf32>
    %67 = vector.extract_strided_slice %42 {offsets = [2, 0], sizes = [1, 128], strides = [1, 1]} : vector<3x128xf32> to vector<1x128xf32>
    %68 = vector.broadcast %67 : vector<1x128xf32> to vector<128x128xf32>
    %69 = arith.addf %66, %68 : vector<128x128xf32>
    %cst_23 = arith.constant 0.000000e+00 : f32
    %70 = vector.broadcast %cst_23 : f32 to vector<128x128xf32>
    %71 = arith.subf %70, %69 : vector<128x128xf32>
    %72 = math.exp %71 : vector<128x128xf32>
    %cst_24 = arith.constant 1.000000e+00 : f32
    %73 = vector.broadcast %cst_24 : f32 to vector<128x128xf32>
    %74 = arith.addf %73, %72 : vector<128x128xf32>
    %75 = tpu.reciprocal %74 {approx = true} : vector<128x128xf32> -> vector<128x128xf32>
    %76 = arith.truncf %75 : vector<128x128xf32> to vector<128x128xbf16>
    %c0_25 = arith.constant 0 : index
    %c0_26 = arith.constant 0 : index
    %77 = vector.load %arg5[%c0_25, %c0_26] : memref<128x128xbf16, #tpu.memory_space<vmem>>, vector<128x128xbf16>
    %cst_27 = arith.constant dense<0.000000e+00> : vector<128x128xf32>
    %78 = tpu.matmul %76, %77, %cst_27 {dimension_numbers = #tpu.dot_dimension_numbers<[1], [0], [0], [1], [0, 0, 1, 1], [], []>} : vector<128x128xbf16>, vector<128x128xbf16>, vector<128x128xf32> -> vector<128x128xf32>
    %c2 = arith.constant 2 : index
    %c0_28 = arith.constant 0 : index
    %c0_29 = arith.constant 0 : index
    %79 = vector.load %arg2[%c2, %c0_28, %c0_29] : memref<4x3x128xf32, #tpu.memory_space<vmem>>, vector<1x3x128xf32>
    %80 = vector.shape_cast %79 : vector<1x3x128xf32> to vector<3x128xf32>
    %81 = vector.extract_strided_slice %80 {offsets = [0, 0], sizes = [1, 128], strides = [1, 1]} : vector<3x128xf32> to vector<1x128xf32>
    %82 = vector.broadcast %81 : vector<1x128xf32> to vector<128x128xf32>
    %83 = arith.addf %78, %82 : vector<128x128xf32>
    %cst_30 = arith.constant dense<0.000000e+00> : vector<128xf32>
    %84 = vector.multi_reduction <add>, %83, %cst_30 [1] : vector<128x128xf32> to vector<128xf32>
    %85 = vector.shape_cast %84 : vector<128xf32> to vector<128x1xf32>
    %cst_31 = arith.constant 1.280000e+02 : f32
    %86 = vector.broadcast %cst_31 : f32 to vector<128x1xf32>
    %87 = arith.divf %85, %86 : vector<128x1xf32>
    %88 = vector.broadcast %87 : vector<128x1xf32> to vector<128x128xf32>
    %89 = arith.subf %83, %88 : vector<128x128xf32>
    %90 = arith.mulf %89, %89 : vector<128x128xf32>
    %cst_32 = arith.constant dense<0.000000e+00> : vector<128xf32>
    %91 = vector.multi_reduction <add>, %90, %cst_32 [1] : vector<128x128xf32> to vector<128xf32>
    %92 = vector.shape_cast %91 : vector<128xf32> to vector<128x1xf32>
    %cst_33 = arith.constant 1.280000e+02 : f32
    %93 = vector.broadcast %cst_33 : f32 to vector<128x1xf32>
    %94 = arith.divf %92, %93 : vector<128x1xf32>
    %95 = vector.broadcast %87 : vector<128x1xf32> to vector<128x128xf32>
    %96 = arith.subf %83, %95 : vector<128x128xf32>
    %cst_34 = arith.constant 9.99999974E-6 : f32
    %97 = vector.broadcast %cst_34 : f32 to vector<128x1xf32>
    %98 = arith.addf %94, %97 : vector<128x1xf32>
    %99 = math.rsqrt %98 : vector<128x1xf32>
    %100 = vector.broadcast %99 : vector<128x1xf32> to vector<128x128xf32>
    %101 = arith.mulf %96, %100 : vector<128x128xf32>
    %102 = vector.extract_strided_slice %80 {offsets = [1, 0], sizes = [1, 128], strides = [1, 1]} : vector<3x128xf32> to vector<1x128xf32>
    %103 = vector.broadcast %102 : vector<1x128xf32> to vector<128x128xf32>
    %104 = arith.mulf %101, %103 : vector<128x128xf32>
    %105 = vector.extract_strided_slice %80 {offsets = [2, 0], sizes = [1, 128], strides = [1, 1]} : vector<3x128xf32> to vector<1x128xf32>
    %106 = vector.broadcast %105 : vector<1x128xf32> to vector<128x128xf32>
    %107 = arith.addf %104, %106 : vector<128x128xf32>
    %cst_35 = arith.constant 0.000000e+00 : f32
    %108 = vector.broadcast %cst_35 : f32 to vector<128x128xf32>
    %109 = arith.subf %108, %107 : vector<128x128xf32>
    %110 = math.exp %109 : vector<128x128xf32>
    %cst_36 = arith.constant 1.000000e+00 : f32
    %111 = vector.broadcast %cst_36 : f32 to vector<128x128xf32>
    %112 = arith.addf %111, %110 : vector<128x128xf32>
    %113 = tpu.reciprocal %112 {approx = true} : vector<128x128xf32> -> vector<128x128xf32>
    %114 = arith.truncf %113 : vector<128x128xf32> to vector<128x128xbf16>
    %c0_37 = arith.constant 0 : index
    %c0_38 = arith.constant 0 : index
    %115 = vector.load %arg6[%c0_37, %c0_38] : memref<128x128xbf16, #tpu.memory_space<vmem>>, vector<128x128xbf16>
    %cst_39 = arith.constant dense<0.000000e+00> : vector<128x128xf32>
    %116 = tpu.matmul %114, %115, %cst_39 {dimension_numbers = #tpu.dot_dimension_numbers<[1], [0], [0], [1], [0, 0, 1, 1], [], []>} : vector<128x128xbf16>, vector<128x128xbf16>, vector<128x128xf32> -> vector<128x128xf32>
    %c3 = arith.constant 3 : index
    %c0_40 = arith.constant 0 : index
    %c0_41 = arith.constant 0 : index
    %117 = vector.load %arg2[%c3, %c0_40, %c0_41] : memref<4x3x128xf32, #tpu.memory_space<vmem>>, vector<1x3x128xf32>
    %118 = vector.shape_cast %117 : vector<1x3x128xf32> to vector<3x128xf32>
    %119 = vector.extract_strided_slice %118 {offsets = [0, 0], sizes = [1, 128], strides = [1, 1]} : vector<3x128xf32> to vector<1x128xf32>
    %120 = vector.broadcast %119 : vector<1x128xf32> to vector<128x128xf32>
    %121 = arith.addf %116, %120 : vector<128x128xf32>
    %cst_42 = arith.constant dense<0.000000e+00> : vector<128xf32>
    %122 = vector.multi_reduction <add>, %121, %cst_42 [1] : vector<128x128xf32> to vector<128xf32>
    %123 = vector.shape_cast %122 : vector<128xf32> to vector<128x1xf32>
    %cst_43 = arith.constant 6.400000e+01 : f32
    %124 = vector.broadcast %cst_43 : f32 to vector<128x1xf32>
    %125 = arith.divf %123, %124 : vector<128x1xf32>
    %126 = arith.mulf %121, %121 : vector<128x128xf32>
    %cst_44 = arith.constant dense<0.000000e+00> : vector<128xf32>
    %127 = vector.multi_reduction <add>, %126, %cst_44 [1] : vector<128x128xf32> to vector<128xf32>
    %128 = vector.shape_cast %127 : vector<128xf32> to vector<128x1xf32>
    %cst_45 = arith.constant 6.400000e+01 : f32
    %129 = vector.broadcast %cst_45 : f32 to vector<128x1xf32>
    %130 = arith.divf %128, %129 : vector<128x1xf32>
    %131 = arith.mulf %125, %125 : vector<128x1xf32>
    %132 = arith.subf %130, %131 : vector<128x1xf32>
    %133 = vector.broadcast %125 : vector<128x1xf32> to vector<128x128xf32>
    %134 = arith.subf %121, %133 : vector<128x128xf32>
    %cst_46 = arith.constant 9.99999974E-6 : f32
    %135 = vector.broadcast %cst_46 : f32 to vector<128x1xf32>
    %136 = arith.addf %132, %135 : vector<128x1xf32>
    %137 = math.rsqrt %136 : vector<128x1xf32>
    %138 = vector.broadcast %137 : vector<128x1xf32> to vector<128x128xf32>
    %139 = arith.mulf %134, %138 : vector<128x128xf32>
    %140 = vector.extract_strided_slice %118 {offsets = [1, 0], sizes = [1, 128], strides = [1, 1]} : vector<3x128xf32> to vector<1x128xf32>
    %141 = vector.broadcast %140 : vector<1x128xf32> to vector<128x128xf32>
    %142 = arith.mulf %139, %141 : vector<128x128xf32>
    %143 = vector.extract_strided_slice %118 {offsets = [2, 0], sizes = [1, 128], strides = [1, 1]} : vector<3x128xf32> to vector<1x128xf32>
    %144 = vector.broadcast %143 : vector<1x128xf32> to vector<128x128xf32>
    %145 = arith.addf %142, %144 : vector<128x128xf32>
    %cst_47 = arith.constant 0.000000e+00 : f32
    %146 = vector.broadcast %cst_47 : f32 to vector<128x128xf32>
    %147 = arith.subf %146, %145 : vector<128x128xf32>
    %148 = math.exp %147 : vector<128x128xf32>
    %cst_48 = arith.constant 1.000000e+00 : f32
    %149 = vector.broadcast %cst_48 : f32 to vector<128x128xf32>
    %150 = arith.addf %149, %148 : vector<128x128xf32>
    %151 = tpu.reciprocal %150 {approx = true} : vector<128x128xf32> -> vector<128x128xf32>
    %c0_49 = arith.constant 0 : index
    %c0_50 = arith.constant 0 : index
    %152 = vector.load %arg7[%c0_49, %c0_50] : memref<128x128xf32, #tpu.memory_space<vmem>>, vector<128x128xf32>
    tpu.vector_store %arg7[%c0_49, %c0_50], %151 {strides = array<i32>} : memref<128x128xf32, #tpu.memory_space<vmem>>, vector<128x128xf32>,
    return
  }
  func.func @transform_0(%arg0: i32) -> (i32, i32) {
    %c0_i32 = arith.constant 0 : i32
    %c0_i32_0 = arith.constant 0 : i32
    return %arg0, %c0_i32 : i32, i32
  }
  func.func @transform_1(%arg0: i32) -> (i32, i32, i32) {
    %c0_i32 = arith.constant 0 : i32
    %c0_i32_0 = arith.constant 0 : i32
    %c0_i32_1 = arith.constant 0 : i32
    %c0_i32_2 = arith.constant 0 : i32
    return %c0_i32, %c0_i32_0, %c0_i32_1 : i32, i32, i32
  }
  func.func @transform_2(%arg0: i32) -> (i32, i32) {
    %c0_i32 = arith.constant 0 : i32
    %c0_i32_0 = arith.constant 0 : i32
    %c0_i32_1 = arith.constant 0 : i32
    return %c0_i32, %c0_i32_0 : i32, i32
  }
  func.func @transform_3(%arg0: i32) -> (i32, i32) {
    %c0_i32 = arith.constant 0 : i32
    %c0_i32_0 = arith.constant 0 : i32
    %c0_i32_1 = arith.constant 0 : i32
    return %c0_i32, %c0_i32_0 : i32, i32
  }
  func.func @transform_4(%arg0: i32) -> (i32, i32) {
    %c0_i32 = arith.constant 0 : i32
    %c0_i32_0 = arith.constant 0 : i32
    %c0_i32_1 = arith.constant 0 : i32
    return %c0_i32, %c0_i32_0 : i32, i32
  }
  func.func @transform_5(%arg0: i32) -> (i32, i32) {
    %c0_i32 = arith.constant 0 : i32
    %c0_i32_0 = arith.constant 0 : i32
    %c0_i32_1 = arith.constant 0 : i32
    return %c0_i32, %c0_i32_0 : i32, i32
  }
  func.func @transform_6(%arg0: i32) -> (i32, i32) {
    %c0_i32 = arith.constant 0 : i32
    %c0_i32_0 = arith.constant 0 : i32
    return %arg0, %c0_i32 : i32, i32
  }
}

module attributes {stable_mosaic.version = 11 : i64} {
  func.func @kernel(%arg0: i32, %arg1: memref<128x32xbf16, #tpu.memory_space<vmem>>, %arg2: memref<4x3x128xf32, #tpu.memory_space<vmem>>, %arg3: memref<32x128xbf16, #tpu.memory_space<vmem>>, %arg4: memref<128x128xbf16, #tpu.memory_space<vmem>>, %arg5: memref<128x128xbf16, #tpu.memory_space<vmem>>, %arg6: memref<128x128xbf16, #tpu.memory_space<vmem>>, %arg7: memref<128x128xf32, #tpu.memory_space<vmem>>) attributes {dimension_semantics = [#tpu.dimension_semantics<parallel>], iteration_bounds = array<i64: 2>, scalar_prefetch = 0 : i64, scratch_operands = 0 : i64, tpu.core_type = #tpu.core_type<tc>, window_params = [{transform_indices = @transform_0, window_bounds = array<i64: 128, 32>}, {pipeline_mode = #tpu.pipeline_mode<synchronous>, transform_indices = @transform_1, window_bounds = array<i64: 4, 3, 128>}, {pipeline_mode = #tpu.pipeline_mode<synchronous>, transform_indices = @transform_2, window_bounds = array<i64: 32, 128>}, {pipeline_mode = #tpu.pipeline_mode<synchronous>, transform_indices = @transform_3, window_bounds = array<i64: 128, 128>}, {pipeline_mode = #tpu.pipeline_mode<synchronous>, transform_indices = @transform_4, window_bounds = array<i64: 128, 128>}, {pipeline_mode = #tpu.pipeline_mode<synchronous>, transform_indices = @transform_5, window_bounds = array<i64: 128, 128>}, {transform_indices = @transform_6, window_bounds = array<i64: 128, 128>}]} {
    %c0 = arith.constant 0 : index
    %c0_0 = arith.constant 0 : index
    %0 = vector.load %arg1[%c0, %c0_0] : memref<128x32xbf16, #tpu.memory_space<vmem>>, vector<128x32xbf16>
    %c0_1 = arith.constant 0 : index
    %c0_2 = arith.constant 0 : index
    %1 = vector.load %arg3[%c0_1, %c0_2] : memref<32x128xbf16, #tpu.memory_space<vmem>>, vector<32x128xbf16>
    %cst = arith.constant dense<0.000000e+00> : vector<128x128xf32>
    %2 = tpu.matmul %0, %1, %cst {dimension_numbers = #tpu.dot_dimension_numbers<[1], [0], [0], [1], [0, 0, 1, 1], [], []>} : vector<128x32xbf16>, vector<32x128xbf16>, vector<128x128xf32> -> vector<128x128xf32>
    %c0_3 = arith.constant 0 : index
    %c0_4 = arith.constant 0 : index
    %c0_5 = arith.constant 0 : index
    %3 = vector.load %arg2[%c0_3, %c0_4, %c0_5] : memref<4x3x128xf32, #tpu.memory_space<vmem>>, vector<1x3x128xf32>
    %4 = vector.shape_cast %3 : vector<1x3x128xf32> to vector<3x128xf32>
    %5 = vector.extract_strided_slice %4 {offsets = [0, 0], sizes = [1, 128], strides = [1, 1]} : vector<3x128xf32> to vector<1x128xf32>
    %6 = vector.broadcast %5 : vector<1x128xf32> to vector<128x128xf32>
    %7 = arith.addf %2, %6 : vector<128x128xf32>
    %cst_6 = arith.constant dense<0.000000e+00> : vector<128xf32>
    %8 = vector.multi_reduction <add>, %7, %cst_6 [1] : vector<128x128xf32> to vector<128xf32>
    %9 = vector.shape_cast %8 : vector<128xf32> to vector<128x1xf32>
    %cst_7 = arith.constant 1.280000e+02 : f32
    %10 = vector.broadcast %cst_7 : f32 to vector<128x1xf32>
    %11 = arith.divf %9, %10 : vector<128x1xf32>
    %12 = vector.broadcast %11 : vector<128x1xf32> to vector<128x128xf32>
    %13 = arith.subf %7, %12 : vector<128x128xf32>
    %14 = arith.mulf %13, %13 : vector<128x128xf32>
    %cst_8 = arith.constant dense<0.000000e+00> : vector<128xf32>
    %15 = vector.multi_reduction <add>, %14, %cst_8 [1] : vector<128x128xf32> to vector<128xf32>
    %16 = vector.shape_cast %15 : vector<128xf32> to vector<128x1xf32>
    %cst_9 = arith.constant 1.280000e+02 : f32
    %17 = vector.broadcast %cst_9 : f32 to vector<128x1xf32>
    %18 = arith.divf %16, %17 : vector<128x1xf32>
    %19 = vector.broadcast %11 : vector<128x1xf32> to vector<128x128xf32>
    %20 = arith.subf %7, %19 : vector<128x128xf32>
    %cst_10 = arith.constant 9.99999974E-6 : f32
    %21 = vector.broadcast %cst_10 : f32 to vector<128x1xf32>
    %22 = arith.addf %18, %21 : vector<128x1xf32>
    %23 = math.rsqrt %22 : vector<128x1xf32>
    %24 = vector.broadcast %23 : vector<128x1xf32> to vector<128x128xf32>
    %25 = arith.mulf %20, %24 : vector<128x128xf32>
    %26 = vector.extract_strided_slice %4 {offsets = [1, 0], sizes = [1, 128], strides = [1, 1]} : vector<3x128xf32> to vector<1x128xf32>
    %27 = vector.broadcast %26 : vector<1x128xf32> to vector<128x128xf32>
    %28 = arith.mulf %25, %27 : vector<128x128xf32>
    %29 = vector.extract_strided_slice %4 {offsets = [2, 0], sizes = [1, 128], strides = [1, 1]} : vector<3x128xf32> to vector<1x128xf32>
    %30 = vector.broadcast %29 : vector<1x128xf32> to vector<128x128xf32>
    %31 = arith.addf %28, %30 : vector<128x128xf32>
    %cst_11 = arith.constant 0.000000e+00 : f32
    %32 = vector.broadcast %cst_11 : f32 to vector<128x128xf32>
    %33 = arith.subf %32, %31 : vector<128x128xf32>
    %34 = math.exp %33 : vector<128x128xf32>
    %cst_12 = arith.constant 1.000000e+00 : f32
    %35 = vector.broadcast %cst_12 : f32 to vector<128x128xf32>
    %36 = arith.addf %35, %34 : vector<128x128xf32>
    %37 = tpu.reciprocal %36 {approx = true} : vector<128x128xf32> -> vector<128x128xf32>
    %38 = arith.truncf %37 : vector<128x128xf32> to vector<128x128xbf16>
    %c0_13 = arith.constant 0 : index
    %c0_14 = arith.constant 0 : index
    %39 = vector.load %arg4[%c0_13, %c0_14] : memref<128x128xbf16, #tpu.memory_space<vmem>>, vector<128x128xbf16>
    %cst_15 = arith.constant dense<0.000000e+00> : vector<128x128xf32>
    %40 = tpu.matmul %38, %39, %cst_15 {dimension_numbers = #tpu.dot_dimension_numbers<[1], [0], [0], [1], [0, 0, 1, 1], [], []>} : vector<128x128xbf16>, vector<128x128xbf16>, vector<128x128xf32> -> vector<128x128xf32>
    %c1 = arith.constant 1 : index
    %c0_16 = arith.constant 0 : index
    %c0_17 = arith.constant 0 : index
    %41 = vector.load %arg2[%c1, %c0_16, %c0_17] : memref<4x3x128xf32, #tpu.memory_space<vmem>>, vector<1x3x128xf32>
    %42 = vector.shape_cast %41 : vector<1x3x128xf32> to vector<3x128xf32>
    %43 = vector.extract_strided_slice %42 {offsets = [0, 0], sizes = [1, 128], strides = [1, 1]} : vector<3x128xf32> to vector<1x128xf32>
    %44 = vector.broadcast %43 : vector<1x128xf32> to vector<128x128xf32>
    %45 = arith.addf %40, %44 : vector<128x128xf32>
    %cst_18 = arith.constant dense<0.000000e+00> : vector<128xf32>
    %46 = vector.multi_reduction <add>, %45, %cst_18 [1] : vector<128x128xf32> to vector<128xf32>
    %47 = vector.shape_cast %46 : vector<128xf32> to vector<128x1xf32>
    %cst_19 = arith.constant 1.280000e+02 : f32
    %48 = vector.broadcast %cst_19 : f32 to vector<128x1xf32>
    %49 = arith.divf %47, %48 : vector<128x1xf32>
    %50 = vector.broadcast %49 : vector<128x1xf32> to vector<128x128xf32>
    %51 = arith.subf %45, %50 : vector<128x128xf32>
    %52 = arith.mulf %51, %51 : vector<128x128xf32>
    %cst_20 = arith.constant dense<0.000000e+00> : vector<128xf32>
    %53 = vector.multi_reduction <add>, %52, %cst_20 [1] : vector<128x128xf32> to vector<128xf32>
    %54 = vector.shape_cast %53 : vector<128xf32> to vector<128x1xf32>
    %cst_21 = arith.constant 1.280000e+02 : f32
    %55 = vector.broadcast %cst_21 : f32 to vector<128x1xf32>
    %56 = arith.divf %54, %55 : vector<128x1xf32>
    %57 = vector.broadcast %49 : vector<128x1xf32> to vector<128x128xf32>
    %58 = arith.subf %45, %57 : vector<128x128xf32>
    %cst_22 = arith.constant 9.99999974E-6 : f32
    %59 = vector.broadcast %cst_22 : f32 to vector<128x1xf32>
    %60 = arith.addf %56, %59 : vector<128x1xf32>
    %61 = math.rsqrt %60 : vector<128x1xf32>
    %62 = vector.broadcast %61 : vector<128x1xf32> to vector<128x128xf32>
    %63 = arith.mulf %58, %62 : vector<128x128xf32>
    %64 = vector.extract_strided_slice %42 {offsets = [1, 0], sizes = [1, 128], strides = [1, 1]} : vector<3x128xf32> to vector<1x128xf32>
    %65 = vector.broadcast %64 : vector<1x128xf32> to vector<128x128xf32>
    %66 = arith.mulf %63, %65 : vector<128x128xf32>
    %67 = vector.extract_strided_slice %42 {offsets = [2, 0], sizes = [1, 128], strides = [1, 1]} : vector<3x128xf32> to vector<1x128xf32>
    %68 = vector.broadcast %67 : vector<1x128xf32> to vector<128x128xf32>
    %69 = arith.addf %66, %68 : vector<128x128xf32>
    %cst_23 = arith.constant 0.000000e+00 : f32
    %70 = vector.broadcast %cst_23 : f32 to vector<128x128xf32>
    %71 = arith.subf %70, %69 : vector<128x128xf32>
    %72 = math.exp %71 : vector<128x128xf32>
    %cst_24 = arith.constant 1.000000e+00 : f32
    %73 = vector.broadcast %cst_24 : f32 to vector<128x128xf32>
    %74 = arith.addf %73, %72 : vector<128x128xf32>
    %75 = tpu.reciprocal %74 {approx = true} : vector<128x128xf32> -> vector<128x128xf32>
    %76 = arith.truncf %75 : vector<128x128xf32> to vector<128x128xbf16>
    %c0_25 = arith.constant 0 : index
    %c0_26 = arith.constant 0 : index
    %77 = vector.load %arg5[%c0_25, %c0_26] : memref<128x128xbf16, #tpu.memory_space<vmem>>, vector<128x128xbf16>
    %cst_27 = arith.constant dense<0.000000e+00> : vector<128x128xf32>
    %78 = tpu.matmul %76, %77, %cst_27 {dimension_numbers = #tpu.dot_dimension_numbers<[1], [0], [0], [1], [0, 0, 1, 1], [], []>} : vector<128x128xbf16>, vector<128x128xbf16>, vector<128x128xf32> -> vector<128x128xf32>
    %c2 = arith.constant 2 : index
    %c0_28 = arith.constant 0 : index
    %c0_29 = arith.constant 0 : index
    %79 = vector.load %arg2[%c2, %c0_28, %c0_29] : memref<4x3x128xf32, #tpu.memory_space<vmem>>, vector<1x3x128xf32>
    %80 = vector.shape_cast %79 : vector<1x3x128xf32> to vector<3x128xf32>
    %81 = vector.extract_strided_slice %80 {offsets = [0, 0], sizes = [1, 128], strides = [1, 1]} : vector<3x128xf32> to vector<1x128xf32>
    %82 = vector.broadcast %81 : vector<1x128xf32> to vector<128x128xf32>
    %83 = arith.addf %78, %82 : vector<128x128xf32>
    %cst_30 = arith.constant dense<0.000000e+00> : vector<128xf32>
    %84 = vector.multi_reduction <add>, %83, %cst_30 [1] : vector<128x128xf32> to vector<128xf32>
    %85 = vector.shape_cast %84 : vector<128xf32> to vector<128x1xf32>
    %cst_31 = arith.constant 1.280000e+02 : f32
    %86 = vector.broadcast %cst_31 : f32 to vector<128x1xf32>
    %87 = arith.divf %85, %86 : vector<128x1xf32>
    %88 = vector.broadcast %87 : vector<128x1xf32> to vector<128x128xf32>
    %89 = arith.subf %83, %88 : vector<128x128xf32>
    %90 = arith.mulf %89, %89 : vector<128x128xf32>
    %cst_32 = arith.constant dense<0.000000e+00> : vector<128xf32>
    %91 = vector.multi_reduction <add>, %90, %cst_32 [1] : vector<128x128xf32> to vector<128xf32>
    %92 = vector.shape_cast %91 : vector<128xf32> to vector<128x1xf32>
    %cst_33 = arith.constant 1.280000e+02 : f32
    %93 = vector.broadcast %cst_33 : f32 to vector<128x1xf32>
    %94 = arith.divf %92, %93 : vector<128x1xf32>
    %95 = vector.broadcast %87 : vector<128x1xf32> to vector<128x128xf32>
    %96 = arith.subf %83, %95 : vector<128x128xf32>
    %cst_34 = arith.constant 9.99999974E-6 : f32
    %97 = vector.broadcast %cst_34 : f32 to vector<128x1xf32>
    %98 = arith.addf %94, %97 : vector<128x1xf32>
    %99 = math.rsqrt %98 : vector<128x1xf32>
    %100 = vector.broadcast %99 : vector<128x1xf32> to vector<128x128xf32>
    %101 = arith.mulf %96, %100 : vector<128x128xf32>
    %102 = vector.extract_strided_slice %80 {offsets = [1, 0], sizes = [1, 128], strides = [1, 1]} : vector<3x128xf32> to vector<1x128xf32>
    %103 = vector.broadcast %102 : vector<1x128xf32> to vector<128x128xf32>
    %104 = arith.mulf %101, %103 : vector<128x128xf32>
    %105 = vector.extract_strided_slice %80 {offsets = [2, 0], sizes = [1, 128], strides = [1, 1]} : vector<3x128xf32> to vector<1x128xf32>
    %106 = vector.broadcast %105 : vector<1x128xf32> to vector<128x128xf32>
    %107 = arith.addf %104, %106 : vector<128x128xf32>
    %cst_35 = arith.constant 0.000000e+00 : f32
    %108 = vector.broadcast %cst_35 : f32 to vector<128x128xf32>
    %109 = arith.subf %108, %107 : vector<128x128xf32>
    %110 = math.exp %109 : vector<128x128xf32>
    %cst_36 = arith.constant 1.000000e+00 : f32
    %111 = vector.broadcast %cst_36 : f32 to vector<128x128xf32>
    %112 = arith.addf %111, %110 : vector<128x128xf32>
    %113 = tpu.reciprocal %112 {approx = true} : vector<128x128xf32> -> vector<128x128xf32>
    %114 = arith.truncf %113 : vector<128x128xf32> to vector<128x128xbf16>
    %c0_37 = arith.constant 0 : index
    %c0_38 = arith.constant 0 : index
    %115 = vector.load %arg6[%c0_37, %c0_38] : memref<128x128xbf16, #tpu.memory_space<vmem>>, vector<128x128xbf16>
    %cst_39 = arith.constant dense<0.000000e+00> : vector<128x128xf32>
    %116 = tpu.matmul %114, %115, %cst_39 {dimension_numbers = #tpu.dot_dimension_numbers<[1], [0], [0], [1], [0, 0, 1, 1], [], []>} : vector<128x128xbf16>, vector<128x128xbf16>, vector<128x128xf32> -> vector<128x128xf32>
    %c3 = arith.constant 3 : index
    %c0_40 = arith.constant 0 : index
    %c0_41 = arith.constant 0 : index
    %117 = vector.load %arg2[%c3, %c0_40, %c0_41] : memref<4x3x128xf32, #tpu.memory_space<vmem>>, vector<1x3x128xf32>
    %118 = vector.shape_cast %117 : vector<1x3x128xf32> to vector<3x128xf32>
    %119 = vector.extract_strided_slice %118 {offsets = [0, 0], sizes = [1, 128], strides = [1, 1]} : vector<3x128xf32> to vector<1x128xf32>
    %120 = vector.broadcast %119 : vector<1x128xf32> to vector<128x128xf32>
    %121 = arith.addf %116, %120 : vector<128x128xf32>
    %cst_42 = arith.constant dense<0.000000e+00> : vector<128xf32>
    %122 = vector.multi_reduction <add>, %121, %cst_42 [1] : vector<128x128xf32> to vector<128xf32>
    %123 = vector.shape_cast %122 : vector<128xf32> to vector<128x1xf32>
    %cst_43 = arith.constant 6.400000e+01 : f32
    %124 = vector.broadcast %cst_43 : f32 to vector<128x1xf32>
    %125 = arith.divf %123, %124 : vector<128x1xf32>
    %126 = arith.mulf %121, %121 : vector<128x128xf32>
    %cst_44 = arith.constant dense<0.000000e+00> : vector<128xf32>
    %127 = vector.multi_reduction <add>, %126, %cst_44 [1] : vector<128x128xf32> to vector<128xf32>
    %128 = vector.shape_cast %127 : vector<128xf32> to vector<128x1xf32>
    %cst_45 = arith.constant 6.400000e+01 : f32
    %129 = vector.broadcast %cst_45 : f32 to vector<128x1xf32>
    %130 = arith.divf %128, %129 : vector<128x1xf32>
    %131 = arith.mulf %125, %125 : vector<128x1xf32>
    %132 = arith.subf %130, %131 : vector<128x1xf32>
    %133 = vector.broadcast %125 : vector<128x1xf32> to vector<128x128xf32>
    %134 = arith.subf %121, %133 : vector<128x128xf32>
    %cst_46 = arith.constant 9.99999974E-6 : f32
    %135 = vector.broadcast %cst_46 : f32 to vector<128x1xf32>
    %136 = arith.addf %132, %135 : vector<128x1xf32>
    %137 = math.rsqrt %136 : vector<128x1xf32>
    %138 = vector.broadcast %137 : vector<128x1xf32> to vector<128x128xf32>
    %139 = arith.mulf %134, %138 : vector<128x128xf32>
    %140 = vector.extract_strided_slice %118 {offsets = [1, 0], sizes = [1, 128], strides = [1, 1]} : vector<3x128xf32> to vector<1x128xf32>
    %141 = vector.broadcast %140 : vector<1x128xf32> to vector<128x128xf32>
    %142 = arith.mulf %139, %141 : vector<128x128xf32>
    %143 = vector.extract_strided_slice %118 {offsets = [2, 0], sizes = [1, 128], strides = [1, 1]} : vector<3x128xf32> to vector<1x128xf32>
    %144 = vector.broadcast %143 : vector<1x128xf32> to vector<128x128xf32>
    %145 = arith.addf %142, %144 : vector<128x128xf32>
    %cst_47 = arith.constant 0.000000e+00 : f32
    %146 = vector.broadcast %cst_47 : f32 to vector<128x128xf32>
    %147 = arith.subf %146, %145 : vector<128x128xf32>
    %148 = math.exp %147 : vector<128x128xf32>
    %cst_48 = arith.constant 1.000000e+00 : f32
    %149 = vector.broadcast %cst_48 : f32 to vector<128x128xf32>
    %150 = arith.addf %149, %148 : vector<128x128xf32>
    %151 = tpu.reciprocal %150 {approx = true} : vector<128x128xf32> -> vector<128x128xf32>
    %c0_49 = arith.constant 0 : index
    %c0_50 = arith.constant 0 : index
    %152 = vector.load %arg7[%c0_49, %c0_50] : memref<128x128xf32, #tpu.memory_space<vmem>>, vector<128x128xf32>
    tpu.vector_store %arg7[%c0_49, %c0_50], %151 {strides = array<i32>} : memref<128x128xf32, #tpu.memory_space<vmem>>, vector<128x128xf32>,
    return
  }
  func.func @transform_0(%arg0: i32) -> (i32, i32) {
    %c0_i32 = arith.constant 0 : i32
    %c0_i32_0 = arith.constant 0 : i32
    return %arg0, %c0_i32 : i32, i32
  }
  func.func @transform_1(%arg0: i32) -> (i32, i32, i32) {
    %c0_i32 = arith.constant 0 : i32
    %c0_i32_0 = arith.constant 0 : i32
    %c0_i32_1 = arith.constant 0 : i32
    %c0_i32_2 = arith.constant 0 : i32
    return %c0_i32, %c0_i32_0, %c0_i32_1 : i32, i32, i32
  }
  func.func @transform_2(%arg0: i32) -> (i32, i32) {
    %c0_i32 = arith.constant 0 : i32
    %c0_i32_0 = arith.constant 0 : i32
    %c0_i32_1 = arith.constant 0 : i32
    return %c0_i32, %c0_i32_0 : i32, i32
  }
  func.func @transform_3(%arg0: i32) -> (i32, i32) {
    %c0_i32 = arith.constant 0 : i32
    %c0_i32_0 = arith.constant 0 : i32
    %c0_i32_1 = arith.constant 0 : i32
    return %c0_i32, %c0_i32_0 : i32, i32
  }
  func.func @transform_4(%arg0: i32) -> (i32, i32) {
    %c0_i32 = arith.constant 0 : i32
    %c0_i32_0 = arith.constant 0 : i32
    %c0_i32_1 = arith.constant 0 : i32
    return %c0_i32, %c0_i32_0 : i32, i32
  }
  func.func @transform_5(%arg0: i32) -> (i32, i32) {
    %c0_i32 = arith.constant 0 : i32
    %c0_i32_0 = arith.constant 0 : i32
    %c0_i32_1 = arith.constant 0 : i32
    return %c0_i32, %c0_i32_0 : i32, i32
  }
  func.func @transform_6(%arg0: i32) -> (i32, i32) {
    %c0_i32 = arith.constant 0 : i32
    %c0_i32_0 = arith.constant 0 : i32
    return %arg0, %c0_i32 : i32, i32
  }
}

</mosaic_0001>

<llo_original>
// kernel: tpu_custom_call.1
$region0: #{tpu_custom_call.1}
  #allocation0 [shape = 'u32[]', space=smem, size = 0x4, offset = 0x4, fixed_abs, tag = 'smem constant byte address 0x4 - core index']
  #allocation1 [shape = 'u32[144,128]{1,0:T(1,128)}', space=vmem, size = 0x12000, scoped, tag = 'internal scratch']
  %s0 = inlined_call_operand.vmem [shape: bf16[256,32], index: 0, kind: input, shape index: {}]
  %s1 = inlined_call_operand.vmem [shape: f32[4,3,128], index: 1, kind: input, shape index: {}]
  %s2 = inlined_call_operand.hbm [shape: bf16[32,128], index: 2, kind: input, shape index: {}]
  %s3 = inlined_call_operand.vmem [shape: bf16[128,128], index: 3, kind: input, shape index: {}]
  %s4 = inlined_call_operand.vmem [shape: bf16[128,128], index: 4, kind: input, shape index: {}]
  %s5 = inlined_call_operand.vmem [shape: bf16[128,128], index: 5, kind: input, shape index: {}]
  %s6 = inlined_call_operand.hbm [shape: f32[256,128], index: 6, kind: output, shape index: {}]
  %s7 = sld [smem:[#allocation0]]
  $region61: #{tpu_custom_call.1} parent=0
    _
  %s9 = ssub.s32 1, %s7
  %s10 = scalar_select 0, %s9, %s7
  $region1: #{tpu_custom_call.1} parent=0
    #allocation2 [shape = 'u8[8192]{0}', space=vmem, size = 0x2000, scoped, tag = 'input window, operand 2, single buffered']
    #allocation3 [shape = 's32[2]{0}', space=sflag, size = 0x8, scoped, tag = 'scoped memory for tpu_custom_call.1']
    #allocation4 [shape = 's32[2]{0}', space=sflag, size = 0x8, scoped, tag = 'scoped memory for tpu_custom_call.1']
    #allocation5 [shape = 'u8[131072]{0}', space=vmem, size = 0x20000, scoped, tag = 'output window, operand 0']
    %11 = vsyncpa [#allocation3], 0
    %12 = vsyncpa [#allocation4], 0
    %s13 = scalar_lea.sflag [#allocation4], 1
    %14 = vsyncpa %s13, 0
    loop: start=0, step=1, limit=4
    $region2: #{tpu_custom_call.1} parent=1 // loop_pre_header
      _
    $region3: #{tpu_custom_call.1} parent=1 // loop_header
      %s16 = sphi 0, %s20
      %p17 = scmp.ge.s32.totalorder %s16, 4
      %s26 = sphi 0, %s28
      %s29 = sphi 0, %s26
      %s30 = sphi 0, %s29
      %s46 = sphi 0, %s30
      %s50 = sphi 0, %s50
      %s52 = sphi 0, %s50
      %s53 = sphi 0, %s52
      %s67 = sphi 0, %s53
      %s71 = sphi 0, %s71
      %s73 = sphi 0, %s71
      %s74 = sphi 0, %s73
      %s88 = sphi 0, %s74
      %s92 = sphi 0, %s92
      %s94 = sphi 0, %s92
      %s95 = sphi 0, %s94
      %s109 = sphi 0, %s95
      %s113 = sphi 0, %s113
      %s115 = sphi 0, %s113
      %s116 = sphi 0, %s115
      %s130 = sphi 0, %s116
      %s134 = sphi 0, %s134
      %s136 = sphi 0, %s134
      %s137 = sphi 0, %s136
      %s151 = sphi 0, %s137
      %s157 = sphi 0, %s159
      %s160 = sphi 0, %s157
      %s161 = sphi 0, %s160
      %s177 = sphi 0, %s161
    $region4: #{tpu_custom_call.1} parent=1 // loop_header_branch
      %19 = sbr.rel (%p17) target = $region8
    $region5: #{tpu_custom_call.1} parent=1 // loop_body
      %s21 = ssub.s32 %s16, 1
      %s22 = ssub.s32 %s16, 2
      %s23 = sadd.s32 %s16, 1
      %s24 = ssub.s32 %s16, %s23
      %p25 = scmp.eq.s32.totalorder %s24, 0
      %s27 = sadd.s32 %s26, 1
      %s28 = scalar_select %p25, %s26, %s27
      %p31 = pneg %p25
      %p32 = scmp.eq.s32.totalorder %s16, 1
      %p33 = por %p31, %p32
      %p34 = scmp.ne.s32.totalorder %s26, %s29
      %p35 = scmp.eq.s32.totalorder %s16, 0
      %p36 = por %p34, %p35
      %p37 = scmp.ne.s32.totalorder %s26, %s29
      %p38 = scmp.eq.s32.totalorder %s21, 1
      %p39 = por %p37, %p38
      %p40 = scmp.ne.s32.totalorder %s29, %s30
      %p41 = scmp.eq.s32.totalorder %s21, 0
      %p42 = por %p40, %p41
      %p43 = scmp.ne.s32.totalorder %s29, %s30
      %p44 = scmp.eq.s32.totalorder %s22, 1
      %p45 = por %p43, %p44
      %p47 = scmp.ne.s32.totalorder %s30, %s46
      %p48 = scmp.eq.s32.totalorder %s22, 0
      %p49 = por %p47, %p48
      %s51 = sadd.s32 %s50, 1
      %p54 = scmp.eq.s32.totalorder %s16, 1
      %p55 = scmp.ne.s32.totalorder %s50, %s52
      %p56 = scmp.eq.s32.totalorder %s16, 0
      %p57 = por %p55, %p56
      %p58 = scmp.ne.s32.totalorder %s50, %s52
      %p59 = scmp.eq.s32.totalorder %s21, 1
      %p60 = por %p58, %p59
      %p61 = scmp.ne.s32.totalorder %s52, %s53
      %p62 = scmp.eq.s32.totalorder %s21, 0
      %p63 = por %p61, %p62
      %p64 = scmp.ne.s32.totalorder %s52, %s53
      %p65 = scmp.eq.s32.totalorder %s22, 1
      %p66 = por %p64, %p65
      %p68 = scmp.ne.s32.totalorder %s53, %s67
      %p69 = scmp.eq.s32.totalorder %s22, 0
      %p70 = por %p68, %p69
      %s72 = sadd.s32 %s71, 1
      %p75 = scmp.eq.s32.totalorder %s16, 1
      %p76 = scmp.ne.s32.totalorder %s71, %s73
      %p77 = scmp.eq.s32.totalorder %s16, 0
      %p78 = por %p76, %p77
      %p79 = scmp.ne.s32.totalorder %s71, %s73
      %p80 = scmp.eq.s32.totalorder %s21, 1
      %p81 = por %p79, %p80
      %p82 = scmp.ne.s32.totalorder %s73, %s74
      %p83 = scmp.eq.s32.totalorder %s21, 0
      %p84 = por %p82, %p83
      %p85 = scmp.ne.s32.totalorder %s73, %s74
      %p86 = scmp.eq.s32.totalorder %s22, 1
      %p87 = por %p85, %p86
      %p89 = scmp.ne.s32.totalorder %s74, %s88
      %p90 = scmp.eq.s32.totalorder %s22, 0
      %p91 = por %p89, %p90
      %s93 = sadd.s32 %s92, 1
      %p96 = scmp.eq.s32.totalorder %s16, 1
      %p97 = scmp.ne.s32.totalorder %s92, %s94
      %p98 = scmp.eq.s32.totalorder %s16, 0
      %p99 = por %p97, %p98
      %p100 = scmp.ne.s32.totalorder %s92, %s94
      %p101 = scmp.eq.s32.totalorder %s21, 1
      %p102 = por %p100, %p101
      %p103 = scmp.ne.s32.totalorder %s94, %s95
      %p104 = scmp.eq.s32.totalorder %s21, 0
      %p105 = por %p103, %p104
      %p106 = scmp.ne.s32.totalorder %s94, %s95
      %p107 = scmp.eq.s32.totalorder %s22, 1
      %p108 = por %p106, %p107
      %p110 = scmp.ne.s32.totalorder %s95, %s109
      %p111 = scmp.eq.s32.totalorder %s22, 0
      %p112 = por %p110, %p111
      %s114 = sadd.s32 %s113, 1
      %p117 = scmp.eq.s32.totalorder %s16, 1
      %p118 = scmp.ne.s32.totalorder %s113, %s115
      %p119 = scmp.eq.s32.totalorder %s16, 0
      %p120 = por %p118, %p119
      %p121 = scmp.ne.s32.totalorder %s113, %s115
      %p122 = scmp.eq.s32.totalorder %s21, 1
      %p123 = por %p121, %p122
      %p124 = scmp.ne.s32.totalorder %s115, %s116
      %p125 = scmp.eq.s32.totalorder %s21, 0
      %p126 = por %p124, %p125
      %p127 = scmp.ne.s32.totalorder %s115, %s116
      %p128 = scmp.eq.s32.totalorder %s22, 1
      %p129 = por %p127, %p128
      %p131 = scmp.ne.s32.totalorder %s116, %s130
      %p132 = scmp.eq.s32.totalorder %s22, 0
      %p133 = por %p131, %p132
      %s135 = sadd.s32 %s134, 1
      %p138 = scmp.eq.s32.totalorder %s16, 1
      %p139 = scmp.ne.s32.totalorder %s134, %s136
      %p140 = scmp.eq.s32.totalorder %s16, 0
      %p141 = por %p139, %p140
      %p142 = scmp.ne.s32.totalorder %s134, %s136
      %p143 = scmp.eq.s32.totalorder %s21, 1
      %p144 = por %p142, %p143
      %p145 = scmp.ne.s32.totalorder %s136, %s137
      %p146 = scmp.eq.s32.totalorder %s21, 0
      %p147 = por %p145, %p146
      %p148 = scmp.ne.s32.totalorder %s136, %s137
      %p149 = scmp.eq.s32.totalorder %s22, 1
      %p150 = por %p148, %p149
      %p152 = scmp.ne.s32.totalorder %s137, %s151
      %p153 = scmp.eq.s32.totalorder %s22, 0
      %p154 = por %p152, %p153
      %s155 = ssub.s32 %s16, %s23
      %p156 = scmp.eq.s32.totalorder %s155, 0
      %s158 = sadd.s32 %s157, 1
      %s159 = scalar_select %p156, %s157, %s158
      %p162 = pneg %p156
      %p163 = scmp.eq.s32.totalorder %s16, 1
      %p164 = por %p162, %p163
      %p165 = scmp.ne.s32.totalorder %s157, %s160
      %p166 = scmp.eq.s32.totalorder %s16, 0
      %p167 = por %p165, %p166
      %p168 = scmp.ne.s32.totalorder %s157, %s160
      %p169 = scmp.eq.s32.totalorder %s21, 1
      %p170 = por %p168, %p169
      %p171 = scmp.ne.s32.totalorder %s160, %s161
      %p172 = scmp.eq.s32.totalorder %s21, 0
      %p173 = por %p171, %p172
      %p174 = scmp.ne.s32.totalorder %s160, %s161
      %p175 = scmp.eq.s32.totalorder %s22, 1
      %p176 = por %p174, %p175
      %p178 = scmp.ne.s32.totalorder %s161, %s177
      %p179 = scmp.eq.s32.totalorder %s22, 0
      %p180 = por %p178, %p179
      %p181 = scmp.le.s32.totalorder 1, %s16
      %p182 = scmp.lt.s32.totalorder %s16, 3
      %p183 = pnand %p181, %p182
      %p184 = pneg %p183
      // Predicated region
      $region9: #{tpu_custom_call.1} parent=5 // pred_check
        _
      $region10: #{tpu_custom_call.1} parent=5 // pred_check_branch
        %186 = sbr.rel (%p183) target = $region12
      $region11: #{tpu_custom_call.1} parent=5 // pred_region
        %s187 = ssub.s32 %s16, 1
        // Predicated region
        $region13: #{tpu_custom_call.1} parent=11 // pred_check
          %p188 = pneg %p63
        $region14: #{tpu_custom_call.1} parent=11 // pred_check_branch
          %190 = sbr.rel (%p188) target = $region16
        $region15: #{tpu_custom_call.1} parent=11 // pred_region
          _
        $region16: #{tpu_custom_call.1} parent=11 // pred_fallthru
          _
        // Predicated region
        $region17: #{tpu_custom_call.1} parent=11 // pred_check
          %p191 = pneg %p84
        $region18: #{tpu_custom_call.1} parent=11 // pred_check_branch
          %193 = sbr.rel (%p191) target = $region20
        $region19: #{tpu_custom_call.1} parent=11 // pred_region
          %s195 = ssub.s32 256, 256
          %196 = vsyncadd [#allocation3], %s195
          %s197 = sshll.u32 [#allocation2], 4
          %s198 = int_to_ptr.vmem [resolvable:$true] %s197
          %203 = dma.hbm_to_vmem [thread:$0]  %s2, 256, %s198, [#allocation3], 64, 64, 4
        $region20: #{tpu_custom_call.1} parent=11 // pred_fallthru
          _
        // Predicated region
        $region21: #{tpu_custom_call.1} parent=11 // pred_check
          %p204 = pneg %p105
        $region22: #{tpu_custom_call.1} parent=11 // pred_check_branch
          %206 = sbr.rel (%p204) target = $region24
        $region23: #{tpu_custom_call.1} parent=11 // pred_region
          _
        $region24: #{tpu_custom_call.1} parent=11 // pred_fallthru
          _
        // Predicated region
        $region25: #{tpu_custom_call.1} parent=11 // pred_check
          %p207 = pneg %p126
        $region26: #{tpu_custom_call.1} parent=11 // pred_check_branch
          %209 = sbr.rel (%p207) target = $region28
        $region27: #{tpu_custom_call.1} parent=11 // pred_region
          _
        $region28: #{tpu_custom_call.1} parent=11 // pred_fallthru
          _
        // Predicated region
        $region29: #{tpu_custom_call.1} parent=11 // pred_check
          %p210 = pneg %p147
        $region30: #{tpu_custom_call.1} parent=11 // pred_check_branch
          %212 = sbr.rel (%p210) target = $region32
        $region31: #{tpu_custom_call.1} parent=11 // pred_region
          _
        $region32: #{tpu_custom_call.1} parent=11 // pred_fallthru
          _
      $region12: #{tpu_custom_call.1} parent=5 // pred_fallthru
        _
      %p213 = scmp.lt.s32.totalorder %s16, 2
      // Predicated region
      $region33: #{tpu_custom_call.1} parent=5 // pred_check
        %p214 = pneg %p213
      $region34: #{tpu_custom_call.1} parent=5 // pred_check_branch
        %216 = sbr.rel (%p214) target = $region36
      $region35: #{tpu_custom_call.1} parent=5 // pred_region
        // Predicated region
        $region37: #{tpu_custom_call.1} parent=35 // pred_check
          %p217 = pneg %p36
        $region38: #{tpu_custom_call.1} parent=35 // pred_check_branch
          %219 = sbr.rel (%p217) target = $region40
        $region39: #{tpu_custom_call.1} parent=35 // pred_region
          %s220 = smul.u32 16, %s16
          %p221 = scmp.lt.s32.totalorder %s220, 31
          %s222 = scalar_select %p221, %s220, 31
          %s223 = smul.addr %s222, 4
          %s224 = scalar_lea.vmem %s0, %s223
          %s225 = smul.u32 16, %s16
        $region40: #{tpu_custom_call.1} parent=35 // pred_fallthru
          _
      $region36: #{tpu_custom_call.1} parent=5 // pred_fallthru
        _
      %p226 = scmp.le.s32.totalorder 1, %s16
      %p227 = scmp.lt.s32.totalorder %s16, 3
      %p228 = pnand %p226, %p227
      %p229 = pneg %p228
      // Predicated region
      $region41: #{tpu_custom_call.1} parent=5 // pred_check
        _
      $region42: #{tpu_custom_call.1} parent=5 // pred_check_branch
        %231 = sbr.rel (%p228) target = $region44
      $region43: #{tpu_custom_call.1} parent=5 // pred_region
        %s232 = ssub.s32 %s16, 1
        // Predicated region
        $region45: #{tpu_custom_call.1} parent=43 // pred_check
          %p233 = pneg %p84
        $region46: #{tpu_custom_call.1} parent=43 // pred_check_branch
          %235 = sbr.rel (%p233) target = $region48
        $region47: #{tpu_custom_call.1} parent=43 // pred_region
          %236 = dma.done [#allocation3], 256
        $region48: #{tpu_custom_call.1} parent=43 // pred_fallthru
          _
        %s237 = smul.u32 16, %s21
        %p238 = scmp.lt.s32.totalorder %s237, 31
        %s239 = scalar_select %p238, %s237, 31
        %s240 = smul.addr %s239, 4
        %s241 = scalar_lea.vmem %s0, %s240
        %p242 = pneg %p42
        %p243 = pneg %p39
        %p244 = pneg %p63
        %p245 = pneg %p60
        %p246 = pneg %p84
        %p247 = pneg %p81
        %p248 = pneg %p105
        %p249 = pneg %p102
        %p250 = pneg %p126
        %p251 = pneg %p123
        %p252 = pneg %p147
        %p253 = pneg %p144
        %p254 = pneg %p173
        %p255 = pneg %p170
        %s256 = sand.u32 %s160, 1
        %s257 = scalar_lea.sflag [#allocation4], %s256
        %s258 = sand.u32 %s160, 1
        %s259 = smul.addr %s258, 128
        %s260 = scalar_lea.vmem [#allocation5], %s259
        %s261 = smul.u32 16, %s21
        %p262 = scmp.lt.s32.totalorder %s261, 31
        %s263 = scalar_select %p262, %s261, 31
        %s264 = smul.addr %s263, 4
        %s265 = scalar_lea.vmem %s0, %s264
        %s266 = smul.u32 16, %s21
        %s267 = smul.u32 16, %s21
        %v269 = vld [vmem:[%s265] sm:$0xf]
        %v270 = vld [vmem:[%s265 + $0x4] sm:$0xf]
        %v271 = vld [vmem:[%s265 + $0x8] sm:$0xf]
        %v272 = vld [vmem:[%s265 + $0xc] sm:$0xf]
        %v273 = vld [vmem:[%s265 + $0x10] sm:$0xf]
        %v274 = vld [vmem:[%s265 + $0x14] sm:$0xf]
        %v275 = vld [vmem:[%s265 + $0x18] sm:$0xf]
        %v276 = vld [vmem:[%s265 + $0x1c] sm:$0xf]
        %v277 = vld [vmem:[%s265 + $0x20] sm:$0xf]
        %v278 = vld [vmem:[%s265 + $0x24] sm:$0xf]
        %v279 = vld [vmem:[%s265 + $0x28] sm:$0xf]
        %v280 = vld [vmem:[%s265 + $0x2c] sm:$0xf]
        %v281 = vld [vmem:[%s265 + $0x30] sm:$0xf]
        %v282 = vld [vmem:[%s265 + $0x34] sm:$0xf]
        %v283 = vld [vmem:[%s265 + $0x38] sm:$0xf]
        %v284 = vld [vmem:[%s265 + $0x3c] sm:$0xf]
        %v285 = vld [vmem:[#allocation2] sm:$0xf]
        %v286 = vld [vmem:[#allocation2 + $0x4] sm:$0xf]
        %v287 = vld [vmem:[#allocation2 + $0x8] sm:$0xf]
        %v288 = vld [vmem:[#allocation2 + $0xc] sm:$0xf]
        %v289 = vld [vmem:[%s1] sm:$0x7]
        %v290 = vlaneseq
        %v291 = vshrl.u32 %v290, 7
        %v292 = vsub.s32 0, %v291
        %v293 = vrot.slane %v289, %v292
        %v310 = vunpack.c.l.b16 %v269
        %v311 = vunpack.c.l.b16 %v270
        %v312 = vunpack.c.l.b16 %v271
        %v313 = vunpack.c.l.b16 %v272
        %v314 = vunpack.c.l.b16 %v273
        %v315 = vunpack.c.l.b16 %v274
        %v316 = vunpack.c.l.b16 %v275
        %v317 = vunpack.c.l.b16 %v276
        %v318 = vunpack.c.l.b16 %v277
        %v319 = vunpack.c.l.b16 %v278
        %v320 = vunpack.c.l.b16 %v279
        %v321 = vunpack.c.l.b16 %v280
        %v322 = vunpack.c.l.b16 %v281
        %v323 = vunpack.c.l.b16 %v282
        %v324 = vunpack.c.l.b16 %v283
        %v325 = vunpack.c.l.b16 %v284
        %v326 = vpack.c.b16 %v311, %v310
        %v327 = vpack.c.b16 %v313, %v312
        %v328 = vpack.c.b16 %v315, %v314
        %v329 = vpack.c.b16 %v317, %v316
        %v330 = vpack.c.b16 %v319, %v318
        %v331 = vpack.c.b16 %v321, %v320
        %v332 = vpack.c.b16 %v323, %v322
        %v333 = vpack.c.b16 %v325, %v324
        %v338 = vunpack.c.l.b16 %v285
        %v339 = vunpack.c.l.b16 %v286
        %v340 = vunpack.c.l.b16 %v287
        %v341 = vunpack.c.l.b16 %v288
        %v342 = vpack.c.b16 %v339, %v338
        %v343 = vpack.c.b16 %v341, %v340
        %vm346 = vcmask 261120
        %v348 = vsel %vm346, %v326, 0
        %v351 = vsel %vm346, %v327, 0
        %v354 = vsel %vm346, %v328, 0
        %v357 = vsel %vm346, %v329, 0
        %v360 = vsel %vm346, %v330, 0
        %v363 = vsel %vm346, %v331, 0
        %v366 = vsel %vm346, %v332, 0
        %v369 = vsel %vm346, %v333, 0
        %371 = vmatprep.subr.bf16.mxu0 0
        %372 = vmatpush1.bf16.msra.mxu0 0
        %373 = vmatprep.subr.bf16.mxu0 0
        %374 = vmatpush1.bf16.msra.mxu0 0
        %375 = vmatprep.subr.bf16.mxu0 0
        %376 = vmatpush1.bf16.msra.mxu0 0
        %377 = vmatprep.subr.bf16.mxu0 0
        %378 = vmatpush1.bf16.msra.mxu0 0
        %379 = vmatprep.subr.bf16.mxu0 0
        %380 = vmatpush1.bf16.msra.mxu0 0
        %381 = vmatprep.subr.bf16.mxu0 0
        %382 = vmatpush1.bf16.msra.mxu0 0
        %383 = vmatprep.subr.bf16.mxu0 0
        %384 = vmatpush1.bf16.msra.mxu0 %v343
        %385 = vmatprep.subr.bf16.mxu0 0
        %386 = vmatpush1.bf16.msra.mxu0 %v342
        %387 = vmatprep.subr.bf16.mxu0 0
        %388 = vmatpush2.bf16.msra.mxu0 0
        %389 = vmatprep.subr.bf16.mxu0 0
        %390 = vmatpush2.bf16.msra.mxu0 0
        %391 = vmatprep.subr.bf16.mxu0 0
        %392 = vmatpush2.bf16.msra.mxu0 0
        %393 = vmatprep.subr.bf16.mxu0 0
        %394 = vmatpush2.bf16.msra.mxu0 0
        %395 = vmatprep.subr.bf16.mxu0 0
        %396 = vmatpush2.bf16.msra.mxu0 0
        %397 = vmatprep.subr.bf16.mxu0 0
        %398 = vmatpush2.bf16.msra.mxu0 0
        %399 = vmatprep.subr.bf16.mxu0 0
        %400 = vmatpush2.bf16.msra.mxu0 0
        %401 = vmatprep.subr.bf16.mxu0 0
        %402 = vmatpush2.bf16.msra.mxu0 0
        %403 = vmatprep.mubr.bf16.mxu0 0
        %404 = vmatmul.mubr.bf16.gmra.mxu0 %v348
        %v405 = vpop.f32.mrf.mxu0
        %v406 = vadd.f32 %v293, %v405
        %v407 = vpop.f32.mrf.mxu0
        %v408 = vpop.f32.mrf.mxu0
        %v409 = vadd.f32 %v293, %v408
        %v410 = vpop.f32.mrf.mxu0
        %411 = vmatprep.mubr.bf16.mxu0 0
        %412 = vmatmul.mubr.bf16.gmra.mxu0 %v351
        %v413 = vpop.f32.mrf.mxu0
        %v414 = vadd.f32 %v293, %v413
        %v415 = vpop.f32.mrf.mxu0
        %v416 = vpop.f32.mrf.mxu0
        %v417 = vadd.f32 %v293, %v416
        %v418 = vpop.f32.mrf.mxu0
        %419 = vmatprep.mubr.bf16.mxu0 0
        %420 = vmatmul.mubr.bf16.gmra.mxu0 %v354
        %v421 = vpop.f32.mrf.mxu0
        %v422 = vadd.f32 %v293, %v421
        %v423 = vpop.f32.mrf.mxu0
        %v424 = vpop.f32.mrf.mxu0
        %v425 = vadd.f32 %v293, %v424
        %v426 = vpop.f32.mrf.mxu0
        %427 = vmatprep.mubr.bf16.mxu0 0
        %428 = vmatmul.mubr.bf16.gmra.mxu0 %v357
        %v429 = vpop.f32.mrf.mxu0
        %v430 = vadd.f32 %v293, %v429
        %v431 = vpop.f32.mrf.mxu0
        %v432 = vpop.f32.mrf.mxu0
        %v433 = vadd.f32 %v293, %v432
        %v434 = vpop.f32.mrf.mxu0
        %435 = vmatprep.mubr.bf16.mxu0 0
        %436 = vmatmul.mubr.bf16.gmra.mxu0 %v360
        %v437 = vpop.f32.mrf.mxu0
        %v438 = vadd.f32 %v293, %v437
        %v439 = vpop.f32.mrf.mxu0
        %v440 = vpop.f32.mrf.mxu0
        %v441 = vadd.f32 %v293, %v440
        %v442 = vpop.f32.mrf.mxu0
        %443 = vmatprep.mubr.bf16.mxu0 0
        %444 = vmatmul.mubr.bf16.gmra.mxu0 %v363
        %v445 = vpop.f32.mrf.mxu0
        %v446 = vadd.f32 %v293, %v445
        %v447 = vpop.f32.mrf.mxu0
        %v448 = vpop.f32.mrf.mxu0
        %v449 = vadd.f32 %v293, %v448
        %v450 = vpop.f32.mrf.mxu0
        %451 = vmatprep.mubr.bf16.mxu0 0
        %452 = vmatmul.mubr.bf16.gmra.mxu0 %v366
        %v453 = vpop.f32.mrf.mxu0
        %v454 = vadd.f32 %v293, %v453
        %v455 = vpop.f32.mrf.mxu0
        %v456 = vpop.f32.mrf.mxu0
        %v457 = vadd.f32 %v293, %v456
        %v458 = vpop.f32.mrf.mxu0
        %459 = vmatprep.mubr.bf16.mxu0 0
        %460 = vmatmul.mubr.bf16.gmra.mxu0 %v369
        %v461 = vpop.f32.mrf.mxu0
        %v462 = vadd.f32 %v293, %v461
        %v463 = vpop.f32.mrf.mxu0
        %v464 = vpop.f32.mrf.mxu0
        %v465 = vadd.f32 %v293, %v464
        %v466 = vpop.f32.mrf.mxu0
        %467 = vdwg.mxu0
        %468 = vadd.xlane.f32.xlu0 %v406
        %v469 = vpop.xlane.xlu0 %468
        %470 = vadd.xlane.f32.xlu0 %v409
        %v471 = vpop.xlane.xlu0 %470
        %472 = vadd.xlane.f32.xlu0 %v414
        %v473 = vpop.xlane.xlu0 %472
        %474 = vadd.xlane.f32.xlu0 %v417
        %v475 = vpop.xlane.xlu0 %474
        %476 = vadd.xlane.f32.xlu0 %v422
        %v477 = vpop.xlane.xlu0 %476
        %478 = vadd.xlane.f32.xlu0 %v425
        %v479 = vpop.xlane.xlu0 %478
        %480 = vadd.xlane.f32.xlu0 %v430
        %v481 = vpop.xlane.xlu0 %480
        %482 = vadd.xlane.f32.xlu0 %v433
        %v483 = vpop.xlane.xlu0 %482
        %484 = vadd.xlane.f32.xlu0 %v438
        %v485 = vpop.xlane.xlu0 %484
        %486 = vadd.xlane.f32.xlu0 %v441
        %v487 = vpop.xlane.xlu0 %486
        %488 = vadd.xlane.f32.xlu0 %v446
        %v489 = vpop.xlane.xlu0 %488
        %490 = vadd.xlane.f32.xlu0 %v449
        %v491 = vpop.xlane.xlu0 %490
        %492 = vadd.xlane.f32.xlu0 %v454
        %v493 = vpop.xlane.xlu0 %492
        %494 = vadd.xlane.f32.xlu0 %v457
        %v495 = vpop.xlane.xlu0 %494
        %496 = vadd.xlane.f32.xlu0 %v462
        %v497 = vpop.xlane.xlu0 %496
        %498 = vadd.xlane.f32.xlu0 %v465
        %v499 = vpop.xlane.xlu0 %498
        %v500 = vrcp.pop 128.0
        %v501 = vmul.f32 %v469, %v500
        %v502 = vmul.f32 %v471, %v500
        %v503 = vmul.f32 %v473, %v500
        %v504 = vmul.f32 %v475, %v500
        %v505 = vmul.f32 %v477, %v500
        %v506 = vmul.f32 %v479, %v500
        %v507 = vmul.f32 %v481, %v500
        %v508 = vmul.f32 %v483, %v500
        %v509 = vmul.f32 %v485, %v500
        %v510 = vmul.f32 %v487, %v500
        %v511 = vmul.f32 %v489, %v500
        %v512 = vmul.f32 %v491, %v500
        %v513 = vmul.f32 %v493, %v500
        %v514 = vmul.f32 %v495, %v500
        %v515 = vmul.f32 %v497, %v500
        %v516 = vmul.f32 %v499, %v500
        %v517 = vsub.f32 %v406, %v501
        %v518 = vsub.f32 %v409, %v502
        %v519 = vsub.f32 %v414, %v503
        %v520 = vsub.f32 %v417, %v504
        %v521 = vsub.f32 %v422, %v505
        %v522 = vsub.f32 %v425, %v506
        %v523 = vsub.f32 %v430, %v507
        %v524 = vsub.f32 %v433, %v508
        %v525 = vsub.f32 %v438, %v509
        %v526 = vsub.f32 %v441, %v510
        %v527 = vsub.f32 %v446, %v511
        %v528 = vsub.f32 %v449, %v512
        %v529 = vsub.f32 %v454, %v513
        %v530 = vsub.f32 %v457, %v514
        %v531 = vsub.f32 %v462, %v515
        %v532 = vsub.f32 %v465, %v516
        %v533 = vmul.f32 %v517, %v517
        %v534 = vmul.f32 %v518, %v518
        %v535 = vmul.f32 %v519, %v519
        %v536 = vmul.f32 %v520, %v520
        %v537 = vmul.f32 %v521, %v521
        %v538 = vmul.f32 %v522, %v522
        %v539 = vmul.f32 %v523, %v523
        %v540 = vmul.f32 %v524, %v524
        %v541 = vmul.f32 %v525, %v525
        %v542 = vmul.f32 %v526, %v526
        %v543 = vmul.f32 %v527, %v527
        %v544 = vmul.f32 %v528, %v528
        %v545 = vmul.f32 %v529, %v529
        %v546 = vmul.f32 %v530, %v530
        %v547 = vmul.f32 %v531, %v531
        %v548 = vmul.f32 %v532, %v532
        %549 = vadd.xlane.f32.xlu0 %v533
        %v550 = vpop.xlane.xlu0 %549
        %551 = vadd.xlane.f32.xlu0 %v534
        %v552 = vpop.xlane.xlu0 %551
        %553 = vadd.xlane.f32.xlu0 %v535
        %v554 = vpop.xlane.xlu0 %553
        %555 = vadd.xlane.f32.xlu0 %v536
        %v556 = vpop.xlane.xlu0 %555
        %557 = vadd.xlane.f32.xlu0 %v537
        %v558 = vpop.xlane.xlu0 %557
        %559 = vadd.xlane.f32.xlu0 %v538
        %v560 = vpop.xlane.xlu0 %559
        %561 = vadd.xlane.f32.xlu0 %v539
        %v562 = vpop.xlane.xlu0 %561
        %563 = vadd.xlane.f32.xlu0 %v540
        %v564 = vpop.xlane.xlu0 %563
        %565 = vadd.xlane.f32.xlu0 %v541
        %v566 = vpop.xlane.xlu0 %565
        %567 = vadd.xlane.f32.xlu0 %v542
        %v568 = vpop.xlane.xlu0 %567
        %569 = vadd.xlane.f32.xlu0 %v543
        %v570 = vpop.xlane.xlu0 %569
        %571 = vadd.xlane.f32.xlu0 %v544
        %v572 = vpop.xlane.xlu0 %571
        %573 = vadd.xlane.f32.xlu0 %v545
        %v574 = vpop.xlane.xlu0 %573
        %575 = vadd.xlane.f32.xlu0 %v546
        %v576 = vpop.xlane.xlu0 %575
        %577 = vadd.xlane.f32.xlu0 %v547
        %v578 = vpop.xlane.xlu0 %577
        %579 = vadd.xlane.f32.xlu0 %v548
        %v580 = vpop.xlane.xlu0 %579
        %v581 = vmul.f32 %v550, %v500
        %v582 = vmul.f32 %v552, %v500
        %v583 = vmul.f32 %v554, %v500
        %v584 = vmul.f32 %v556, %v500
        %v585 = vmul.f32 %v558, %v500
        %v586 = vmul.f32 %v560, %v500
        %v587 = vmul.f32 %v562, %v500
        %v588 = vmul.f32 %v564, %v500
        %v589 = vmul.f32 %v566, %v500
        %v590 = vmul.f32 %v568, %v500
        %v591 = vmul.f32 %v570, %v500
        %v592 = vmul.f32 %v572, %v500
        %v593 = vmul.f32 %v574, %v500
        %v594 = vmul.f32 %v576, %v500
        %v595 = vmul.f32 %v578, %v500
        %v596 = vmul.f32 %v580, %v500
        %v597 = vadd.f32 %v581, 1e-05
        %v598 = vadd.f32 %v582, 1e-05
        %v599 = vadd.f32 %v583, 1e-05
        %v600 = vadd.f32 %v584, 1e-05
        %v601 = vadd.f32 %v585, 1e-05
        %v602 = vadd.f32 %v586, 1e-05
        %v603 = vadd.f32 %v587, 1e-05
        %v604 = vadd.f32 %v588, 1e-05
        %v605 = vadd.f32 %v589, 1e-05
        %v606 = vadd.f32 %v590, 1e-05
        %v607 = vadd.f32 %v591, 1e-05
        %v608 = vadd.f32 %v592, 1e-05
        %v609 = vadd.f32 %v593, 1e-05
        %v610 = vadd.f32 %v594, 1e-05
        %v611 = vadd.f32 %v595, 1e-05
        %v612 = vadd.f32 %v596, 1e-05
        %v613 = vrsqrt.pop %v597
        %v614 = vrsqrt.pop %v598
        %v615 = vrsqrt.pop %v599
        %v616 = vrsqrt.pop %v600
        %v617 = vrsqrt.pop %v601
        %v618 = vrsqrt.pop %v602
        %v619 = vrsqrt.pop %v603
        %v620 = vrsqrt.pop %v604
        %v621 = vrsqrt.pop %v605
        %v622 = vrsqrt.pop %v606
        %v623 = vrsqrt.pop %v607
        %v624 = vrsqrt.pop %v608
        %v625 = vrsqrt.pop %v609
        %v626 = vrsqrt.pop %v610
        %v627 = vrsqrt.pop %v611
        %v628 = vrsqrt.pop %v612
        %v629 = vmul.f32 %v517, %v613
        %v630 = vmul.f32 %v518, %v614
        %v631 = vmul.f32 %v519, %v615
        %v632 = vmul.f32 %v520, %v616
        %v633 = vmul.f32 %v521, %v617
        %v634 = vmul.f32 %v522, %v618
        %v635 = vmul.f32 %v523, %v619
        %v636 = vmul.f32 %v524, %v620
        %v637 = vmul.f32 %v525, %v621
        %v638 = vmul.f32 %v526, %v622
        %v639 = vmul.f32 %v527, %v623
        %v640 = vmul.f32 %v528, %v624
        %v641 = vmul.f32 %v529, %v625
        %v642 = vmul.f32 %v530, %v626
        %v643 = vmul.f32 %v531, %v627
        %v644 = vmul.f32 %v532, %v628
        %v645 = vlaneseq
        %v646 = vshrl.u32 %v645, 7
        %v647 = vsub.s32 1, %v646
        %v648 = vrot.slane %v289, %v647
        %v649 = vmul.f32 %v629, %v648
        %v650 = vmul.f32 %v630, %v648
        %v651 = vmul.f32 %v631, %v648
        %v652 = vmul.f32 %v632, %v648
        %v653 = vmul.f32 %v633, %v648
        %v654 = vmul.f32 %v634, %v648
        %v655 = vmul.f32 %v635, %v648
        %v656 = vmul.f32 %v636, %v648
        %v657 = vmul.f32 %v637, %v648
        %v658 = vmul.f32 %v638, %v648
        %v659 = vmul.f32 %v639, %v648
        %v660 = vmul.f32 %v640, %v648
        %v661 = vmul.f32 %v641, %v648
        %v662 = vmul.f32 %v642, %v648
        %v663 = vmul.f32 %v643, %v648
        %v664 = vmul.f32 %v644, %v648
        %v665 = vlaneseq
        %v666 = vshrl.u32 %v665, 7
        %v667 = vsub.s32 2, %v666
        %v668 = vrot.slane %v289, %v667
        %v669 = vadd.f32 %v649, %v668
        %v670 = vadd.f32 %v650, %v668
        %v671 = vadd.f32 %v651, %v668
        %v672 = vadd.f32 %v652, %v668
        %v673 = vadd.f32 %v653, %v668
        %v674 = vadd.f32 %v654, %v668
        %v675 = vadd.f32 %v655, %v668
        %v676 = vadd.f32 %v656, %v668
        %v677 = vadd.f32 %v657, %v668
        %v678 = vadd.f32 %v658, %v668
        %v679 = vadd.f32 %v659, %v668
        %v680 = vadd.f32 %v660, %v668
        %v681 = vadd.f32 %v661, %v668
        %v682 = vadd.f32 %v662, %v668
        %v683 = vadd.f32 %v663, %v668
        %v684 = vadd.f32 %v664, %v668
        %v685 = vsub.f32 0.0, %v669
        %v686 = vsub.f32 0.0, %v670
        %v687 = vsub.f32 0.0, %v671
        %v688 = vsub.f32 0.0, %v672
        %v689 = vsub.f32 0.0, %v673
        %v690 = vsub.f32 0.0, %v674
        %v691 = vsub.f32 0.0, %v675
        %v692 = vsub.f32 0.0, %v676
        %v693 = vsub.f32 0.0, %v677
        %v694 = vsub.f32 0.0, %v678
        %v695 = vsub.f32 0.0, %v679
        %v696 = vsub.f32 0.0, %v680
        %v697 = vsub.f32 0.0, %v681
        %v698 = vsub.f32 0.0, %v682
        %v699 = vsub.f32 0.0, %v683
        %v700 = vsub.f32 0.0, %v684
        %v701 = vmul.f32 %v685, 1.442695
        %v702 = vpow.pop %v701
        %v703 = vmul.f32 %v686, 1.442695
        %v704 = vpow.pop %v703
        %v705 = vmul.f32 %v687, 1.442695
        %v706 = vpow.pop %v705
        %v707 = vmul.f32 %v688, 1.442695
        %v708 = vpow.pop %v707
        %v709 = vmul.f32 %v689, 1.442695
        %v710 = vpow.pop %v709
        %v711 = vmul.f32 %v690, 1.442695
        %v712 = vpow.pop %v711
        %v713 = vmul.f32 %v691, 1.442695
        %v714 = vpow.pop %v713
        %v715 = vmul.f32 %v692, 1.442695
        %v716 = vpow.pop %v715
        %v717 = vmul.f32 %v693, 1.442695
        %v718 = vpow.pop %v717
        %v719 = vmul.f32 %v694, 1.442695
        %v720 = vpow.pop %v719
        %v721 = vmul.f32 %v695, 1.442695
        %v722 = vpow.pop %v721
        %v723 = vmul.f32 %v696, 1.442695
        %v724 = vpow.pop %v723
        %v725 = vmul.f32 %v697, 1.442695
        %v726 = vpow.pop %v725
        %v727 = vmul.f32 %v698, 1.442695
        %v728 = vpow.pop %v727
        %v729 = vmul.f32 %v699, 1.442695
        %v730 = vpow.pop %v729
        %v731 = vmul.f32 %v700, 1.442695
        %v732 = vpow.pop %v731
        %v733 = vadd.f32 %v702, 1.0
        %v734 = vadd.f32 %v704, 1.0
        %v735 = vadd.f32 %v706, 1.0
        %v736 = vadd.f32 %v708, 1.0
        %v737 = vadd.f32 %v710, 1.0
        %v738 = vadd.f32 %v712, 1.0
        %v739 = vadd.f32 %v714, 1.0
        %v740 = vadd.f32 %v716, 1.0
        %v741 = vadd.f32 %v718, 1.0
        %v742 = vadd.f32 %v720, 1.0
        %v743 = vadd.f32 %v722, 1.0
        %v744 = vadd.f32 %v724, 1.0
        %v745 = vadd.f32 %v726, 1.0
        %v746 = vadd.f32 %v728, 1.0
        %v747 = vadd.f32 %v730, 1.0
        %v748 = vadd.f32 %v732, 1.0
        %v749 = vrcp.pop %v733
        %v750 = vrcp.pop %v734
        %v751 = vrcp.pop %v735
        %v752 = vrcp.pop %v736
        %v753 = vrcp.pop %v737
        %v754 = vrcp.pop %v738
        %v755 = vrcp.pop %v739
        %v756 = vrcp.pop %v740
        %v757 = vrcp.pop %v741
        %v758 = vrcp.pop %v742
        %v759 = vrcp.pop %v743
        %v760 = vrcp.pop %v744
        %v761 = vrcp.pop %v745
        %v762 = vrcp.pop %v746
        %v763 = vrcp.pop %v747
        %v764 = vrcp.pop %v748
        %v765 = vpack.c.bf16 %v750, %v749
        %v766 = vpack.c.bf16 %v752, %v751
        %v767 = vpack.c.bf16 %v754, %v753
        %v768 = vpack.c.bf16 %v756, %v755
        %v769 = vpack.c.bf16 %v758, %v757
        %v770 = vpack.c.bf16 %v760, %v759
        %v771 = vpack.c.bf16 %v762, %v761
        %v772 = vpack.c.bf16 %v764, %v763
        %v773 = vld [vmem:[%s3] sm:$0xf]
        %v774 = vld [vmem:[%s3 + $0x4] sm:$0xf]
        %v775 = vld [vmem:[%s3 + $0x8] sm:$0xf]
        %v776 = vld [vmem:[%s3 + $0xc] sm:$0xf]
        %v777 = vld [vmem:[%s3 + $0x10] sm:$0xf]
        %v778 = vld [vmem:[%s3 + $0x14] sm:$0xf]
        %v779 = vld [vmem:[%s3 + $0x18] sm:$0xf]
        %v780 = vld [vmem:[%s3 + $0x1c] sm:$0xf]
        %v781 = vld [vmem:[%s3 + $0x20] sm:$0xf]
        %v782 = vld [vmem:[%s3 + $0x24] sm:$0xf]
        %v783 = vld [vmem:[%s3 + $0x28] sm:$0xf]
        %v784 = vld [vmem:[%s3 + $0x2c] sm:$0xf]
        %v785 = vld [vmem:[%s3 + $0x30] sm:$0xf]
        %v786 = vld [vmem:[%s3 + $0x34] sm:$0xf]
        %v787 = vld [vmem:[%s3 + $0x38] sm:$0xf]
        %v788 = vld [vmem:[%s3 + $0x3c] sm:$0xf]
        %s789 = scalar_lea.vmem %s1, 4
        %v790 = vld [vmem:[%s789] sm:$0x7]
        %v791 = vlaneseq
        %v792 = vshrl.u32 %v791, 7
        %v793 = vsub.s32 0, %v792
        %v794 = vrot.slane %v790, %v793
        %v811 = vunpack.c.l.b16 %v773
        %v812 = vunpack.c.l.b16 %v774
        %v813 = vunpack.c.l.b16 %v775
        %v814 = vunpack.c.l.b16 %v776
        %v815 = vunpack.c.l.b16 %v777
        %v816 = vunpack.c.l.b16 %v778
        %v817 = vunpack.c.l.b16 %v779
        %v818 = vunpack.c.l.b16 %v780
        %v819 = vunpack.c.l.b16 %v781
        %v820 = vunpack.c.l.b16 %v782
        %v821 = vunpack.c.l.b16 %v783
        %v822 = vunpack.c.l.b16 %v784
        %v823 = vunpack.c.l.b16 %v785
        %v824 = vunpack.c.l.b16 %v786
        %v825 = vunpack.c.l.b16 %v787
        %v826 = vunpack.c.l.b16 %v788
        %v827 = vpack.c.b16 %v812, %v811
        %v828 = vpack.c.b16 %v814, %v813
        %v829 = vpack.c.b16 %v816, %v815
        %v830 = vpack.c.b16 %v818, %v817
        %v831 = vpack.c.b16 %v820, %v819
        %v832 = vpack.c.b16 %v822, %v821
        %v833 = vpack.c.b16 %v824, %v823
        %v834 = vpack.c.b16 %v826, %v825
        %843 = vmatprep.subr.bf16.mxu0 0
        %844 = vmatpush1.bf16.msra.mxu0 %v834
        %845 = vmatprep.subr.bf16.mxu0 0
        %846 = vmatpush1.bf16.msra.mxu0 %v833
        %847 = vmatprep.subr.bf16.mxu0 0
        %848 = vmatpush1.bf16.msra.mxu0 %v832
        %849 = vmatprep.subr.bf16.mxu0 0
        %850 = vmatpush1.bf16.msra.mxu0 %v831
        %851 = vmatprep.subr.bf16.mxu0 0
        %852 = vmatpush1.bf16.msra.mxu0 %v830
        %853 = vmatprep.subr.bf16.mxu0 0
        %854 = vmatpush1.bf16.msra.mxu0 %v829
        %855 = vmatprep.subr.bf16.mxu0 0
        %856 = vmatpush1.bf16.msra.mxu0 %v828
        %857 = vmatprep.subr.bf16.mxu0 0
        %858 = vmatpush1.bf16.msra.mxu0 %v827
        %859 = vmatprep.subr.bf16.mxu0 0
        %860 = vmatpush2.bf16.msra.mxu0 0
        %861 = vmatprep.subr.bf16.mxu0 0
        %862 = vmatpush2.bf16.msra.mxu0 0
        %863 = vmatprep.subr.bf16.mxu0 0
        %864 = vmatpush2.bf16.msra.mxu0 0
        %865 = vmatprep.subr.bf16.mxu0 0
        %866 = vmatpush2.bf16.msra.mxu0 0
        %867 = vmatprep.subr.bf16.mxu0 0
        %868 = vmatpush2.bf16.msra.mxu0 0
        %869 = vmatprep.subr.bf16.mxu0 0
        %870 = vmatpush2.bf16.msra.mxu0 0
        %871 = vmatprep.subr.bf16.mxu0 0
        %872 = vmatpush2.bf16.msra.mxu0 0
        %873 = vmatprep.subr.bf16.mxu0 0
        %874 = vmatpush2.bf16.msra.mxu0 0
        %875 = vmatprep.mubr.bf16.mxu0 0
        %876 = vmatmul.mubr.bf16.gmra.mxu0 %v765
        %v877 = vpop.f32.mrf.mxu0
        %v878 = vadd.f32 %v794, %v877
        %v879 = vpop.f32.mrf.mxu0
        %v880 = vpop.f32.mrf.mxu0
        %v881 = vadd.f32 %v794, %v880
        %v882 = vpop.f32.mrf.mxu0
        %883 = vmatprep.mubr.bf16.mxu0 0
        %884 = vmatmul.mubr.bf16.gmra.mxu0 %v766
        %v885 = vpop.f32.mrf.mxu0
        %v886 = vadd.f32 %v794, %v885
        %v887 = vpop.f32.mrf.mxu0
        %v888 = vpop.f32.mrf.mxu0
        %v889 = vadd.f32 %v794, %v888
        %v890 = vpop.f32.mrf.mxu0
        %891 = vmatprep.mubr.bf16.mxu0 0
        %892 = vmatmul.mubr.bf16.gmra.mxu0 %v767
        %v893 = vpop.f32.mrf.mxu0
        %v894 = vadd.f32 %v794, %v893
        %v895 = vpop.f32.mrf.mxu0
        %v896 = vpop.f32.mrf.mxu0
        %v897 = vadd.f32 %v794, %v896
        %v898 = vpop.f32.mrf.mxu0
        %899 = vmatprep.mubr.bf16.mxu0 0
        %900 = vmatmul.mubr.bf16.gmra.mxu0 %v768
        %v901 = vpop.f32.mrf.mxu0
        %v902 = vadd.f32 %v794, %v901
        %v903 = vpop.f32.mrf.mxu0
        %v904 = vpop.f32.mrf.mxu0
        %v905 = vadd.f32 %v794, %v904
        %v906 = vpop.f32.mrf.mxu0
        %907 = vmatprep.mubr.bf16.mxu0 0
        %908 = vmatmul.mubr.bf16.gmra.mxu0 %v769
        %v909 = vpop.f32.mrf.mxu0
        %v910 = vadd.f32 %v794, %v909
        %v911 = vpop.f32.mrf.mxu0
        %v912 = vpop.f32.mrf.mxu0
        %v913 = vadd.f32 %v794, %v912
        %v914 = vpop.f32.mrf.mxu0
        %915 = vmatprep.mubr.bf16.mxu0 0
        %916 = vmatmul.mubr.bf16.gmra.mxu0 %v770
        %v917 = vpop.f32.mrf.mxu0
        %v918 = vadd.f32 %v794, %v917
        %v919 = vpop.f32.mrf.mxu0
        %v920 = vpop.f32.mrf.mxu0
        %v921 = vadd.f32 %v794, %v920
        %v922 = vpop.f32.mrf.mxu0
        %923 = vmatprep.mubr.bf16.mxu0 0
        %924 = vmatmul.mubr.bf16.gmra.mxu0 %v771
        %v925 = vpop.f32.mrf.mxu0
        %v926 = vadd.f32 %v794, %v925
        %v927 = vpop.f32.mrf.mxu0
        %v928 = vpop.f32.mrf.mxu0
        %v929 = vadd.f32 %v794, %v928
        %v930 = vpop.f32.mrf.mxu0
        %931 = vmatprep.mubr.bf16.mxu0 0
        %932 = vmatmul.mubr.bf16.gmra.mxu0 %v772
        %v933 = vpop.f32.mrf.mxu0
        %v934 = vadd.f32 %v794, %v933
        %v935 = vpop.f32.mrf.mxu0
        %v936 = vpop.f32.mrf.mxu0
        %v937 = vadd.f32 %v794, %v936
        %v938 = vpop.f32.mrf.mxu0
        %939 = vdwg.mxu0
        %940 = vadd.xlane.f32.xlu0 %v878
        %v941 = vpop.xlane.xlu0 %940
        %942 = vadd.xlane.f32.xlu0 %v881
        %v943 = vpop.xlane.xlu0 %942
        %944 = vadd.xlane.f32.xlu0 %v886
        %v945 = vpop.xlane.xlu0 %944
        %946 = vadd.xlane.f32.xlu0 %v889
        %v947 = vpop.xlane.xlu0 %946
        %948 = vadd.xlane.f32.xlu0 %v894
        %v949 = vpop.xlane.xlu0 %948
        %950 = vadd.xlane.f32.xlu0 %v897
        %v951 = vpop.xlane.xlu0 %950
        %952 = vadd.xlane.f32.xlu0 %v902
        %v953 = vpop.xlane.xlu0 %952
        %954 = vadd.xlane.f32.xlu0 %v905
        %v955 = vpop.xlane.xlu0 %954
        %956 = vadd.xlane.f32.xlu0 %v910
        %v957 = vpop.xlane.xlu0 %956
        %958 = vadd.xlane.f32.xlu0 %v913
        %v959 = vpop.xlane.xlu0 %958
        %960 = vadd.xlane.f32.xlu0 %v918
        %v961 = vpop.xlane.xlu0 %960
        %962 = vadd.xlane.f32.xlu0 %v921
        %v963 = vpop.xlane.xlu0 %962
        %964 = vadd.xlane.f32.xlu0 %v926
        %v965 = vpop.xlane.xlu0 %964
        %966 = vadd.xlane.f32.xlu0 %v929
        %v967 = vpop.xlane.xlu0 %966
        %968 = vadd.xlane.f32.xlu0 %v934
        %v969 = vpop.xlane.xlu0 %968
        %970 = vadd.xlane.f32.xlu0 %v937
        %v971 = vpop.xlane.xlu0 %970
        %v972 = vmul.f32 %v941, %v500
        %v973 = vmul.f32 %v943, %v500
        %v974 = vmul.f32 %v945, %v500
        %v975 = vmul.f32 %v947, %v500
        %v976 = vmul.f32 %v949, %v500
        %v977 = vmul.f32 %v951, %v500
        %v978 = vmul.f32 %v953, %v500
        %v979 = vmul.f32 %v955, %v500
        %v980 = vmul.f32 %v957, %v500
        %v981 = vmul.f32 %v959, %v500
        %v982 = vmul.f32 %v961, %v500
        %v983 = vmul.f32 %v963, %v500
        %v984 = vmul.f32 %v965, %v500
        %v985 = vmul.f32 %v967, %v500
        %v986 = vmul.f32 %v969, %v500
        %v987 = vmul.f32 %v971, %v500
        %v988 = vsub.f32 %v878, %v972
        %v989 = vsub.f32 %v881, %v973
        %v990 = vsub.f32 %v886, %v974
        %v991 = vsub.f32 %v889, %v975
        %v992 = vsub.f32 %v894, %v976
        %v993 = vsub.f32 %v897, %v977
        %v994 = vsub.f32 %v902, %v978
        %v995 = vsub.f32 %v905, %v979
        %v996 = vsub.f32 %v910, %v980
        %v997 = vsub.f32 %v913, %v981
        %v998 = vsub.f32 %v918, %v982
        %v999 = vsub.f32 %v921, %v983
        %v1000 = vsub.f32 %v926, %v984
        %v1001 = vsub.f32 %v929, %v985
        %v1002 = vsub.f32 %v934, %v986
        %v1003 = vsub.f32 %v937, %v987
        %v1004 = vmul.f32 %v988, %v988
        %v1005 = vmul.f32 %v989, %v989
        %v1006 = vmul.f32 %v990, %v990
        %v1007 = vmul.f32 %v991, %v991
        %v1008 = vmul.f32 %v992, %v992
        %v1009 = vmul.f32 %v993, %v993
        %v1010 = vmul.f32 %v994, %v994
        %v1011 = vmul.f32 %v995, %v995
        %v1012 = vmul.f32 %v996, %v996
        %v1013 = vmul.f32 %v997, %v997
        %v1014 = vmul.f32 %v998, %v998
        %v1015 = vmul.f32 %v999, %v999
        %v1016 = vmul.f32 %v1000, %v1000
        %v1017 = vmul.f32 %v1001, %v1001
        %v1018 = vmul.f32 %v1002, %v1002
        %v1019 = vmul.f32 %v1003, %v1003
        %1020 = vadd.xlane.f32.xlu0 %v1004
        %v1021 = vpop.xlane.xlu0 %1020
        %1022 = vadd.xlane.f32.xlu0 %v1005
        %v1023 = vpop.xlane.xlu0 %1022
        %1024 = vadd.xlane.f32.xlu0 %v1006
        %v1025 = vpop.xlane.xlu0 %1024
        %1026 = vadd.xlane.f32.xlu0 %v1007
        %v1027 = vpop.xlane.xlu0 %1026
        %1028 = vadd.xlane.f32.xlu0 %v1008
        %v1029 = vpop.xlane.xlu0 %1028
        %1030 = vadd.xlane.f32.xlu0 %v1009
        %v1031 = vpop.xlane.xlu0 %1030
        %1032 = vadd.xlane.f32.xlu0 %v1010
        %v1033 = vpop.xlane.xlu0 %1032
        %1034 = vadd.xlane.f32.xlu0 %v1011
        %v1035 = vpop.xlane.xlu0 %1034
        %1036 = vadd.xlane.f32.xlu0 %v1012
        %v1037 = vpop.xlane.xlu0 %1036
        %1038 = vadd.xlane.f32.xlu0 %v1013
        %v1039 = vpop.xlane.xlu0 %1038
        %1040 = vadd.xlane.f32.xlu0 %v1014
        %v1041 = vpop.xlane.xlu0 %1040
        %1042 = vadd.xlane.f32.xlu0 %v1015
        %v1043 = vpop.xlane.xlu0 %1042
        %1044 = vadd.xlane.f32.xlu0 %v1016
        %v1045 = vpop.xlane.xlu0 %1044
        %1046 = vadd.xlane.f32.xlu0 %v1017
        %v1047 = vpop.xlane.xlu0 %1046
        %1048 = vadd.xlane.f32.xlu0 %v1018
        %v1049 = vpop.xlane.xlu0 %1048
        %1050 = vadd.xlane.f32.xlu0 %v1019
        %v1051 = vpop.xlane.xlu0 %1050
        %v1052 = vmul.f32 %v1021, %v500
        %v1053 = vmul.f32 %v1023, %v500
        %v1054 = vmul.f32 %v1025, %v500
        %v1055 = vmul.f32 %v1027, %v500
        %v1056 = vmul.f32 %v1029, %v500
        %v1057 = vmul.f32 %v1031, %v500
        %v1058 = vmul.f32 %v1033, %v500
        %v1059 = vmul.f32 %v1035, %v500
        %v1060 = vmul.f32 %v1037, %v500
        %v1061 = vmul.f32 %v1039, %v500
        %v1062 = vmul.f32 %v1041, %v500
        %v1063 = vmul.f32 %v1043, %v500
        %v1064 = vmul.f32 %v1045, %v500
        %v1065 = vmul.f32 %v1047, %v500
        %v1066 = vmul.f32 %v1049, %v500
        %v1067 = vmul.f32 %v1051, %v500
        %v1068 = vadd.f32 %v1052, 1e-05
        %v1069 = vadd.f32 %v1053, 1e-05
        %v1070 = vadd.f32 %v1054, 1e-05
        %v1071 = vadd.f32 %v1055, 1e-05
        %v1072 = vadd.f32 %v1056, 1e-05
        %v1073 = vadd.f32 %v1057, 1e-05
        %v1074 = vadd.f32 %v1058, 1e-05
        %v1075 = vadd.f32 %v1059, 1e-05
        %v1076 = vadd.f32 %v1060, 1e-05
        %v1077 = vadd.f32 %v1061, 1e-05
        %v1078 = vadd.f32 %v1062, 1e-05
        %v1079 = vadd.f32 %v1063, 1e-05
        %v1080 = vadd.f32 %v1064, 1e-05
        %v1081 = vadd.f32 %v1065, 1e-05
        %v1082 = vadd.f32 %v1066, 1e-05
        %v1083 = vadd.f32 %v1067, 1e-05
        %v1084 = vrsqrt.pop %v1068
        %v1085 = vrsqrt.pop %v1069
        %v1086 = vrsqrt.pop %v1070
        %v1087 = vrsqrt.pop %v1071
        %v1088 = vrsqrt.pop %v1072
        %v1089 = vrsqrt.pop %v1073
        %v1090 = vrsqrt.pop %v1074
        %v1091 = vrsqrt.pop %v1075
        %v1092 = vrsqrt.pop %v1076
        %v1093 = vrsqrt.pop %v1077
        %v1094 = vrsqrt.pop %v1078
        %v1095 = vrsqrt.pop %v1079
        %v1096 = vrsqrt.pop %v1080
        %v1097 = vrsqrt.pop %v1081
        %v1098 = vrsqrt.pop %v1082
        %v1099 = vrsqrt.pop %v1083
        %v1100 = vmul.f32 %v988, %v1084
        %v1101 = vmul.f32 %v989, %v1085
        %v1102 = vmul.f32 %v990, %v1086
        %v1103 = vmul.f32 %v991, %v1087
        %v1104 = vmul.f32 %v992, %v1088
        %v1105 = vmul.f32 %v993, %v1089
        %v1106 = vmul.f32 %v994, %v1090
        %v1107 = vmul.f32 %v995, %v1091
        %v1108 = vmul.f32 %v996, %v1092
        %v1109 = vmul.f32 %v997, %v1093
        %v1110 = vmul.f32 %v998, %v1094
        %v1111 = vmul.f32 %v999, %v1095
        %v1112 = vmul.f32 %v1000, %v1096
        %v1113 = vmul.f32 %v1001, %v1097
        %v1114 = vmul.f32 %v1002, %v1098
        %v1115 = vmul.f32 %v1003, %v1099
        %v1116 = vlaneseq
        %v1117 = vshrl.u32 %v1116, 7
        %v1118 = vsub.s32 1, %v1117
        %v1119 = vrot.slane %v790, %v1118
        %v1120 = vmul.f32 %v1100, %v1119
        %v1121 = vmul.f32 %v1101, %v1119
        %v1122 = vmul.f32 %v1102, %v1119
        %v1123 = vmul.f32 %v1103, %v1119
        %v1124 = vmul.f32 %v1104, %v1119
        %v1125 = vmul.f32 %v1105, %v1119
        %v1126 = vmul.f32 %v1106, %v1119
        %v1127 = vmul.f32 %v1107, %v1119
        %v1128 = vmul.f32 %v1108, %v1119
        %v1129 = vmul.f32 %v1109, %v1119
        %v1130 = vmul.f32 %v1110, %v1119
        %v1131 = vmul.f32 %v1111, %v1119
        %v1132 = vmul.f32 %v1112, %v1119
        %v1133 = vmul.f32 %v1113, %v1119
        %v1134 = vmul.f32 %v1114, %v1119
        %v1135 = vmul.f32 %v1115, %v1119
        %v1136 = vlaneseq
        %v1137 = vshrl.u32 %v1136, 7
        %v1138 = vsub.s32 2, %v1137
        %v1139 = vrot.slane %v790, %v1138
        %v1140 = vadd.f32 %v1120, %v1139
        %v1141 = vadd.f32 %v1121, %v1139
        %v1142 = vadd.f32 %v1122, %v1139
        %v1143 = vadd.f32 %v1123, %v1139
        %v1144 = vadd.f32 %v1124, %v1139
        %v1145 = vadd.f32 %v1125, %v1139
        %v1146 = vadd.f32 %v1126, %v1139
        %v1147 = vadd.f32 %v1127, %v1139
        %v1148 = vadd.f32 %v1128, %v1139
        %v1149 = vadd.f32 %v1129, %v1139
        %v1150 = vadd.f32 %v1130, %v1139
        %v1151 = vadd.f32 %v1131, %v1139
        %v1152 = vadd.f32 %v1132, %v1139
        %v1153 = vadd.f32 %v1133, %v1139
        %v1154 = vadd.f32 %v1134, %v1139
        %v1155 = vadd.f32 %v1135, %v1139
        %v1156 = vsub.f32 0.0, %v1140
        %v1157 = vsub.f32 0.0, %v1141
        %v1158 = vsub.f32 0.0, %v1142
        %v1159 = vsub.f32 0.0, %v1143
        %v1160 = vsub.f32 0.0, %v1144
        %v1161 = vsub.f32 0.0, %v1145
        %v1162 = vsub.f32 0.0, %v1146
        %v1163 = vsub.f32 0.0, %v1147
        %v1164 = vsub.f32 0.0, %v1148
        %v1165 = vsub.f32 0.0, %v1149
        %v1166 = vsub.f32 0.0, %v1150
        %v1167 = vsub.f32 0.0, %v1151
        %v1168 = vsub.f32 0.0, %v1152
        %v1169 = vsub.f32 0.0, %v1153
        %v1170 = vsub.f32 0.0, %v1154
        %v1171 = vsub.f32 0.0, %v1155
        %v1172 = vmul.f32 %v1156, 1.442695
        %v1173 = vpow.pop %v1172
        %v1174 = vmul.f32 %v1157, 1.442695
        %v1175 = vpow.pop %v1174
        %v1176 = vmul.f32 %v1158, 1.442695
        %v1177 = vpow.pop %v1176
        %v1178 = vmul.f32 %v1159, 1.442695
        %v1179 = vpow.pop %v1178
        %v1180 = vmul.f32 %v1160, 1.442695
        %v1181 = vpow.pop %v1180
        %v1182 = vmul.f32 %v1161, 1.442695
        %v1183 = vpow.pop %v1182
        %v1184 = vmul.f32 %v1162, 1.442695
        %v1185 = vpow.pop %v1184
        %v1186 = vmul.f32 %v1163, 1.442695
        %v1187 = vpow.pop %v1186
        %v1188 = vmul.f32 %v1164, 1.442695
        %v1189 = vpow.pop %v1188
        %v1190 = vmul.f32 %v1165, 1.442695
        %v1191 = vpow.pop %v1190
        %v1192 = vmul.f32 %v1166, 1.442695
        %v1193 = vpow.pop %v1192
        %v1194 = vmul.f32 %v1167, 1.442695
        %v1195 = vpow.pop %v1194
        %v1196 = vmul.f32 %v1168, 1.442695
        %v1197 = vpow.pop %v1196
        %v1198 = vmul.f32 %v1169, 1.442695
        %v1199 = vpow.pop %v1198
        %v1200 = vmul.f32 %v1170, 1.442695
        %v1201 = vpow.pop %v1200
        %v1202 = vmul.f32 %v1171, 1.442695
        %v1203 = vpow.pop %v1202
        %v1204 = vadd.f32 %v1173, 1.0
        %v1205 = vadd.f32 %v1175, 1.0
        %v1206 = vadd.f32 %v1177, 1.0
        %v1207 = vadd.f32 %v1179, 1.0
        %v1208 = vadd.f32 %v1181, 1.0
        %v1209 = vadd.f32 %v1183, 1.0
        %v1210 = vadd.f32 %v1185, 1.0
        %v1211 = vadd.f32 %v1187, 1.0
        %v1212 = vadd.f32 %v1189, 1.0
        %v1213 = vadd.f32 %v1191, 1.0
        %v1214 = vadd.f32 %v1193, 1.0
        %v1215 = vadd.f32 %v1195, 1.0
        %v1216 = vadd.f32 %v1197, 1.0
        %v1217 = vadd.f32 %v1199, 1.0
        %v1218 = vadd.f32 %v1201, 1.0
        %v1219 = vadd.f32 %v1203, 1.0
        %v1220 = vrcp.pop %v1204
        %v1221 = vrcp.pop %v1205
        %v1222 = vrcp.pop %v1206
        %v1223 = vrcp.pop %v1207
        %v1224 = vrcp.pop %v1208
        %v1225 = vrcp.pop %v1209
        %v1226 = vrcp.pop %v1210
        %v1227 = vrcp.pop %v1211
        %v1228 = vrcp.pop %v1212
        %v1229 = vrcp.pop %v1213
        %v1230 = vrcp.pop %v1214
        %v1231 = vrcp.pop %v1215
        %v1232 = vrcp.pop %v1216
        %v1233 = vrcp.pop %v1217
        %v1234 = vrcp.pop %v1218
        %v1235 = vrcp.pop %v1219
        %v1236 = vpack.c.bf16 %v1221, %v1220
        %v1237 = vpack.c.bf16 %v1223, %v1222
        %v1238 = vpack.c.bf16 %v1225, %v1224
        %v1239 = vpack.c.bf16 %v1227, %v1226
        %v1240 = vpack.c.bf16 %v1229, %v1228
        %v1241 = vpack.c.bf16 %v1231, %v1230
        %v1242 = vpack.c.bf16 %v1233, %v1232
        %v1243 = vpack.c.bf16 %v1235, %v1234
        %v1244 = vld [vmem:[%s4] sm:$0xf]
        %v1245 = vld [vmem:[%s4 + $0x4] sm:$0xf]
        %v1246 = vld [vmem:[%s4 + $0x8] sm:$0xf]
        %v1247 = vld [vmem:[%s4 + $0xc] sm:$0xf]
        %v1248 = vld [vmem:[%s4 + $0x10] sm:$0xf]
        %v1249 = vld [vmem:[%s4 + $0x14] sm:$0xf]
        %v1250 = vld [vmem:[%s4 + $0x18] sm:$0xf]
        %v1251 = vld [vmem:[%s4 + $0x1c] sm:$0xf]
        %v1252 = vld [vmem:[%s4 + $0x20] sm:$0xf]
        %v1253 = vld [vmem:[%s4 + $0x24] sm:$0xf]
        %v1254 = vld [vmem:[%s4 + $0x28] sm:$0xf]
        %v1255 = vld [vmem:[%s4 + $0x2c] sm:$0xf]
        %v1256 = vld [vmem:[%s4 + $0x30] sm:$0xf]
        %v1257 = vld [vmem:[%s4 + $0x34] sm:$0xf]
        %v1258 = vld [vmem:[%s4 + $0x38] sm:$0xf]
        %v1259 = vld [vmem:[%s4 + $0x3c] sm:$0xf]
        %s1260 = scalar_lea.vmem %s1, 8
        %v1261 = vld [vmem:[%s1260] sm:$0x7]
        %v1262 = vlaneseq
        %v1263 = vshrl.u32 %v1262, 7
        %v1264 = vsub.s32 0, %v1263
        %v1265 = vrot.slane %v1261, %v1264
        %v1282 = vunpack.c.l.b16 %v1244
        %v1283 = vunpack.c.l.b16 %v1245
        %v1284 = vunpack.c.l.b16 %v1246
        %v1285 = vunpack.c.l.b16 %v1247
        %v1286 = vunpack.c.l.b16 %v1248
        %v1287 = vunpack.c.l.b16 %v1249
        %v1288 = vunpack.c.l.b16 %v1250
        %v1289 = vunpack.c.l.b16 %v1251
        %v1290 = vunpack.c.l.b16 %v1252
        %v1291 = vunpack.c.l.b16 %v1253
        %v1292 = vunpack.c.l.b16 %v1254
        %v1293 = vunpack.c.l.b16 %v1255
        %v1294 = vunpack.c.l.b16 %v1256
        %v1295 = vunpack.c.l.b16 %v1257
        %v1296 = vunpack.c.l.b16 %v1258
        %v1297 = vunpack.c.l.b16 %v1259
        %v1298 = vpack.c.b16 %v1283, %v1282
        %v1299 = vpack.c.b16 %v1285, %v1284
        %v1300 = vpack.c.b16 %v1287, %v1286
        %v1301 = vpack.c.b16 %v1289, %v1288
        %v1302 = vpack.c.b16 %v1291, %v1290
        %v1303 = vpack.c.b16 %v1293, %v1292
        %v1304 = vpack.c.b16 %v1295, %v1294
        %v1305 = vpack.c.b16 %v1297, %v1296
        %1314 = vmatprep.subr.bf16.mxu0 0
        %1315 = vmatpush1.bf16.msra.mxu0 %v1305
        %1316 = vmatprep.subr.bf16.mxu0 0
        %1317 = vmatpush1.bf16.msra.mxu0 %v1304
        %1318 = vmatprep.subr.bf16.mxu0 0
        %1319 = vmatpush1.bf16.msra.mxu0 %v1303
        %1320 = vmatprep.subr.bf16.mxu0 0
        %1321 = vmatpush1.bf16.msra.mxu0 %v1302
        %1322 = vmatprep.subr.bf16.mxu0 0
        %1323 = vmatpush1.bf16.msra.mxu0 %v1301
        %1324 = vmatprep.subr.bf16.mxu0 0
        %1325 = vmatpush1.bf16.msra.mxu0 %v1300
        %1326 = vmatprep.subr.bf16.mxu0 0
        %1327 = vmatpush1.bf16.msra.mxu0 %v1299
        %1328 = vmatprep.subr.bf16.mxu0 0
        %1329 = vmatpush1.bf16.msra.mxu0 %v1298
        %1330 = vmatprep.subr.bf16.mxu0 0
        %1331 = vmatpush2.bf16.msra.mxu0 0
        %1332 = vmatprep.subr.bf16.mxu0 0
        %1333 = vmatpush2.bf16.msra.mxu0 0
        %1334 = vmatprep.subr.bf16.mxu0 0
        %1335 = vmatpush2.bf16.msra.mxu0 0
        %1336 = vmatprep.subr.bf16.mxu0 0
        %1337 = vmatpush2.bf16.msra.mxu0 0
        %1338 = vmatprep.subr.bf16.mxu0 0
        %1339 = vmatpush2.bf16.msra.mxu0 0
        %1340 = vmatprep.subr.bf16.mxu0 0
        %1341 = vmatpush2.bf16.msra.mxu0 0
        %1342 = vmatprep.subr.bf16.mxu0 0
        %1343 = vmatpush2.bf16.msra.mxu0 0
        %1344 = vmatprep.subr.bf16.mxu0 0
        %1345 = vmatpush2.bf16.msra.mxu0 0
        %1346 = vmatprep.mubr.bf16.mxu0 0
        %1347 = vmatmul.mubr.bf16.gmra.mxu0 %v1236
        %v1348 = vpop.f32.mrf.mxu0
        %v1349 = vadd.f32 %v1265, %v1348
        %v1350 = vpop.f32.mrf.mxu0
        %v1351 = vpop.f32.mrf.mxu0
        %v1352 = vadd.f32 %v1265, %v1351
        %v1353 = vpop.f32.mrf.mxu0
        %1354 = vmatprep.mubr.bf16.mxu0 0
        %1355 = vmatmul.mubr.bf16.gmra.mxu0 %v1237
        %v1356 = vpop.f32.mrf.mxu0
        %v1357 = vadd.f32 %v1265, %v1356
        %v1358 = vpop.f32.mrf.mxu0
        %v1359 = vpop.f32.mrf.mxu0
        %v1360 = vadd.f32 %v1265, %v1359
        %v1361 = vpop.f32.mrf.mxu0
        %1362 = vmatprep.mubr.bf16.mxu0 0
        %1363 = vmatmul.mubr.bf16.gmra.mxu0 %v1238
        %v1364 = vpop.f32.mrf.mxu0
        %v1365 = vadd.f32 %v1265, %v1364
        %v1366 = vpop.f32.mrf.mxu0
        %v1367 = vpop.f32.mrf.mxu0
        %v1368 = vadd.f32 %v1265, %v1367
        %v1369 = vpop.f32.mrf.mxu0
        %1370 = vmatprep.mubr.bf16.mxu0 0
        %1371 = vmatmul.mubr.bf16.gmra.mxu0 %v1239
        %v1372 = vpop.f32.mrf.mxu0
        %v1373 = vadd.f32 %v1265, %v1372
        %v1374 = vpop.f32.mrf.mxu0
        %v1375 = vpop.f32.mrf.mxu0
        %v1376 = vadd.f32 %v1265, %v1375
        %v1377 = vpop.f32.mrf.mxu0
        %1378 = vmatprep.mubr.bf16.mxu0 0
        %1379 = vmatmul.mubr.bf16.gmra.mxu0 %v1240
        %v1380 = vpop.f32.mrf.mxu0
        %v1381 = vadd.f32 %v1265, %v1380
        %v1382 = vpop.f32.mrf.mxu0
        %v1383 = vpop.f32.mrf.mxu0
        %v1384 = vadd.f32 %v1265, %v1383
        %v1385 = vpop.f32.mrf.mxu0
        %1386 = vmatprep.mubr.bf16.mxu0 0
        %1387 = vmatmul.mubr.bf16.gmra.mxu0 %v1241
        %v1388 = vpop.f32.mrf.mxu0
        %v1389 = vadd.f32 %v1265, %v1388
        %v1390 = vpop.f32.mrf.mxu0
        %v1391 = vpop.f32.mrf.mxu0
        %v1392 = vadd.f32 %v1265, %v1391
        %v1393 = vpop.f32.mrf.mxu0
        %1394 = vmatprep.mubr.bf16.mxu0 0
        %1395 = vmatmul.mubr.bf16.gmra.mxu0 %v1242
        %v1396 = vpop.f32.mrf.mxu0
        %v1397 = vadd.f32 %v1265, %v1396
        %v1398 = vpop.f32.mrf.mxu0
        %v1399 = vpop.f32.mrf.mxu0
        %v1400 = vadd.f32 %v1265, %v1399
        %v1401 = vpop.f32.mrf.mxu0
        %1402 = vmatprep.mubr.bf16.mxu0 0
        %1403 = vmatmul.mubr.bf16.gmra.mxu0 %v1243
        %v1404 = vpop.f32.mrf.mxu0
        %v1405 = vadd.f32 %v1265, %v1404
        %v1406 = vpop.f32.mrf.mxu0
        %v1407 = vpop.f32.mrf.mxu0
        %v1408 = vadd.f32 %v1265, %v1407
        %v1409 = vpop.f32.mrf.mxu0
        %1410 = vdwg.mxu0
        %1411 = vadd.xlane.f32.xlu0 %v1349
        %v1412 = vpop.xlane.xlu0 %1411
        %1413 = vadd.xlane.f32.xlu0 %v1352
        %v1414 = vpop.xlane.xlu0 %1413
        %1415 = vadd.xlane.f32.xlu0 %v1357
        %v1416 = vpop.xlane.xlu0 %1415
        %1417 = vadd.xlane.f32.xlu0 %v1360
        %v1418 = vpop.xlane.xlu0 %1417
        %1419 = vadd.xlane.f32.xlu0 %v1365
        %v1420 = vpop.xlane.xlu0 %1419
        %1421 = vadd.xlane.f32.xlu0 %v1368
        %v1422 = vpop.xlane.xlu0 %1421
        %1423 = vadd.xlane.f32.xlu0 %v1373
        %v1424 = vpop.xlane.xlu0 %1423
        %1425 = vadd.xlane.f32.xlu0 %v1376
        %v1426 = vpop.xlane.xlu0 %1425
        %1427 = vadd.xlane.f32.xlu0 %v1381
        %v1428 = vpop.xlane.xlu0 %1427
        %1429 = vadd.xlane.f32.xlu0 %v1384
        %v1430 = vpop.xlane.xlu0 %1429
        %1431 = vadd.xlane.f32.xlu0 %v1389
        %v1432 = vpop.xlane.xlu0 %1431
        %1433 = vadd.xlane.f32.xlu0 %v1392
        %v1434 = vpop.xlane.xlu0 %1433
        %1435 = vadd.xlane.f32.xlu0 %v1397
        %v1436 = vpop.xlane.xlu0 %1435
        %1437 = vadd.xlane.f32.xlu0 %v1400
        %v1438 = vpop.xlane.xlu0 %1437
        %1439 = vadd.xlane.f32.xlu0 %v1405
        %v1440 = vpop.xlane.xlu0 %1439
        %1441 = vadd.xlane.f32.xlu0 %v1408
        %v1442 = vpop.xlane.xlu0 %1441
        %v1443 = vmul.f32 %v1412, %v500
        %v1444 = vmul.f32 %v1414, %v500
        %v1445 = vmul.f32 %v1416, %v500
        %v1446 = vmul.f32 %v1418, %v500
        %v1447 = vmul.f32 %v1420, %v500
        %v1448 = vmul.f32 %v1422, %v500
        %v1449 = vmul.f32 %v1424, %v500
        %v1450 = vmul.f32 %v1426, %v500
        %v1451 = vmul.f32 %v1428, %v500
        %v1452 = vmul.f32 %v1430, %v500
        %v1453 = vmul.f32 %v1432, %v500
        %v1454 = vmul.f32 %v1434, %v500
        %v1455 = vmul.f32 %v1436, %v500
        %v1456 = vmul.f32 %v1438, %v500
        %v1457 = vmul.f32 %v1440, %v500
        %v1458 = vmul.f32 %v1442, %v500
        %v1459 = vsub.f32 %v1349, %v1443
        %v1460 = vsub.f32 %v1352, %v1444
        %v1461 = vsub.f32 %v1357, %v1445
        %v1462 = vsub.f32 %v1360, %v1446
        %v1463 = vsub.f32 %v1365, %v1447
        %v1464 = vsub.f32 %v1368, %v1448
        %v1465 = vsub.f32 %v1373, %v1449
        %v1466 = vsub.f32 %v1376, %v1450
        %v1467 = vsub.f32 %v1381, %v1451
        %v1468 = vsub.f32 %v1384, %v1452
        %v1469 = vsub.f32 %v1389, %v1453
        %v1470 = vsub.f32 %v1392, %v1454
        %v1471 = vsub.f32 %v1397, %v1455
        %v1472 = vsub.f32 %v1400, %v1456
        %v1473 = vsub.f32 %v1405, %v1457
        %v1474 = vsub.f32 %v1408, %v1458
        %v1475 = vmul.f32 %v1459, %v1459
        %v1476 = vmul.f32 %v1460, %v1460
        %v1477 = vmul.f32 %v1461, %v1461
        %v1478 = vmul.f32 %v1462, %v1462
        %v1479 = vmul.f32 %v1463, %v1463
        %v1480 = vmul.f32 %v1464, %v1464
        %v1481 = vmul.f32 %v1465, %v1465
        %v1482 = vmul.f32 %v1466, %v1466
        %v1483 = vmul.f32 %v1467, %v1467
        %v1484 = vmul.f32 %v1468, %v1468
        %v1485 = vmul.f32 %v1469, %v1469
        %v1486 = vmul.f32 %v1470, %v1470
        %v1487 = vmul.f32 %v1471, %v1471
        %v1488 = vmul.f32 %v1472, %v1472
        %v1489 = vmul.f32 %v1473, %v1473
        %v1490 = vmul.f32 %v1474, %v1474
        %1491 = vadd.xlane.f32.xlu0 %v1475
        %v1492 = vpop.xlane.xlu0 %1491
        %1493 = vadd.xlane.f32.xlu0 %v1476
        %v1494 = vpop.xlane.xlu0 %1493
        %1495 = vadd.xlane.f32.xlu0 %v1477
        %v1496 = vpop.xlane.xlu0 %1495
        %1497 = vadd.xlane.f32.xlu0 %v1478
        %v1498 = vpop.xlane.xlu0 %1497
        %1499 = vadd.xlane.f32.xlu0 %v1479
        %v1500 = vpop.xlane.xlu0 %1499
        %1501 = vadd.xlane.f32.xlu0 %v1480
        %v1502 = vpop.xlane.xlu0 %1501
        %1503 = vadd.xlane.f32.xlu0 %v1481
        %v1504 = vpop.xlane.xlu0 %1503
        %1505 = vadd.xlane.f32.xlu0 %v1482
        %v1506 = vpop.xlane.xlu0 %1505
        %1507 = vadd.xlane.f32.xlu0 %v1483
        %v1508 = vpop.xlane.xlu0 %1507
        %1509 = vadd.xlane.f32.xlu0 %v1484
        %v1510 = vpop.xlane.xlu0 %1509
        %1511 = vadd.xlane.f32.xlu0 %v1485
        %v1512 = vpop.xlane.xlu0 %1511
        %1513 = vadd.xlane.f32.xlu0 %v1486
        %v1514 = vpop.xlane.xlu0 %1513
        %1515 = vadd.xlane.f32.xlu0 %v1487
        %v1516 = vpop.xlane.xlu0 %1515
        %1517 = vadd.xlane.f32.xlu0 %v1488
        %v1518 = vpop.xlane.xlu0 %1517
        %1519 = vadd.xlane.f32.xlu0 %v1489
        %v1520 = vpop.xlane.xlu0 %1519
        %1521 = vadd.xlane.f32.xlu0 %v1490
        %v1522 = vpop.xlane.xlu0 %1521
        %v1523 = vmul.f32 %v1492, %v500
        %v1524 = vmul.f32 %v1494, %v500
        %v1525 = vmul.f32 %v1496, %v500
        %v1526 = vmul.f32 %v1498, %v500
        %v1527 = vmul.f32 %v1500, %v500
        %v1528 = vmul.f32 %v1502, %v500
        %v1529 = vmul.f32 %v1504, %v500
        %v1530 = vmul.f32 %v1506, %v500
        %v1531 = vmul.f32 %v1508, %v500
        %v1532 = vmul.f32 %v1510, %v500
        %v1533 = vmul.f32 %v1512, %v500
        %v1534 = vmul.f32 %v1514, %v500
        %v1535 = vmul.f32 %v1516, %v500
        %v1536 = vmul.f32 %v1518, %v500
        %v1537 = vmul.f32 %v1520, %v500
        %v1538 = vmul.f32 %v1522, %v500
        %v1539 = vadd.f32 %v1523, 1e-05
        %v1540 = vadd.f32 %v1524, 1e-05
        %v1541 = vadd.f32 %v1525, 1e-05
        %v1542 = vadd.f32 %v1526, 1e-05
        %v1543 = vadd.f32 %v1527, 1e-05
        %v1544 = vadd.f32 %v1528, 1e-05
        %v1545 = vadd.f32 %v1529, 1e-05
        %v1546 = vadd.f32 %v1530, 1e-05
        %v1547 = vadd.f32 %v1531, 1e-05
        %v1548 = vadd.f32 %v1532, 1e-05
        %v1549 = vadd.f32 %v1533, 1e-05
        %v1550 = vadd.f32 %v1534, 1e-05
        %v1551 = vadd.f32 %v1535, 1e-05
        %v1552 = vadd.f32 %v1536, 1e-05
        %v1553 = vadd.f32 %v1537, 1e-05
        %v1554 = vadd.f32 %v1538, 1e-05
        %v1555 = vrsqrt.pop %v1539
        %v1556 = vrsqrt.pop %v1540
        %v1557 = vrsqrt.pop %v1541
        %v1558 = vrsqrt.pop %v1542
        %v1559 = vrsqrt.pop %v1543
        %v1560 = vrsqrt.pop %v1544
        %v1561 = vrsqrt.pop %v1545
        %v1562 = vrsqrt.pop %v1546
        %v1563 = vrsqrt.pop %v1547
        %v1564 = vrsqrt.pop %v1548
        %v1565 = vrsqrt.pop %v1549
        %v1566 = vrsqrt.pop %v1550
        %v1567 = vrsqrt.pop %v1551
        %v1568 = vrsqrt.pop %v1552
        %v1569 = vrsqrt.pop %v1553
        %v1570 = vrsqrt.pop %v1554
        %v1571 = vmul.f32 %v1459, %v1555
        %v1572 = vmul.f32 %v1460, %v1556
        %v1573 = vmul.f32 %v1461, %v1557
        %v1574 = vmul.f32 %v1462, %v1558
        %v1575 = vmul.f32 %v1463, %v1559
        %v1576 = vmul.f32 %v1464, %v1560
        %v1577 = vmul.f32 %v1465, %v1561
        %v1578 = vmul.f32 %v1466, %v1562
        %v1579 = vmul.f32 %v1467, %v1563
        %v1580 = vmul.f32 %v1468, %v1564
        %v1581 = vmul.f32 %v1469, %v1565
        %v1582 = vmul.f32 %v1470, %v1566
        %v1583 = vmul.f32 %v1471, %v1567
        %v1584 = vmul.f32 %v1472, %v1568
        %v1585 = vmul.f32 %v1473, %v1569
        %v1586 = vmul.f32 %v1474, %v1570
        %v1587 = vlaneseq
        %v1588 = vshrl.u32 %v1587, 7
        %v1589 = vsub.s32 1, %v1588
        %v1590 = vrot.slane %v1261, %v1589
        %v1591 = vmul.f32 %v1571, %v1590
        %v1592 = vmul.f32 %v1572, %v1590
        %v1593 = vmul.f32 %v1573, %v1590
        %v1594 = vmul.f32 %v1574, %v1590
        %v1595 = vmul.f32 %v1575, %v1590
        %v1596 = vmul.f32 %v1576, %v1590
        %v1597 = vmul.f32 %v1577, %v1590
        %v1598 = vmul.f32 %v1578, %v1590
        %v1599 = vmul.f32 %v1579, %v1590
        %v1600 = vmul.f32 %v1580, %v1590
        %v1601 = vmul.f32 %v1581, %v1590
        %v1602 = vmul.f32 %v1582, %v1590
        %v1603 = vmul.f32 %v1583, %v1590
        %v1604 = vmul.f32 %v1584, %v1590
        %v1605 = vmul.f32 %v1585, %v1590
        %v1606 = vmul.f32 %v1586, %v1590
        %v1607 = vlaneseq
        %v1608 = vshrl.u32 %v1607, 7
        %v1609 = vsub.s32 2, %v1608
        %v1610 = vrot.slane %v1261, %v1609
        %v1611 = vadd.f32 %v1591, %v1610
        %v1612 = vadd.f32 %v1592, %v1610
        %v1613 = vadd.f32 %v1593, %v1610
        %v1614 = vadd.f32 %v1594, %v1610
        %v1615 = vadd.f32 %v1595, %v1610
        %v1616 = vadd.f32 %v1596, %v1610
        %v1617 = vadd.f32 %v1597, %v1610
        %v1618 = vadd.f32 %v1598, %v1610
        %v1619 = vadd.f32 %v1599, %v1610
        %v1620 = vadd.f32 %v1600, %v1610
        %v1621 = vadd.f32 %v1601, %v1610
        %v1622 = vadd.f32 %v1602, %v1610
        %v1623 = vadd.f32 %v1603, %v1610
        %v1624 = vadd.f32 %v1604, %v1610
        %v1625 = vadd.f32 %v1605, %v1610
        %v1626 = vadd.f32 %v1606, %v1610
        %v1627 = vsub.f32 0.0, %v1611
        %v1628 = vsub.f32 0.0, %v1612
        %v1629 = vsub.f32 0.0, %v1613
        %v1630 = vsub.f32 0.0, %v1614
        %v1631 = vsub.f32 0.0, %v1615
        %v1632 = vsub.f32 0.0, %v1616
        %v1633 = vsub.f32 0.0, %v1617
        %v1634 = vsub.f32 0.0, %v1618
        %v1635 = vsub.f32 0.0, %v1619
        %v1636 = vsub.f32 0.0, %v1620
        %v1637 = vsub.f32 0.0, %v1621
        %v1638 = vsub.f32 0.0, %v1622
        %v1639 = vsub.f32 0.0, %v1623
        %v1640 = vsub.f32 0.0, %v1624
        %v1641 = vsub.f32 0.0, %v1625
        %v1642 = vsub.f32 0.0, %v1626
        %v1643 = vmul.f32 %v1627, 1.442695
        %v1644 = vpow.pop %v1643
        %v1645 = vmul.f32 %v1628, 1.442695
        %v1646 = vpow.pop %v1645
        %v1647 = vmul.f32 %v1629, 1.442695
        %v1648 = vpow.pop %v1647
        %v1649 = vmul.f32 %v1630, 1.442695
        %v1650 = vpow.pop %v1649
        %v1651 = vmul.f32 %v1631, 1.442695
        %v1652 = vpow.pop %v1651
        %v1653 = vmul.f32 %v1632, 1.442695
        %v1654 = vpow.pop %v1653
        %v1655 = vmul.f32 %v1633, 1.442695
        %v1656 = vpow.pop %v1655
        %v1657 = vmul.f32 %v1634, 1.442695
        %v1658 = vpow.pop %v1657
        %v1659 = vmul.f32 %v1635, 1.442695
        %v1660 = vpow.pop %v1659
        %v1661 = vmul.f32 %v1636, 1.442695
        %v1662 = vpow.pop %v1661
        %v1663 = vmul.f32 %v1637, 1.442695
        %v1664 = vpow.pop %v1663
        %v1665 = vmul.f32 %v1638, 1.442695
        %v1666 = vpow.pop %v1665
        %v1667 = vmul.f32 %v1639, 1.442695
        %v1668 = vpow.pop %v1667
        %v1669 = vmul.f32 %v1640, 1.442695
        %v1670 = vpow.pop %v1669
        %v1671 = vmul.f32 %v1641, 1.442695
        %v1672 = vpow.pop %v1671
        %v1673 = vmul.f32 %v1642, 1.442695
        %v1674 = vpow.pop %v1673
        %v1675 = vadd.f32 %v1644, 1.0
        %v1676 = vadd.f32 %v1646, 1.0
        %v1677 = vadd.f32 %v1648, 1.0
        %v1678 = vadd.f32 %v1650, 1.0
        %v1679 = vadd.f32 %v1652, 1.0
        %v1680 = vadd.f32 %v1654, 1.0
        %v1681 = vadd.f32 %v1656, 1.0
        %v1682 = vadd.f32 %v1658, 1.0
        %v1683 = vadd.f32 %v1660, 1.0
        %v1684 = vadd.f32 %v1662, 1.0
        %v1685 = vadd.f32 %v1664, 1.0
        %v1686 = vadd.f32 %v1666, 1.0
        %v1687 = vadd.f32 %v1668, 1.0
        %v1688 = vadd.f32 %v1670, 1.0
        %v1689 = vadd.f32 %v1672, 1.0
        %v1690 = vadd.f32 %v1674, 1.0
        %v1691 = vrcp.pop %v1675
        %v1692 = vrcp.pop %v1676
        %v1693 = vrcp.pop %v1677
        %v1694 = vrcp.pop %v1678
        %v1695 = vrcp.pop %v1679
        %v1696 = vrcp.pop %v1680
        %v1697 = vrcp.pop %v1681
        %v1698 = vrcp.pop %v1682
        %v1699 = vrcp.pop %v1683
        %v1700 = vrcp.pop %v1684
        %v1701 = vrcp.pop %v1685
        %v1702 = vrcp.pop %v1686
        %v1703 = vrcp.pop %v1687
        %v1704 = vrcp.pop %v1688
        %v1705 = vrcp.pop %v1689
        %v1706 = vrcp.pop %v1690
        %v1707 = vpack.c.bf16 %v1692, %v1691
        %v1708 = vpack.c.bf16 %v1694, %v1693
        %v1709 = vpack.c.bf16 %v1696, %v1695
        %v1710 = vpack.c.bf16 %v1698, %v1697
        %v1711 = vpack.c.bf16 %v1700, %v1699
        %v1712 = vpack.c.bf16 %v1702, %v1701
        %v1713 = vpack.c.bf16 %v1704, %v1703
        %v1714 = vpack.c.bf16 %v1706, %v1705
        %v1715 = vld [vmem:[%s5] sm:$0xf]
        %v1716 = vld [vmem:[%s5 + $0x4] sm:$0xf]
        %v1717 = vld [vmem:[%s5 + $0x8] sm:$0xf]
        %v1718 = vld [vmem:[%s5 + $0xc] sm:$0xf]
        %v1719 = vld [vmem:[%s5 + $0x10] sm:$0xf]
        %v1720 = vld [vmem:[%s5 + $0x14] sm:$0xf]
        %v1721 = vld [vmem:[%s5 + $0x18] sm:$0xf]
        %v1722 = vld [vmem:[%s5 + $0x1c] sm:$0xf]
        %v1723 = vld [vmem:[%s5 + $0x20] sm:$0xf]
        %v1724 = vld [vmem:[%s5 + $0x24] sm:$0xf]
        %v1725 = vld [vmem:[%s5 + $0x28] sm:$0xf]
        %v1726 = vld [vmem:[%s5 + $0x2c] sm:$0xf]
        %v1727 = vld [vmem:[%s5 + $0x30] sm:$0xf]
        %v1728 = vld [vmem:[%s5 + $0x34] sm:$0xf]
        %v1729 = vld [vmem:[%s5 + $0x38] sm:$0xf]
        %v1730 = vld [vmem:[%s5 + $0x3c] sm:$0xf]
        %s1731 = scalar_lea.vmem %s1, 12
        %v1732 = vld [vmem:[%s1731] sm:$0x7]
        %v1733 = vlaneseq
        %v1734 = vshrl.u32 %v1733, 7
        %v1735 = vsub.s32 0, %v1734
        %v1736 = vrot.slane %v1732, %v1735
        %v1753 = vunpack.c.l.b16 %v1715
        %v1754 = vunpack.c.l.b16 %v1716
        %v1755 = vunpack.c.l.b16 %v1717
        %v1756 = vunpack.c.l.b16 %v1718
        %v1757 = vunpack.c.l.b16 %v1719
        %v1758 = vunpack.c.l.b16 %v1720
        %v1759 = vunpack.c.l.b16 %v1721
        %v1760 = vunpack.c.l.b16 %v1722
        %v1761 = vunpack.c.l.b16 %v1723
        %v1762 = vunpack.c.l.b16 %v1724
        %v1763 = vunpack.c.l.b16 %v1725
        %v1764 = vunpack.c.l.b16 %v1726
        %v1765 = vunpack.c.l.b16 %v1727
        %v1766 = vunpack.c.l.b16 %v1728
        %v1767 = vunpack.c.l.b16 %v1729
        %v1768 = vunpack.c.l.b16 %v1730
        %v1769 = vpack.c.b16 %v1754, %v1753
        %v1770 = vpack.c.b16 %v1756, %v1755
        %v1771 = vpack.c.b16 %v1758, %v1757
        %v1772 = vpack.c.b16 %v1760, %v1759
        %v1773 = vpack.c.b16 %v1762, %v1761
        %v1774 = vpack.c.b16 %v1764, %v1763
        %v1775 = vpack.c.b16 %v1766, %v1765
        %v1776 = vpack.c.b16 %v1768, %v1767
        %1785 = vmatprep.subr.bf16.mxu0 0
        %1786 = vmatpush1.bf16.msra.mxu0 %v1776
        %1787 = vmatprep.subr.bf16.mxu0 0
        %1788 = vmatpush1.bf16.msra.mxu0 %v1775
        %1789 = vmatprep.subr.bf16.mxu0 0
        %1790 = vmatpush1.bf16.msra.mxu0 %v1774
        %1791 = vmatprep.subr.bf16.mxu0 0
        %1792 = vmatpush1.bf16.msra.mxu0 %v1773
        %1793 = vmatprep.subr.bf16.mxu0 0
        %1794 = vmatpush1.bf16.msra.mxu0 %v1772
        %1795 = vmatprep.subr.bf16.mxu0 0
        %1796 = vmatpush1.bf16.msra.mxu0 %v1771
        %1797 = vmatprep.subr.bf16.mxu0 0
        %1798 = vmatpush1.bf16.msra.mxu0 %v1770
        %1799 = vmatprep.subr.bf16.mxu0 0
        %1800 = vmatpush1.bf16.msra.mxu0 %v1769
        %1801 = vmatprep.subr.bf16.mxu0 0
        %1802 = vmatpush2.bf16.msra.mxu0 0
        %1803 = vmatprep.subr.bf16.mxu0 0
        %1804 = vmatpush2.bf16.msra.mxu0 0
        %1805 = vmatprep.subr.bf16.mxu0 0
        %1806 = vmatpush2.bf16.msra.mxu0 0
        %1807 = vmatprep.subr.bf16.mxu0 0
        %1808 = vmatpush2.bf16.msra.mxu0 0
        %1809 = vmatprep.subr.bf16.mxu0 0
        %1810 = vmatpush2.bf16.msra.mxu0 0
        %1811 = vmatprep.subr.bf16.mxu0 0
        %1812 = vmatpush2.bf16.msra.mxu0 0
        %1813 = vmatprep.subr.bf16.mxu0 0
        %1814 = vmatpush2.bf16.msra.mxu0 0
        %1815 = vmatprep.subr.bf16.mxu0 0
        %1816 = vmatpush2.bf16.msra.mxu0 0
        %1817 = vmatprep.mubr.bf16.mxu0 0
        %1818 = vmatmul.mubr.bf16.gmra.mxu0 %v1707
        %v1819 = vpop.f32.mrf.mxu0
        %v1820 = vadd.f32 %v1736, %v1819
        %v1821 = vpop.f32.mrf.mxu0
        %v1822 = vpop.f32.mrf.mxu0
        %v1823 = vadd.f32 %v1736, %v1822
        %v1824 = vpop.f32.mrf.mxu0
        %1825 = vmatprep.mubr.bf16.mxu0 0
        %1826 = vmatmul.mubr.bf16.gmra.mxu0 %v1708
        %v1827 = vpop.f32.mrf.mxu0
        %v1828 = vadd.f32 %v1736, %v1827
        %v1829 = vpop.f32.mrf.mxu0
        %v1830 = vpop.f32.mrf.mxu0
        %v1831 = vadd.f32 %v1736, %v1830
        %v1832 = vpop.f32.mrf.mxu0
        %1833 = vmatprep.mubr.bf16.mxu0 0
        %1834 = vmatmul.mubr.bf16.gmra.mxu0 %v1709
        %v1835 = vpop.f32.mrf.mxu0
        %v1836 = vadd.f32 %v1736, %v1835
        %v1837 = vpop.f32.mrf.mxu0
        %v1838 = vpop.f32.mrf.mxu0
        %v1839 = vadd.f32 %v1736, %v1838
        %v1840 = vpop.f32.mrf.mxu0
        %1841 = vmatprep.mubr.bf16.mxu0 0
        %1842 = vmatmul.mubr.bf16.gmra.mxu0 %v1710
        %v1843 = vpop.f32.mrf.mxu0
        %v1844 = vadd.f32 %v1736, %v1843
        %v1845 = vpop.f32.mrf.mxu0
        %v1846 = vpop.f32.mrf.mxu0
        %v1847 = vadd.f32 %v1736, %v1846
        %v1848 = vpop.f32.mrf.mxu0
        %1849 = vmatprep.mubr.bf16.mxu0 0
        %1850 = vmatmul.mubr.bf16.gmra.mxu0 %v1711
        %v1851 = vpop.f32.mrf.mxu0
        %v1852 = vadd.f32 %v1736, %v1851
        %v1853 = vpop.f32.mrf.mxu0
        %v1854 = vpop.f32.mrf.mxu0
        %v1855 = vadd.f32 %v1736, %v1854
        %v1856 = vpop.f32.mrf.mxu0
        %1857 = vmatprep.mubr.bf16.mxu0 0
        %1858 = vmatmul.mubr.bf16.gmra.mxu0 %v1712
        %v1859 = vpop.f32.mrf.mxu0
        %v1860 = vadd.f32 %v1736, %v1859
        %v1861 = vpop.f32.mrf.mxu0
        %v1862 = vpop.f32.mrf.mxu0
        %v1863 = vadd.f32 %v1736, %v1862
        %v1864 = vpop.f32.mrf.mxu0
        %1865 = vmatprep.mubr.bf16.mxu0 0
        %1866 = vmatmul.mubr.bf16.gmra.mxu0 %v1713
        %v1867 = vpop.f32.mrf.mxu0
        %v1868 = vadd.f32 %v1736, %v1867
        %v1869 = vpop.f32.mrf.mxu0
        %v1870 = vpop.f32.mrf.mxu0
        %v1871 = vadd.f32 %v1736, %v1870
        %v1872 = vpop.f32.mrf.mxu0
        %1873 = vmatprep.mubr.bf16.mxu0 0
        %1874 = vmatmul.mubr.bf16.gmra.mxu0 %v1714
        %v1875 = vpop.f32.mrf.mxu0
        %v1876 = vadd.f32 %v1736, %v1875
        %v1877 = vpop.f32.mrf.mxu0
        %v1878 = vpop.f32.mrf.mxu0
        %v1879 = vadd.f32 %v1736, %v1878
        %v1880 = vpop.f32.mrf.mxu0
        %1881 = vdwg.mxu0
        %1882 = vadd.xlane.f32.xlu0 %v1820
        %v1883 = vpop.xlane.xlu0 %1882
        %1884 = vadd.xlane.f32.xlu0 %v1823
        %v1885 = vpop.xlane.xlu0 %1884
        %1886 = vadd.xlane.f32.xlu0 %v1828
        %v1887 = vpop.xlane.xlu0 %1886
        %1888 = vadd.xlane.f32.xlu0 %v1831
        %v1889 = vpop.xlane.xlu0 %1888
        %1890 = vadd.xlane.f32.xlu0 %v1836
        %v1891 = vpop.xlane.xlu0 %1890
        %1892 = vadd.xlane.f32.xlu0 %v1839
        %v1893 = vpop.xlane.xlu0 %1892
        %1894 = vadd.xlane.f32.xlu0 %v1844
        %v1895 = vpop.xlane.xlu0 %1894
        %1896 = vadd.xlane.f32.xlu0 %v1847
        %v1897 = vpop.xlane.xlu0 %1896
        %1898 = vadd.xlane.f32.xlu0 %v1852
        %v1899 = vpop.xlane.xlu0 %1898
        %1900 = vadd.xlane.f32.xlu0 %v1855
        %v1901 = vpop.xlane.xlu0 %1900
        %1902 = vadd.xlane.f32.xlu0 %v1860
        %v1903 = vpop.xlane.xlu0 %1902
        %1904 = vadd.xlane.f32.xlu0 %v1863
        %v1905 = vpop.xlane.xlu0 %1904
        %1906 = vadd.xlane.f32.xlu0 %v1868
        %v1907 = vpop.xlane.xlu0 %1906
        %1908 = vadd.xlane.f32.xlu0 %v1871
        %v1909 = vpop.xlane.xlu0 %1908
        %1910 = vadd.xlane.f32.xlu0 %v1876
        %v1911 = vpop.xlane.xlu0 %1910
        %1912 = vadd.xlane.f32.xlu0 %v1879
        %v1913 = vpop.xlane.xlu0 %1912
        %v1914 = vrcp.pop 64.0
        %v1915 = vmul.f32 %v1883, %v1914
        %v1916 = vmul.f32 %v1885, %v1914
        %v1917 = vmul.f32 %v1887, %v1914
        %v1918 = vmul.f32 %v1889, %v1914
        %v1919 = vmul.f32 %v1891, %v1914
        %v1920 = vmul.f32 %v1893, %v1914
        %v1921 = vmul.f32 %v1895, %v1914
        %v1922 = vmul.f32 %v1897, %v1914
        %v1923 = vmul.f32 %v1899, %v1914
        %v1924 = vmul.f32 %v1901, %v1914
        %v1925 = vmul.f32 %v1903, %v1914
        %v1926 = vmul.f32 %v1905, %v1914
        %v1927 = vmul.f32 %v1907, %v1914
        %v1928 = vmul.f32 %v1909, %v1914
        %v1929 = vmul.f32 %v1911, %v1914
        %v1930 = vmul.f32 %v1913, %v1914
        %v1931 = vmul.f32 %v1820, %v1820
        %v1932 = vmul.f32 %v1823, %v1823
        %v1933 = vmul.f32 %v1828, %v1828
        %v1934 = vmul.f32 %v1831, %v1831
        %v1935 = vmul.f32 %v1836, %v1836
        %v1936 = vmul.f32 %v1839, %v1839
        %v1937 = vmul.f32 %v1844, %v1844
        %v1938 = vmul.f32 %v1847, %v1847
        %v1939 = vmul.f32 %v1852, %v1852
        %v1940 = vmul.f32 %v1855, %v1855
        %v1941 = vmul.f32 %v1860, %v1860
        %v1942 = vmul.f32 %v1863, %v1863
        %v1943 = vmul.f32 %v1868, %v1868
        %v1944 = vmul.f32 %v1871, %v1871
        %v1945 = vmul.f32 %v1876, %v1876
        %v1946 = vmul.f32 %v1879, %v1879
        %1947 = vadd.xlane.f32.xlu0 %v1931
        %v1948 = vpop.xlane.xlu0 %1947
        %1949 = vadd.xlane.f32.xlu0 %v1932
        %v1950 = vpop.xlane.xlu0 %1949
        %1951 = vadd.xlane.f32.xlu0 %v1933
        %v1952 = vpop.xlane.xlu0 %1951
        %1953 = vadd.xlane.f32.xlu0 %v1934
        %v1954 = vpop.xlane.xlu0 %1953
        %1955 = vadd.xlane.f32.xlu0 %v1935
        %v1956 = vpop.xlane.xlu0 %1955
        %1957 = vadd.xlane.f32.xlu0 %v1936
        %v1958 = vpop.xlane.xlu0 %1957
        %1959 = vadd.xlane.f32.xlu0 %v1937
        %v1960 = vpop.xlane.xlu0 %1959
        %1961 = vadd.xlane.f32.xlu0 %v1938
        %v1962 = vpop.xlane.xlu0 %1961
        %1963 = vadd.xlane.f32.xlu0 %v1939
        %v1964 = vpop.xlane.xlu0 %1963
        %1965 = vadd.xlane.f32.xlu0 %v1940
        %v1966 = vpop.xlane.xlu0 %1965
        %1967 = vadd.xlane.f32.xlu0 %v1941
        %v1968 = vpop.xlane.xlu0 %1967
        %1969 = vadd.xlane.f32.xlu0 %v1942
        %v1970 = vpop.xlane.xlu0 %1969
        %1971 = vadd.xlane.f32.xlu0 %v1943
        %v1972 = vpop.xlane.xlu0 %1971
        %1973 = vadd.xlane.f32.xlu0 %v1944
        %v1974 = vpop.xlane.xlu0 %1973
        %1975 = vadd.xlane.f32.xlu0 %v1945
        %v1976 = vpop.xlane.xlu0 %1975
        %1977 = vadd.xlane.f32.xlu0 %v1946
        %v1978 = vpop.xlane.xlu0 %1977
        %v1979 = vmul.f32 %v1948, %v1914
        %v1980 = vmul.f32 %v1950, %v1914
        %v1981 = vmul.f32 %v1952, %v1914
        %v1982 = vmul.f32 %v1954, %v1914
        %v1983 = vmul.f32 %v1956, %v1914
        %v1984 = vmul.f32 %v1958, %v1914
        %v1985 = vmul.f32 %v1960, %v1914
        %v1986 = vmul.f32 %v1962, %v1914
        %v1987 = vmul.f32 %v1964, %v1914
        %v1988 = vmul.f32 %v1966, %v1914
        %v1989 = vmul.f32 %v1968, %v1914
        %v1990 = vmul.f32 %v1970, %v1914
        %v1991 = vmul.f32 %v1972, %v1914
        %v1992 = vmul.f32 %v1974, %v1914
        %v1993 = vmul.f32 %v1976, %v1914
        %v1994 = vmul.f32 %v1978, %v1914
        %v1995 = vmul.f32 %v1915, %v1915
        %v1996 = vmul.f32 %v1916, %v1916
        %v1997 = vmul.f32 %v1917, %v1917
        %v1998 = vmul.f32 %v1918, %v1918
        %v1999 = vmul.f32 %v1919, %v1919
        %v2000 = vmul.f32 %v1920, %v1920
        %v2001 = vmul.f32 %v1921, %v1921
        %v2002 = vmul.f32 %v1922, %v1922
        %v2003 = vmul.f32 %v1923, %v1923
        %v2004 = vmul.f32 %v1924, %v1924
        %v2005 = vmul.f32 %v1925, %v1925
        %v2006 = vmul.f32 %v1926, %v1926
        %v2007 = vmul.f32 %v1927, %v1927
        %v2008 = vmul.f32 %v1928, %v1928
        %v2009 = vmul.f32 %v1929, %v1929
        %v2010 = vmul.f32 %v1930, %v1930
        %v2011 = vsub.f32 %v1979, %v1995
        %v2012 = vsub.f32 %v1980, %v1996
        %v2013 = vsub.f32 %v1981, %v1997
        %v2014 = vsub.f32 %v1982, %v1998
        %v2015 = vsub.f32 %v1983, %v1999
        %v2016 = vsub.f32 %v1984, %v2000
        %v2017 = vsub.f32 %v1985, %v2001
        %v2018 = vsub.f32 %v1986, %v2002
        %v2019 = vsub.f32 %v1987, %v2003
        %v2020 = vsub.f32 %v1988, %v2004
        %v2021 = vsub.f32 %v1989, %v2005
        %v2022 = vsub.f32 %v1990, %v2006
        %v2023 = vsub.f32 %v1991, %v2007
        %v2024 = vsub.f32 %v1992, %v2008
        %v2025 = vsub.f32 %v1993, %v2009
        %v2026 = vsub.f32 %v1994, %v2010
        %v2027 = vsub.f32 %v1820, %v1915
        %v2028 = vsub.f32 %v1823, %v1916
        %v2029 = vsub.f32 %v1828, %v1917
        %v2030 = vsub.f32 %v1831, %v1918
        %v2031 = vsub.f32 %v1836, %v1919
        %v2032 = vsub.f32 %v1839, %v1920
        %v2033 = vsub.f32 %v1844, %v1921
        %v2034 = vsub.f32 %v1847, %v1922
        %v2035 = vsub.f32 %v1852, %v1923
        %v2036 = vsub.f32 %v1855, %v1924
        %v2037 = vsub.f32 %v1860, %v1925
        %v2038 = vsub.f32 %v1863, %v1926
        %v2039 = vsub.f32 %v1868, %v1927
        %v2040 = vsub.f32 %v1871, %v1928
        %v2041 = vsub.f32 %v1876, %v1929
        %v2042 = vsub.f32 %v1879, %v1930
        %v2043 = vadd.f32 %v2011, 1e-05
        %v2044 = vadd.f32 %v2012, 1e-05
        %v2045 = vadd.f32 %v2013, 1e-05
        %v2046 = vadd.f32 %v2014, 1e-05
        %v2047 = vadd.f32 %v2015, 1e-05
        %v2048 = vadd.f32 %v2016, 1e-05
        %v2049 = vadd.f32 %v2017, 1e-05
        %v2050 = vadd.f32 %v2018, 1e-05
        %v2051 = vadd.f32 %v2019, 1e-05
        %v2052 = vadd.f32 %v2020, 1e-05
        %v2053 = vadd.f32 %v2021, 1e-05
        %v2054 = vadd.f32 %v2022, 1e-05
        %v2055 = vadd.f32 %v2023, 1e-05
        %v2056 = vadd.f32 %v2024, 1e-05
        %v2057 = vadd.f32 %v2025, 1e-05
        %v2058 = vadd.f32 %v2026, 1e-05
        %v2059 = vrsqrt.pop %v2043
        %v2060 = vrsqrt.pop %v2044
        %v2061 = vrsqrt.pop %v2045
        %v2062 = vrsqrt.pop %v2046
        %v2063 = vrsqrt.pop %v2047
        %v2064 = vrsqrt.pop %v2048
        %v2065 = vrsqrt.pop %v2049
        %v2066 = vrsqrt.pop %v2050
        %v2067 = vrsqrt.pop %v2051
        %v2068 = vrsqrt.pop %v2052
        %v2069 = vrsqrt.pop %v2053
        %v2070 = vrsqrt.pop %v2054
        %v2071 = vrsqrt.pop %v2055
        %v2072 = vrsqrt.pop %v2056
        %v2073 = vrsqrt.pop %v2057
        %v2074 = vrsqrt.pop %v2058
        %v2075 = vmul.f32 %v2027, %v2059
        %v2076 = vmul.f32 %v2028, %v2060
        %v2077 = vmul.f32 %v2029, %v2061
        %v2078 = vmul.f32 %v2030, %v2062
        %v2079 = vmul.f32 %v2031, %v2063
        %v2080 = vmul.f32 %v2032, %v2064
        %v2081 = vmul.f32 %v2033, %v2065
        %v2082 = vmul.f32 %v2034, %v2066
        %v2083 = vmul.f32 %v2035, %v2067
        %v2084 = vmul.f32 %v2036, %v2068
        %v2085 = vmul.f32 %v2037, %v2069
        %v2086 = vmul.f32 %v2038, %v2070
        %v2087 = vmul.f32 %v2039, %v2071
        %v2088 = vmul.f32 %v2040, %v2072
        %v2089 = vmul.f32 %v2041, %v2073
        %v2090 = vmul.f32 %v2042, %v2074
        %v2091 = vlaneseq
        %v2092 = vshrl.u32 %v2091, 7
        %v2093 = vsub.s32 1, %v2092
        %v2094 = vrot.slane %v1732, %v2093
        %v2095 = vmul.f32 %v2075, %v2094
        %v2096 = vmul.f32 %v2076, %v2094
        %v2097 = vmul.f32 %v2077, %v2094
        %v2098 = vmul.f32 %v2078, %v2094
        %v2099 = vmul.f32 %v2079, %v2094
        %v2100 = vmul.f32 %v2080, %v2094
        %v2101 = vmul.f32 %v2081, %v2094
        %v2102 = vmul.f32 %v2082, %v2094
        %v2103 = vmul.f32 %v2083, %v2094
        %v2104 = vmul.f32 %v2084, %v2094
        %v2105 = vmul.f32 %v2085, %v2094
        %v2106 = vmul.f32 %v2086, %v2094
        %v2107 = vmul.f32 %v2087, %v2094
        %v2108 = vmul.f32 %v2088, %v2094
        %v2109 = vmul.f32 %v2089, %v2094
        %v2110 = vmul.f32 %v2090, %v2094
        %v2111 = vlaneseq
        %v2112 = vshrl.u32 %v2111, 7
        %v2113 = vsub.s32 2, %v2112
        %v2114 = vrot.slane %v1732, %v2113
        %v2115 = vadd.f32 %v2095, %v2114
        %v2116 = vadd.f32 %v2096, %v2114
        %v2117 = vadd.f32 %v2097, %v2114
        %v2118 = vadd.f32 %v2098, %v2114
        %v2119 = vadd.f32 %v2099, %v2114
        %v2120 = vadd.f32 %v2100, %v2114
        %v2121 = vadd.f32 %v2101, %v2114
        %v2122 = vadd.f32 %v2102, %v2114
        %v2123 = vadd.f32 %v2103, %v2114
        %v2124 = vadd.f32 %v2104, %v2114
        %v2125 = vadd.f32 %v2105, %v2114
        %v2126 = vadd.f32 %v2106, %v2114
        %v2127 = vadd.f32 %v2107, %v2114
        %v2128 = vadd.f32 %v2108, %v2114
        %v2129 = vadd.f32 %v2109, %v2114
        %v2130 = vadd.f32 %v2110, %v2114
        %v2131 = vsub.f32 0.0, %v2115
        %v2132 = vsub.f32 0.0, %v2116
        %v2133 = vsub.f32 0.0, %v2117
        %v2134 = vsub.f32 0.0, %v2118
        %v2135 = vsub.f32 0.0, %v2119
        %v2136 = vsub.f32 0.0, %v2120
        %v2137 = vsub.f32 0.0, %v2121
        %v2138 = vsub.f32 0.0, %v2122
        %v2139 = vsub.f32 0.0, %v2123
        %v2140 = vsub.f32 0.0, %v2124
        %v2141 = vsub.f32 0.0, %v2125
        %v2142 = vsub.f32 0.0, %v2126
        %v2143 = vsub.f32 0.0, %v2127
        %v2144 = vsub.f32 0.0, %v2128
        %v2145 = vsub.f32 0.0, %v2129
        %v2146 = vsub.f32 0.0, %v2130
        %v2147 = vmul.f32 %v2131, 1.442695
        %v2148 = vpow.pop %v2147
        %v2149 = vmul.f32 %v2132, 1.442695
        %v2150 = vpow.pop %v2149
        %v2151 = vmul.f32 %v2133, 1.442695
        %v2152 = vpow.pop %v2151
        %v2153 = vmul.f32 %v2134, 1.442695
        %v2154 = vpow.pop %v2153
        %v2155 = vmul.f32 %v2135, 1.442695
        %v2156 = vpow.pop %v2155
        %v2157 = vmul.f32 %v2136, 1.442695
        %v2158 = vpow.pop %v2157
        %v2159 = vmul.f32 %v2137, 1.442695
        %v2160 = vpow.pop %v2159
        %v2161 = vmul.f32 %v2138, 1.442695
        %v2162 = vpow.pop %v2161
        %v2163 = vmul.f32 %v2139, 1.442695
        %v2164 = vpow.pop %v2163
        %v2165 = vmul.f32 %v2140, 1.442695
        %v2166 = vpow.pop %v2165
        %v2167 = vmul.f32 %v2141, 1.442695
        %v2168 = vpow.pop %v2167
        %v2169 = vmul.f32 %v2142, 1.442695
        %v2170 = vpow.pop %v2169
        %v2171 = vmul.f32 %v2143, 1.442695
        %v2172 = vpow.pop %v2171
        %v2173 = vmul.f32 %v2144, 1.442695
        %v2174 = vpow.pop %v2173
        %v2175 = vmul.f32 %v2145, 1.442695
        %v2176 = vpow.pop %v2175
        %v2177 = vmul.f32 %v2146, 1.442695
        %v2178 = vpow.pop %v2177
        %v2179 = vadd.f32 %v2148, 1.0
        %v2180 = vadd.f32 %v2150, 1.0
        %v2181 = vadd.f32 %v2152, 1.0
        %v2182 = vadd.f32 %v2154, 1.0
        %v2183 = vadd.f32 %v2156, 1.0
        %v2184 = vadd.f32 %v2158, 1.0
        %v2185 = vadd.f32 %v2160, 1.0
        %v2186 = vadd.f32 %v2162, 1.0
        %v2187 = vadd.f32 %v2164, 1.0
        %v2188 = vadd.f32 %v2166, 1.0
        %v2189 = vadd.f32 %v2168, 1.0
        %v2190 = vadd.f32 %v2170, 1.0
        %v2191 = vadd.f32 %v2172, 1.0
        %v2192 = vadd.f32 %v2174, 1.0
        %v2193 = vadd.f32 %v2176, 1.0
        %v2194 = vadd.f32 %v2178, 1.0
        %v2195 = vrcp.pop %v2179
        %v2196 = vrcp.pop %v2180
        %v2197 = vrcp.pop %v2181
        %v2198 = vrcp.pop %v2182
        %v2199 = vrcp.pop %v2183
        %v2200 = vrcp.pop %v2184
        %v2201 = vrcp.pop %v2185
        %v2202 = vrcp.pop %v2186
        %v2203 = vrcp.pop %v2187
        %v2204 = vrcp.pop %v2188
        %v2205 = vrcp.pop %v2189
        %v2206 = vrcp.pop %v2190
        %v2207 = vrcp.pop %v2191
        %v2208 = vrcp.pop %v2192
        %v2209 = vrcp.pop %v2193
        %v2210 = vrcp.pop %v2194
        %2211 = vst [vmem:[%s260] sm:$0xff] %v2195
        %2212 = vst [vmem:[%s260 + $0x8] sm:$0xff] %v2196
        %2213 = vst [vmem:[%s260 + $0x10] sm:$0xff] %v2197
        %2214 = vst [vmem:[%s260 + $0x18] sm:$0xff] %v2198
        %2215 = vst [vmem:[%s260 + $0x20] sm:$0xff] %v2199
        %2216 = vst [vmem:[%s260 + $0x28] sm:$0xff] %v2200
        %2217 = vst [vmem:[%s260 + $0x30] sm:$0xff] %v2201
        %2218 = vst [vmem:[%s260 + $0x38] sm:$0xff] %v2202
        %2219 = vst [vmem:[%s260 + $0x40] sm:$0xff] %v2203
        %2220 = vst [vmem:[%s260 + $0x48] sm:$0xff] %v2204
        %2221 = vst [vmem:[%s260 + $0x50] sm:$0xff] %v2205
        %2222 = vst [vmem:[%s260 + $0x58] sm:$0xff] %v2206
        %2223 = vst [vmem:[%s260 + $0x60] sm:$0xff] %v2207
        %2224 = vst [vmem:[%s260 + $0x68] sm:$0xff] %v2208
        %2225 = vst [vmem:[%s260 + $0x70] sm:$0xff] %v2209
        %2226 = vst [vmem:[%s260 + $0x78] sm:$0xff] %v2210
        %s2227 = sand.u32 %s160, 1
        %s2228 = scalar_lea.sflag [#allocation4], %s2227
        %s2229 = sand.u32 %s160, 1
        %s2230 = smul.addr %s2229, 128
        %s2231 = scalar_lea.vmem [#allocation5], %s2230
        // Predicated region
        $region49: #{tpu_custom_call.1} parent=43 // pred_check
          %p2232 = pneg %p170
        $region50: #{tpu_custom_call.1} parent=43 // pred_check_branch
          %2234 = sbr.rel (%p2232) target = $region52
        $region51: #{tpu_custom_call.1} parent=43 // pred_region
          %s2235 = smul.u32 16, %s21
          %s2237 = ssub.s32 2048, 2048
          %2238 = vsyncadd %s2228, %s2237
          %s2239 = smul.addr %s2235, 128
          %s2240 = scalar_lea.hbm %s6, %s2239
          %s2241 = sshll.u32 %s2231, 4
          %s2242 = int_to_ptr.vmem [resolvable:$true] %s2241
          %2247 = dma.vmem_to_hbm [thread:$0]  %s2242, 2048, %s2240, %s2228, 128, 128, 8
        $region52: #{tpu_custom_call.1} parent=43 // pred_fallthru
          _
      $region44: #{tpu_custom_call.1} parent=5 // pred_fallthru
        _
      %p2248 = scmp.le.s32.totalorder 2, %s16
      // Predicated region
      $region53: #{tpu_custom_call.1} parent=5 // pred_check
        %p2249 = pneg %p2248
      $region54: #{tpu_custom_call.1} parent=5 // pred_check_branch
        %2251 = sbr.rel (%p2249) target = $region56
      $region55: #{tpu_custom_call.1} parent=5 // pred_region
        %s2252 = ssub.s32 %s16, 2
        // Predicated region
        $region57: #{tpu_custom_call.1} parent=55 // pred_check
          %p2253 = pneg %p176
        $region58: #{tpu_custom_call.1} parent=55 // pred_check_branch
          %2255 = sbr.rel (%p2253) target = $region60
        $region59: #{tpu_custom_call.1} parent=55 // pred_region
          %s2256 = sand.u32 %s161, 1
          %s2257 = scalar_lea.sflag [#allocation4], %s2256
          %s2258 = sand.u32 %s161, 1
          %s2259 = smul.addr %s2258, 128
          %s2260 = scalar_lea.vmem [#allocation5], %s2259
          %2261 = dma.done %s2257, 2048
        $region60: #{tpu_custom_call.1} parent=55 // pred_fallthru
          _
      $region56: #{tpu_custom_call.1} parent=5 // pred_fallthru
        _
    $region6: #{tpu_custom_call.1} parent=1 // loop_footer
      %s20 = sadd.s32 1, %s16
    $region7: #{tpu_custom_call.1} parent=1 // loop_footer_branch
      %15 = sbr.rel target = $region3
    $region8: #{tpu_custom_call.1} parent=1 // loop_exit
      _
    %2262 = vsyncpa [#allocation3], 1
    %s2263 = scalar_lea.sflag [#allocation3], 1
    %2264 = vsyncpa %s2263, 1
    %2265 = vsyncpa [#allocation4], 1
    %s2266 = scalar_lea.sflag [#allocation4], 1
    %2267 = vsyncpa %s2266, 1

// kernel: tpu_custom_call.1
$region0: #{tpu_custom_call.1}
  #allocation0 [shape = 'u32[]', space=smem, size = 0x4, offset = 0x4, fixed_abs, tag = 'smem constant byte address 0x4 - core index']
  #allocation1 [shape = 'u32[144,128]{1,0:T(1,128)}', space=vmem, size = 0x12000, scoped, tag = 'internal scratch']
  %s0 = inlined_call_operand.vmem [shape: bf16[256,32], index: 0, kind: input, shape index: {}]
  %s1 = inlined_call_operand.vmem [shape: f32[4,3,128], index: 1, kind: input, shape index: {}]
  %s2 = inlined_call_operand.hbm [shape: bf16[32,128], index: 2, kind: input, shape index: {}]
  %s3 = inlined_call_operand.vmem [shape: bf16[128,128], index: 3, kind: input, shape index: {}]
  %s4 = inlined_call_operand.vmem [shape: bf16[128,128], index: 4, kind: input, shape index: {}]
  %s5 = inlined_call_operand.vmem [shape: bf16[128,128], index: 5, kind: input, shape index: {}]
  %s6 = inlined_call_operand.hbm [shape: f32[256,128], index: 6, kind: output, shape index: {}]
  %s7 = sld [smem:[#allocation0]]
  $region61: #{tpu_custom_call.1} parent=0
    _
  %s9 = ssub.s32 1, %s7
  %s10 = scalar_select 0, %s9, %s7
  $region1: #{tpu_custom_call.1} parent=0
    #allocation2 [shape = 'u8[8192]{0}', space=vmem, size = 0x2000, scoped, tag = 'input window, operand 2, single buffered']
    #allocation3 [shape = 's32[2]{0}', space=sflag, size = 0x8, scoped, tag = 'scoped memory for tpu_custom_call.1']
    #allocation4 [shape = 's32[2]{0}', space=sflag, size = 0x8, scoped, tag = 'scoped memory for tpu_custom_call.1']
    #allocation5 [shape = 'u8[131072]{0}', space=vmem, size = 0x20000, scoped, tag = 'output window, operand 0']
    %11 = vsyncpa [#allocation3], 0
    %12 = vsyncpa [#allocation4], 0
    %s13 = scalar_lea.sflag [#allocation4], 1
    %14 = vsyncpa %s13, 0
    loop: start=0, step=1, limit=4
    $region2: #{tpu_custom_call.1} parent=1 // loop_pre_header
      _
    $region3: #{tpu_custom_call.1} parent=1 // loop_header
      %s16 = sphi 0, %s20
      %p17 = scmp.ge.s32.totalorder %s16, 4
      %s26 = sphi 0, %s28
      %s29 = sphi 0, %s26
      %s30 = sphi 0, %s29
      %s46 = sphi 0, %s30
      %s50 = sphi 0, %s50
      %s52 = sphi 0, %s50
      %s53 = sphi 0, %s52
      %s67 = sphi 0, %s53
      %s71 = sphi 0, %s71
      %s73 = sphi 0, %s71
      %s74 = sphi 0, %s73
      %s88 = sphi 0, %s74
      %s92 = sphi 0, %s92
      %s94 = sphi 0, %s92
      %s95 = sphi 0, %s94
      %s109 = sphi 0, %s95
      %s113 = sphi 0, %s113
      %s115 = sphi 0, %s113
      %s116 = sphi 0, %s115
      %s130 = sphi 0, %s116
      %s134 = sphi 0, %s134
      %s136 = sphi 0, %s134
      %s137 = sphi 0, %s136
      %s151 = sphi 0, %s137
      %s157 = sphi 0, %s159
      %s160 = sphi 0, %s157
      %s161 = sphi 0, %s160
      %s177 = sphi 0, %s161
    $region4: #{tpu_custom_call.1} parent=1 // loop_header_branch
      %19 = sbr.rel (%p17) target = $region8
    $region5: #{tpu_custom_call.1} parent=1 // loop_body
      %s21 = ssub.s32 %s16, 1
      %s22 = ssub.s32 %s16, 2
      %s23 = sadd.s32 %s16, 1
      %s24 = ssub.s32 %s16, %s23
      %p25 = scmp.eq.s32.totalorder %s24, 0
      %s27 = sadd.s32 %s26, 1
      %s28 = scalar_select %p25, %s26, %s27
      %p31 = pneg %p25
      %p32 = scmp.eq.s32.totalorder %s16, 1
      %p33 = por %p31, %p32
      %p34 = scmp.ne.s32.totalorder %s26, %s29
      %p35 = scmp.eq.s32.totalorder %s16, 0
      %p36 = por %p34, %p35
      %p37 = scmp.ne.s32.totalorder %s26, %s29
      %p38 = scmp.eq.s32.totalorder %s21, 1
      %p39 = por %p37, %p38
      %p40 = scmp.ne.s32.totalorder %s29, %s30
      %p41 = scmp.eq.s32.totalorder %s21, 0
      %p42 = por %p40, %p41
      %p43 = scmp.ne.s32.totalorder %s29, %s30
      %p44 = scmp.eq.s32.totalorder %s22, 1
      %p45 = por %p43, %p44
      %p47 = scmp.ne.s32.totalorder %s30, %s46
      %p48 = scmp.eq.s32.totalorder %s22, 0
      %p49 = por %p47, %p48
      %s51 = sadd.s32 %s50, 1
      %p54 = scmp.eq.s32.totalorder %s16, 1
      %p55 = scmp.ne.s32.totalorder %s50, %s52
      %p56 = scmp.eq.s32.totalorder %s16, 0
      %p57 = por %p55, %p56
      %p58 = scmp.ne.s32.totalorder %s50, %s52
      %p59 = scmp.eq.s32.totalorder %s21, 1
      %p60 = por %p58, %p59
      %p61 = scmp.ne.s32.totalorder %s52, %s53
      %p62 = scmp.eq.s32.totalorder %s21, 0
      %p63 = por %p61, %p62
      %p64 = scmp.ne.s32.totalorder %s52, %s53
      %p65 = scmp.eq.s32.totalorder %s22, 1
      %p66 = por %p64, %p65
      %p68 = scmp.ne.s32.totalorder %s53, %s67
      %p69 = scmp.eq.s32.totalorder %s22, 0
      %p70 = por %p68, %p69
      %s72 = sadd.s32 %s71, 1
      %p75 = scmp.eq.s32.totalorder %s16, 1
      %p76 = scmp.ne.s32.totalorder %s71, %s73
      %p77 = scmp.eq.s32.totalorder %s16, 0
      %p78 = por %p76, %p77
      %p79 = scmp.ne.s32.totalorder %s71, %s73
      %p80 = scmp.eq.s32.totalorder %s21, 1
      %p81 = por %p79, %p80
      %p82 = scmp.ne.s32.totalorder %s73, %s74
      %p83 = scmp.eq.s32.totalorder %s21, 0
      %p84 = por %p82, %p83
      %p85 = scmp.ne.s32.totalorder %s73, %s74
      %p86 = scmp.eq.s32.totalorder %s22, 1
      %p87 = por %p85, %p86
      %p89 = scmp.ne.s32.totalorder %s74, %s88
      %p90 = scmp.eq.s32.totalorder %s22, 0
      %p91 = por %p89, %p90
      %s93 = sadd.s32 %s92, 1
      %p96 = scmp.eq.s32.totalorder %s16, 1
      %p97 = scmp.ne.s32.totalorder %s92, %s94
      %p98 = scmp.eq.s32.totalorder %s16, 0
      %p99 = por %p97, %p98
      %p100 = scmp.ne.s32.totalorder %s92, %s94
      %p101 = scmp.eq.s32.totalorder %s21, 1
      %p102 = por %p100, %p101
      %p103 = scmp.ne.s32.totalorder %s94, %s95
      %p104 = scmp.eq.s32.totalorder %s21, 0
      %p105 = por %p103, %p104
      %p106 = scmp.ne.s32.totalorder %s94, %s95
      %p107 = scmp.eq.s32.totalorder %s22, 1
      %p108 = por %p106, %p107
      %p110 = scmp.ne.s32.totalorder %s95, %s109
      %p111 = scmp.eq.s32.totalorder %s22, 0
      %p112 = por %p110, %p111
      %s114 = sadd.s32 %s113, 1
      %p117 = scmp.eq.s32.totalorder %s16, 1
      %p118 = scmp.ne.s32.totalorder %s113, %s115
      %p119 = scmp.eq.s32.totalorder %s16, 0
      %p120 = por %p118, %p119
      %p121 = scmp.ne.s32.totalorder %s113, %s115
      %p122 = scmp.eq.s32.totalorder %s21, 1
      %p123 = por %p121, %p122
      %p124 = scmp.ne.s32.totalorder %s115, %s116
      %p125 = scmp.eq.s32.totalorder %s21, 0
      %p126 = por %p124, %p125
      %p127 = scmp.ne.s32.totalorder %s115, %s116
      %p128 = scmp.eq.s32.totalorder %s22, 1
      %p129 = por %p127, %p128
      %p131 = scmp.ne.s32.totalorder %s116, %s130
      %p132 = scmp.eq.s32.totalorder %s22, 0
      %p133 = por %p131, %p132
      %s135 = sadd.s32 %s134, 1
      %p138 = scmp.eq.s32.totalorder %s16, 1
      %p139 = scmp.ne.s32.totalorder %s134, %s136
      %p140 = scmp.eq.s32.totalorder %s16, 0
      %p141 = por %p139, %p140
      %p142 = scmp.ne.s32.totalorder %s134, %s136
      %p143 = scmp.eq.s32.totalorder %s21, 1
      %p144 = por %p142, %p143
      %p145 = scmp.ne.s32.totalorder %s136, %s137
      %p146 = scmp.eq.s32.totalorder %s21, 0
      %p147 = por %p145, %p146
      %p148 = scmp.ne.s32.totalorder %s136, %s137
      %p149 = scmp.eq.s32.totalorder %s22, 1
      %p150 = por %p148, %p149
      %p152 = scmp.ne.s32.totalorder %s137, %s151
      %p153 = scmp.eq.s32.totalorder %s22, 0
      %p154 = por %p152, %p153
      %s155 = ssub.s32 %s16, %s23
      %p156 = scmp.eq.s32.totalorder %s155, 0
      %s158 = sadd.s32 %s157, 1
      %s159 = scalar_select %p156, %s157, %s158
      %p162 = pneg %p156
      %p163 = scmp.eq.s32.totalorder %s16, 1
      %p164 = por %p162, %p163
      %p165 = scmp.ne.s32.totalorder %s157, %s160
      %p166 = scmp.eq.s32.totalorder %s16, 0
      %p167 = por %p165, %p166
      %p168 = scmp.ne.s32.totalorder %s157, %s160
      %p169 = scmp.eq.s32.totalorder %s21, 1
      %p170 = por %p168, %p169
      %p171 = scmp.ne.s32.totalorder %s160, %s161
      %p172 = scmp.eq.s32.totalorder %s21, 0
      %p173 = por %p171, %p172
      %p174 = scmp.ne.s32.totalorder %s160, %s161
      %p175 = scmp.eq.s32.totalorder %s22, 1
      %p176 = por %p174, %p175
      %p178 = scmp.ne.s32.totalorder %s161, %s177
      %p179 = scmp.eq.s32.totalorder %s22, 0
      %p180 = por %p178, %p179
      %p181 = scmp.le.s32.totalorder 1, %s16
      %p182 = scmp.lt.s32.totalorder %s16, 3
      %p183 = pnand %p181, %p182
      %p184 = pneg %p183
      // Predicated region
      $region9: #{tpu_custom_call.1} parent=5 // pred_check
        _
      $region10: #{tpu_custom_call.1} parent=5 // pred_check_branch
        %186 = sbr.rel (%p183) target = $region12
      $region11: #{tpu_custom_call.1} parent=5 // pred_region
        %s187 = ssub.s32 %s16, 1
        // Predicated region
        $region13: #{tpu_custom_call.1} parent=11 // pred_check
          %p188 = pneg %p63
        $region14: #{tpu_custom_call.1} parent=11 // pred_check_branch
          %190 = sbr.rel (%p188) target = $region16
        $region15: #{tpu_custom_call.1} parent=11 // pred_region
          _
        $region16: #{tpu_custom_call.1} parent=11 // pred_fallthru
          _
        // Predicated region
        $region17: #{tpu_custom_call.1} parent=11 // pred_check
          %p191 = pneg %p84
        $region18: #{tpu_custom_call.1} parent=11 // pred_check_branch
          %193 = sbr.rel (%p191) target = $region20
        $region19: #{tpu_custom_call.1} parent=11 // pred_region
          %s195 = ssub.s32 256, 256
          %196 = vsyncadd [#allocation3], %s195
          %s197 = sshll.u32 [#allocation2], 4
          %s198 = int_to_ptr.vmem [resolvable:$true] %s197
          %203 = dma.hbm_to_vmem [thread:$0]  %s2, 256, %s198, [#allocation3], 64, 64, 4
        $region20: #{tpu_custom_call.1} parent=11 // pred_fallthru
          _
        // Predicated region
        $region21: #{tpu_custom_call.1} parent=11 // pred_check
          %p204 = pneg %p105
        $region22: #{tpu_custom_call.1} parent=11 // pred_check_branch
          %206 = sbr.rel (%p204) target = $region24
        $region23: #{tpu_custom_call.1} parent=11 // pred_region
          _
        $region24: #{tpu_custom_call.1} parent=11 // pred_fallthru
          _
        // Predicated region
        $region25: #{tpu_custom_call.1} parent=11 // pred_check
          %p207 = pneg %p126
        $region26: #{tpu_custom_call.1} parent=11 // pred_check_branch
          %209 = sbr.rel (%p207) target = $region28
        $region27: #{tpu_custom_call.1} parent=11 // pred_region
          _
        $region28: #{tpu_custom_call.1} parent=11 // pred_fallthru
          _
        // Predicated region
        $region29: #{tpu_custom_call.1} parent=11 // pred_check
          %p210 = pneg %p147
        $region30: #{tpu_custom_call.1} parent=11 // pred_check_branch
          %212 = sbr.rel (%p210) target = $region32
        $region31: #{tpu_custom_call.1} parent=11 // pred_region
          _
        $region32: #{tpu_custom_call.1} parent=11 // pred_fallthru
          _
      $region12: #{tpu_custom_call.1} parent=5 // pred_fallthru
        _
      %p213 = scmp.lt.s32.totalorder %s16, 2
      // Predicated region
      $region33: #{tpu_custom_call.1} parent=5 // pred_check
        %p214 = pneg %p213
      $region34: #{tpu_custom_call.1} parent=5 // pred_check_branch
        %216 = sbr.rel (%p214) target = $region36
      $region35: #{tpu_custom_call.1} parent=5 // pred_region
        // Predicated region
        $region37: #{tpu_custom_call.1} parent=35 // pred_check
          %p217 = pneg %p36
        $region38: #{tpu_custom_call.1} parent=35 // pred_check_branch
          %219 = sbr.rel (%p217) target = $region40
        $region39: #{tpu_custom_call.1} parent=35 // pred_region
          %s220 = smul.u32 16, %s16
          %p221 = scmp.lt.s32.totalorder %s220, 31
          %s222 = scalar_select %p221, %s220, 31
          %s223 = smul.addr %s222, 4
          %s224 = scalar_lea.vmem %s0, %s223
          %s225 = smul.u32 16, %s16
        $region40: #{tpu_custom_call.1} parent=35 // pred_fallthru
          _
      $region36: #{tpu_custom_call.1} parent=5 // pred_fallthru
        _
      %p226 = scmp.le.s32.totalorder 1, %s16
      %p227 = scmp.lt.s32.totalorder %s16, 3
      %p228 = pnand %p226, %p227
      %p229 = pneg %p228
      // Predicated region
      $region41: #{tpu_custom_call.1} parent=5 // pred_check
        _
      $region42: #{tpu_custom_call.1} parent=5 // pred_check_branch
        %231 = sbr.rel (%p228) target = $region44
      $region43: #{tpu_custom_call.1} parent=5 // pred_region
        %s232 = ssub.s32 %s16, 1
        // Predicated region
        $region45: #{tpu_custom_call.1} parent=43 // pred_check
          %p233 = pneg %p84
        $region46: #{tpu_custom_call.1} parent=43 // pred_check_branch
          %235 = sbr.rel (%p233) target = $region48
        $region47: #{tpu_custom_call.1} parent=43 // pred_region
          %236 = dma.done [#allocation3], 256
        $region48: #{tpu_custom_call.1} parent=43 // pred_fallthru
          _
        %s237 = smul.u32 16, %s21
        %p238 = scmp.lt.s32.totalorder %s237, 31
        %s239 = scalar_select %p238, %s237, 31
        %s240 = smul.addr %s239, 4
        %s241 = scalar_lea.vmem %s0, %s240
        %p242 = pneg %p42
        %p243 = pneg %p39
        %p244 = pneg %p63
        %p245 = pneg %p60
        %p246 = pneg %p84
        %p247 = pneg %p81
        %p248 = pneg %p105
        %p249 = pneg %p102
        %p250 = pneg %p126
        %p251 = pneg %p123
        %p252 = pneg %p147
        %p253 = pneg %p144
        %p254 = pneg %p173
        %p255 = pneg %p170
        %s256 = sand.u32 %s160, 1
        %s257 = scalar_lea.sflag [#allocation4], %s256
        %s258 = sand.u32 %s160, 1
        %s259 = smul.addr %s258, 128
        %s260 = scalar_lea.vmem [#allocation5], %s259
        %s261 = smul.u32 16, %s21
        %p262 = scmp.lt.s32.totalorder %s261, 31
        %s263 = scalar_select %p262, %s261, 31
        %s264 = smul.addr %s263, 4
        %s265 = scalar_lea.vmem %s0, %s264
        %s266 = smul.u32 16, %s21
        %s267 = smul.u32 16, %s21
        %v269 = vld [vmem:[%s265] sm:$0xf]
        %v270 = vld [vmem:[%s265 + $0x4] sm:$0xf]
        %v271 = vld [vmem:[%s265 + $0x8] sm:$0xf]
        %v272 = vld [vmem:[%s265 + $0xc] sm:$0xf]
        %v273 = vld [vmem:[%s265 + $0x10] sm:$0xf]
        %v274 = vld [vmem:[%s265 + $0x14] sm:$0xf]
        %v275 = vld [vmem:[%s265 + $0x18] sm:$0xf]
        %v276 = vld [vmem:[%s265 + $0x1c] sm:$0xf]
        %v277 = vld [vmem:[%s265 + $0x20] sm:$0xf]
        %v278 = vld [vmem:[%s265 + $0x24] sm:$0xf]
        %v279 = vld [vmem:[%s265 + $0x28] sm:$0xf]
        %v280 = vld [vmem:[%s265 + $0x2c] sm:$0xf]
        %v281 = vld [vmem:[%s265 + $0x30] sm:$0xf]
        %v282 = vld [vmem:[%s265 + $0x34] sm:$0xf]
        %v283 = vld [vmem:[%s265 + $0x38] sm:$0xf]
        %v284 = vld [vmem:[%s265 + $0x3c] sm:$0xf]
        %v285 = vld [vmem:[#allocation2] sm:$0xf]
        %v286 = vld [vmem:[#allocation2 + $0x4] sm:$0xf]
        %v287 = vld [vmem:[#allocation2 + $0x8] sm:$0xf]
        %v288 = vld [vmem:[#allocation2 + $0xc] sm:$0xf]
        %v289 = vld [vmem:[%s1] sm:$0x7]
        %v290 = vlaneseq
        %v291 = vshrl.u32 %v290, 7
        %v292 = vsub.s32 0, %v291
        %v293 = vrot.slane %v289, %v292
        %v310 = vunpack.c.l.b16 %v269
        %v311 = vunpack.c.l.b16 %v270
        %v312 = vunpack.c.l.b16 %v271
        %v313 = vunpack.c.l.b16 %v272
        %v314 = vunpack.c.l.b16 %v273
        %v315 = vunpack.c.l.b16 %v274
        %v316 = vunpack.c.l.b16 %v275
        %v317 = vunpack.c.l.b16 %v276
        %v318 = vunpack.c.l.b16 %v277
        %v319 = vunpack.c.l.b16 %v278
        %v320 = vunpack.c.l.b16 %v279
        %v321 = vunpack.c.l.b16 %v280
        %v322 = vunpack.c.l.b16 %v281
        %v323 = vunpack.c.l.b16 %v282
        %v324 = vunpack.c.l.b16 %v283
        %v325 = vunpack.c.l.b16 %v284
        %v326 = vpack.c.b16 %v311, %v310
        %v327 = vpack.c.b16 %v313, %v312
        %v328 = vpack.c.b16 %v315, %v314
        %v329 = vpack.c.b16 %v317, %v316
        %v330 = vpack.c.b16 %v319, %v318
        %v331 = vpack.c.b16 %v321, %v320
        %v332 = vpack.c.b16 %v323, %v322
        %v333 = vpack.c.b16 %v325, %v324
        %v338 = vunpack.c.l.b16 %v285
        %v339 = vunpack.c.l.b16 %v286
        %v340 = vunpack.c.l.b16 %v287
        %v341 = vunpack.c.l.b16 %v288
        %v342 = vpack.c.b16 %v339, %v338
        %v343 = vpack.c.b16 %v341, %v340
        %vm346 = vcmask 261120
        %v348 = vsel %vm346, %v326, 0
        %v351 = vsel %vm346, %v327, 0
        %v354 = vsel %vm346, %v328, 0
        %v357 = vsel %vm346, %v329, 0
        %v360 = vsel %vm346, %v330, 0
        %v363 = vsel %vm346, %v331, 0
        %v366 = vsel %vm346, %v332, 0
        %v369 = vsel %vm346, %v333, 0
        %371 = vmatprep.subr.bf16.mxu0 0
        %372 = vmatpush1.bf16.msra.mxu0 0
        %373 = vmatprep.subr.bf16.mxu0 0
        %374 = vmatpush1.bf16.msra.mxu0 0
        %375 = vmatprep.subr.bf16.mxu0 0
        %376 = vmatpush1.bf16.msra.mxu0 0
        %377 = vmatprep.subr.bf16.mxu0 0
        %378 = vmatpush1.bf16.msra.mxu0 0
        %379 = vmatprep.subr.bf16.mxu0 0
        %380 = vmatpush1.bf16.msra.mxu0 0
        %381 = vmatprep.subr.bf16.mxu0 0
        %382 = vmatpush1.bf16.msra.mxu0 0
        %383 = vmatprep.subr.bf16.mxu0 0
        %384 = vmatpush1.bf16.msra.mxu0 %v343
        %385 = vmatprep.subr.bf16.mxu0 0
        %386 = vmatpush1.bf16.msra.mxu0 %v342
        %387 = vmatprep.subr.bf16.mxu0 0
        %388 = vmatpush2.bf16.msra.mxu0 0
        %389 = vmatprep.subr.bf16.mxu0 0
        %390 = vmatpush2.bf16.msra.mxu0 0
        %391 = vmatprep.subr.bf16.mxu0 0
        %392 = vmatpush2.bf16.msra.mxu0 0
        %393 = vmatprep.subr.bf16.mxu0 0
        %394 = vmatpush2.bf16.msra.mxu0 0
        %395 = vmatprep.subr.bf16.mxu0 0
        %396 = vmatpush2.bf16.msra.mxu0 0
        %397 = vmatprep.subr.bf16.mxu0 0
        %398 = vmatpush2.bf16.msra.mxu0 0
        %399 = vmatprep.subr.bf16.mxu0 0
        %400 = vmatpush2.bf16.msra.mxu0 0
        %401 = vmatprep.subr.bf16.mxu0 0
        %402 = vmatpush2.bf16.msra.mxu0 0
        %403 = vmatprep.mubr.bf16.mxu0 0
        %404 = vmatmul.mubr.bf16.gmra.mxu0 %v348
        %v405 = vpop.f32.mrf.mxu0
        %v406 = vadd.f32 %v293, %v405
        %v407 = vpop.f32.mrf.mxu0
        %v408 = vpop.f32.mrf.mxu0
        %v409 = vadd.f32 %v293, %v408
        %v410 = vpop.f32.mrf.mxu0
        %411 = vmatprep.mubr.bf16.mxu0 0
        %412 = vmatmul.mubr.bf16.gmra.mxu0 %v351
        %v413 = vpop.f32.mrf.mxu0
        %v414 = vadd.f32 %v293, %v413
        %v415 = vpop.f32.mrf.mxu0
        %v416 = vpop.f32.mrf.mxu0
        %v417 = vadd.f32 %v293, %v416
        %v418 = vpop.f32.mrf.mxu0
        %419 = vmatprep.mubr.bf16.mxu0 0
        %420 = vmatmul.mubr.bf16.gmra.mxu0 %v354
        %v421 = vpop.f32.mrf.mxu0
        %v422 = vadd.f32 %v293, %v421
        %v423 = vpop.f32.mrf.mxu0
        %v424 = vpop.f32.mrf.mxu0
        %v425 = vadd.f32 %v293, %v424
        %v426 = vpop.f32.mrf.mxu0
        %427 = vmatprep.mubr.bf16.mxu0 0
        %428 = vmatmul.mubr.bf16.gmra.mxu0 %v357
        %v429 = vpop.f32.mrf.mxu0
        %v430 = vadd.f32 %v293, %v429
        %v431 = vpop.f32.mrf.mxu0
        %v432 = vpop.f32.mrf.mxu0
        %v433 = vadd.f32 %v293, %v432
        %v434 = vpop.f32.mrf.mxu0
        %435 = vmatprep.mubr.bf16.mxu0 0
        %436 = vmatmul.mubr.bf16.gmra.mxu0 %v360
        %v437 = vpop.f32.mrf.mxu0
        %v438 = vadd.f32 %v293, %v437
        %v439 = vpop.f32.mrf.mxu0
        %v440 = vpop.f32.mrf.mxu0
        %v441 = vadd.f32 %v293, %v440
        %v442 = vpop.f32.mrf.mxu0
        %443 = vmatprep.mubr.bf16.mxu0 0
        %444 = vmatmul.mubr.bf16.gmra.mxu0 %v363
        %v445 = vpop.f32.mrf.mxu0
        %v446 = vadd.f32 %v293, %v445
        %v447 = vpop.f32.mrf.mxu0
        %v448 = vpop.f32.mrf.mxu0
        %v449 = vadd.f32 %v293, %v448
        %v450 = vpop.f32.mrf.mxu0
        %451 = vmatprep.mubr.bf16.mxu0 0
        %452 = vmatmul.mubr.bf16.gmra.mxu0 %v366
        %v453 = vpop.f32.mrf.mxu0
        %v454 = vadd.f32 %v293, %v453
        %v455 = vpop.f32.mrf.mxu0
        %v456 = vpop.f32.mrf.mxu0
        %v457 = vadd.f32 %v293, %v456
        %v458 = vpop.f32.mrf.mxu0
        %459 = vmatprep.mubr.bf16.mxu0 0
        %460 = vmatmul.mubr.bf16.gmra.mxu0 %v369
        %v461 = vpop.f32.mrf.mxu0
        %v462 = vadd.f32 %v293, %v461
        %v463 = vpop.f32.mrf.mxu0
        %v464 = vpop.f32.mrf.mxu0
        %v465 = vadd.f32 %v293, %v464
        %v466 = vpop.f32.mrf.mxu0
        %467 = vdwg.mxu0
        %468 = vadd.xlane.f32.xlu0 %v406
        %v469 = vpop.xlane.xlu0 %468
        %470 = vadd.xlane.f32.xlu0 %v409
        %v471 = vpop.xlane.xlu0 %470
        %472 = vadd.xlane.f32.xlu0 %v414
        %v473 = vpop.xlane.xlu0 %472
        %474 = vadd.xlane.f32.xlu0 %v417
        %v475 = vpop.xlane.xlu0 %474
        %476 = vadd.xlane.f32.xlu0 %v422
        %v477 = vpop.xlane.xlu0 %476
        %478 = vadd.xlane.f32.xlu0 %v425
        %v479 = vpop.xlane.xlu0 %478
        %480 = vadd.xlane.f32.xlu0 %v430
        %v481 = vpop.xlane.xlu0 %480
        %482 = vadd.xlane.f32.xlu0 %v433
        %v483 = vpop.xlane.xlu0 %482
        %484 = vadd.xlane.f32.xlu0 %v438
        %v485 = vpop.xlane.xlu0 %484
        %486 = vadd.xlane.f32.xlu0 %v441
        %v487 = vpop.xlane.xlu0 %486
        %488 = vadd.xlane.f32.xlu0 %v446
        %v489 = vpop.xlane.xlu0 %488
        %490 = vadd.xlane.f32.xlu0 %v449
        %v491 = vpop.xlane.xlu0 %490
        %492 = vadd.xlane.f32.xlu0 %v454
        %v493 = vpop.xlane.xlu0 %492
        %494 = vadd.xlane.f32.xlu0 %v457
        %v495 = vpop.xlane.xlu0 %494
        %496 = vadd.xlane.f32.xlu0 %v462
        %v497 = vpop.xlane.xlu0 %496
        %498 = vadd.xlane.f32.xlu0 %v465
        %v499 = vpop.xlane.xlu0 %498
        %v500 = vrcp.pop 128.0
        %v501 = vmul.f32 %v469, %v500
        %v502 = vmul.f32 %v471, %v500
        %v503 = vmul.f32 %v473, %v500
        %v504 = vmul.f32 %v475, %v500
        %v505 = vmul.f32 %v477, %v500
        %v506 = vmul.f32 %v479, %v500
        %v507 = vmul.f32 %v481, %v500
        %v508 = vmul.f32 %v483, %v500
        %v509 = vmul.f32 %v485, %v500
        %v510 = vmul.f32 %v487, %v500
        %v511 = vmul.f32 %v489, %v500
        %v512 = vmul.f32 %v491, %v500
        %v513 = vmul.f32 %v493, %v500
        %v514 = vmul.f32 %v495, %v500
        %v515 = vmul.f32 %v497, %v500
        %v516 = vmul.f32 %v499, %v500
        %v517 = vsub.f32 %v406, %v501
        %v518 = vsub.f32 %v409, %v502
        %v519 = vsub.f32 %v414, %v503
        %v520 = vsub.f32 %v417, %v504
        %v521 = vsub.f32 %v422, %v505
        %v522 = vsub.f32 %v425, %v506
        %v523 = vsub.f32 %v430, %v507
        %v524 = vsub.f32 %v433, %v508
        %v525 = vsub.f32 %v438, %v509
        %v526 = vsub.f32 %v441, %v510
        %v527 = vsub.f32 %v446, %v511
        %v528 = vsub.f32 %v449, %v512
        %v529 = vsub.f32 %v454, %v513
        %v530 = vsub.f32 %v457, %v514
        %v531 = vsub.f32 %v462, %v515
        %v532 = vsub.f32 %v465, %v516
        %v533 = vmul.f32 %v517, %v517
        %v534 = vmul.f32 %v518, %v518
        %v535 = vmul.f32 %v519, %v519
        %v536 = vmul.f32 %v520, %v520
        %v537 = vmul.f32 %v521, %v521
        %v538 = vmul.f32 %v522, %v522
        %v539 = vmul.f32 %v523, %v523
        %v540 = vmul.f32 %v524, %v524
        %v541 = vmul.f32 %v525, %v525
        %v542 = vmul.f32 %v526, %v526
        %v543 = vmul.f32 %v527, %v527
        %v544 = vmul.f32 %v528, %v528
        %v545 = vmul.f32 %v529, %v529
        %v546 = vmul.f32 %v530, %v530
        %v547 = vmul.f32 %v531, %v531
        %v548 = vmul.f32 %v532, %v532
        %549 = vadd.xlane.f32.xlu0 %v533
        %v550 = vpop.xlane.xlu0 %549
        %551 = vadd.xlane.f32.xlu0 %v534
        %v552 = vpop.xlane.xlu0 %551
        %553 = vadd.xlane.f32.xlu0 %v535
        %v554 = vpop.xlane.xlu0 %553
        %555 = vadd.xlane.f32.xlu0 %v536
        %v556 = vpop.xlane.xlu0 %555
        %557 = vadd.xlane.f32.xlu0 %v537
        %v558 = vpop.xlane.xlu0 %557
        %559 = vadd.xlane.f32.xlu0 %v538
        %v560 = vpop.xlane.xlu0 %559
        %561 = vadd.xlane.f32.xlu0 %v539
        %v562 = vpop.xlane.xlu0 %561
        %563 = vadd.xlane.f32.xlu0 %v540
        %v564 = vpop.xlane.xlu0 %563
        %565 = vadd.xlane.f32.xlu0 %v541
        %v566 = vpop.xlane.xlu0 %565
        %567 = vadd.xlane.f32.xlu0 %v542
        %v568 = vpop.xlane.xlu0 %567
        %569 = vadd.xlane.f32.xlu0 %v543
        %v570 = vpop.xlane.xlu0 %569
        %571 = vadd.xlane.f32.xlu0 %v544
        %v572 = vpop.xlane.xlu0 %571
        %573 = vadd.xlane.f32.xlu0 %v545
        %v574 = vpop.xlane.xlu0 %573
        %575 = vadd.xlane.f32.xlu0 %v546
        %v576 = vpop.xlane.xlu0 %575
        %577 = vadd.xlane.f32.xlu0 %v547
        %v578 = vpop.xlane.xlu0 %577
        %579 = vadd.xlane.f32.xlu0 %v548
        %v580 = vpop.xlane.xlu0 %579
        %v581 = vmul.f32 %v550, %v500
        %v582 = vmul.f32 %v552, %v500
        %v583 = vmul.f32 %v554, %v500
        %v584 = vmul.f32 %v556, %v500
        %v585 = vmul.f32 %v558, %v500
        %v586 = vmul.f32 %v560, %v500
        %v587 = vmul.f32 %v562, %v500
        %v588 = vmul.f32 %v564, %v500
        %v589 = vmul.f32 %v566, %v500
        %v590 = vmul.f32 %v568, %v500
        %v591 = vmul.f32 %v570, %v500
        %v592 = vmul.f32 %v572, %v500
        %v593 = vmul.f32 %v574, %v500
        %v594 = vmul.f32 %v576, %v500
        %v595 = vmul.f32 %v578, %v500
        %v596 = vmul.f32 %v580, %v500
        %v597 = vadd.f32 %v581, 1e-05
        %v598 = vadd.f32 %v582, 1e-05
        %v599 = vadd.f32 %v583, 1e-05
        %v600 = vadd.f32 %v584, 1e-05
        %v601 = vadd.f32 %v585, 1e-05
        %v602 = vadd.f32 %v586, 1e-05
        %v603 = vadd.f32 %v587, 1e-05
        %v604 = vadd.f32 %v588, 1e-05
        %v605 = vadd.f32 %v589, 1e-05
        %v606 = vadd.f32 %v590, 1e-05
        %v607 = vadd.f32 %v591, 1e-05
        %v608 = vadd.f32 %v592, 1e-05
        %v609 = vadd.f32 %v593, 1e-05
        %v610 = vadd.f32 %v594, 1e-05
        %v611 = vadd.f32 %v595, 1e-05
        %v612 = vadd.f32 %v596, 1e-05
        %v613 = vrsqrt.pop %v597
        %v614 = vrsqrt.pop %v598
        %v615 = vrsqrt.pop %v599
        %v616 = vrsqrt.pop %v600
        %v617 = vrsqrt.pop %v601
        %v618 = vrsqrt.pop %v602
        %v619 = vrsqrt.pop %v603
        %v620 = vrsqrt.pop %v604
        %v621 = vrsqrt.pop %v605
        %v622 = vrsqrt.pop %v606
        %v623 = vrsqrt.pop %v607
        %v624 = vrsqrt.pop %v608
        %v625 = vrsqrt.pop %v609
        %v626 = vrsqrt.pop %v610
        %v627 = vrsqrt.pop %v611
        %v628 = vrsqrt.pop %v612
        %v629 = vmul.f32 %v517, %v613
        %v630 = vmul.f32 %v518, %v614
        %v631 = vmul.f32 %v519, %v615
        %v632 = vmul.f32 %v520, %v616
        %v633 = vmul.f32 %v521, %v617
        %v634 = vmul.f32 %v522, %v618
        %v635 = vmul.f32 %v523, %v619
        %v636 = vmul.f32 %v524, %v620
        %v637 = vmul.f32 %v525, %v621
        %v638 = vmul.f32 %v526, %v622
        %v639 = vmul.f32 %v527, %v623
        %v640 = vmul.f32 %v528, %v624
        %v641 = vmul.f32 %v529, %v625
        %v642 = vmul.f32 %v530, %v626
        %v643 = vmul.f32 %v531, %v627
        %v644 = vmul.f32 %v532, %v628
        %v645 = vlaneseq
        %v646 = vshrl.u32 %v645, 7
        %v647 = vsub.s32 1, %v646
        %v648 = vrot.slane %v289, %v647
        %v649 = vmul.f32 %v629, %v648
        %v650 = vmul.f32 %v630, %v648
        %v651 = vmul.f32 %v631, %v648
        %v652 = vmul.f32 %v632, %v648
        %v653 = vmul.f32 %v633, %v648
        %v654 = vmul.f32 %v634, %v648
        %v655 = vmul.f32 %v635, %v648
        %v656 = vmul.f32 %v636, %v648
        %v657 = vmul.f32 %v637, %v648
        %v658 = vmul.f32 %v638, %v648
        %v659 = vmul.f32 %v639, %v648
        %v660 = vmul.f32 %v640, %v648
        %v661 = vmul.f32 %v641, %v648
        %v662 = vmul.f32 %v642, %v648
        %v663 = vmul.f32 %v643, %v648
        %v664 = vmul.f32 %v644, %v648
        %v665 = vlaneseq
        %v666 = vshrl.u32 %v665, 7
        %v667 = vsub.s32 2, %v666
        %v668 = vrot.slane %v289, %v667
        %v669 = vadd.f32 %v649, %v668
        %v670 = vadd.f32 %v650, %v668
        %v671 = vadd.f32 %v651, %v668
        %v672 = vadd.f32 %v652, %v668
        %v673 = vadd.f32 %v653, %v668
        %v674 = vadd.f32 %v654, %v668
        %v675 = vadd.f32 %v655, %v668
        %v676 = vadd.f32 %v656, %v668
        %v677 = vadd.f32 %v657, %v668
        %v678 = vadd.f32 %v658, %v668
        %v679 = vadd.f32 %v659, %v668
        %v680 = vadd.f32 %v660, %v668
        %v681 = vadd.f32 %v661, %v668
        %v682 = vadd.f32 %v662, %v668
        %v683 = vadd.f32 %v663, %v668
        %v684 = vadd.f32 %v664, %v668
        %v685 = vsub.f32 0.0, %v669
        %v686 = vsub.f32 0.0, %v670
        %v687 = vsub.f32 0.0, %v671
        %v688 = vsub.f32 0.0, %v672
        %v689 = vsub.f32 0.0, %v673
        %v690 = vsub.f32 0.0, %v674
        %v691 = vsub.f32 0.0, %v675
        %v692 = vsub.f32 0.0, %v676
        %v693 = vsub.f32 0.0, %v677
        %v694 = vsub.f32 0.0, %v678
        %v695 = vsub.f32 0.0, %v679
        %v696 = vsub.f32 0.0, %v680
        %v697 = vsub.f32 0.0, %v681
        %v698 = vsub.f32 0.0, %v682
        %v699 = vsub.f32 0.0, %v683
        %v700 = vsub.f32 0.0, %v684
        %v701 = vmul.f32 %v685, 1.442695
        %v702 = vpow.pop %v701
        %v703 = vmul.f32 %v686, 1.442695
        %v704 = vpow.pop %v703
        %v705 = vmul.f32 %v687, 1.442695
        %v706 = vpow.pop %v705
        %v707 = vmul.f32 %v688, 1.442695
        %v708 = vpow.pop %v707
        %v709 = vmul.f32 %v689, 1.442695
        %v710 = vpow.pop %v709
        %v711 = vmul.f32 %v690, 1.442695
        %v712 = vpow.pop %v711
        %v713 = vmul.f32 %v691, 1.442695
        %v714 = vpow.pop %v713
        %v715 = vmul.f32 %v692, 1.442695
        %v716 = vpow.pop %v715
        %v717 = vmul.f32 %v693, 1.442695
        %v718 = vpow.pop %v717
        %v719 = vmul.f32 %v694, 1.442695
        %v720 = vpow.pop %v719
        %v721 = vmul.f32 %v695, 1.442695
        %v722 = vpow.pop %v721
        %v723 = vmul.f32 %v696, 1.442695
        %v724 = vpow.pop %v723
        %v725 = vmul.f32 %v697, 1.442695
        %v726 = vpow.pop %v725
        %v727 = vmul.f32 %v698, 1.442695
        %v728 = vpow.pop %v727
        %v729 = vmul.f32 %v699, 1.442695
        %v730 = vpow.pop %v729
        %v731 = vmul.f32 %v700, 1.442695
        %v732 = vpow.pop %v731
        %v733 = vadd.f32 %v702, 1.0
        %v734 = vadd.f32 %v704, 1.0
        %v735 = vadd.f32 %v706, 1.0
        %v736 = vadd.f32 %v708, 1.0
        %v737 = vadd.f32 %v710, 1.0
        %v738 = vadd.f32 %v712, 1.0
        %v739 = vadd.f32 %v714, 1.0
        %v740 = vadd.f32 %v716, 1.0
        %v741 = vadd.f32 %v718, 1.0
        %v742 = vadd.f32 %v720, 1.0
        %v743 = vadd.f32 %v722, 1.0
        %v744 = vadd.f32 %v724, 1.0
        %v745 = vadd.f32 %v726, 1.0
        %v746 = vadd.f32 %v728, 1.0
        %v747 = vadd.f32 %v730, 1.0
        %v748 = vadd.f32 %v732, 1.0
        %v749 = vrcp.pop %v733
        %v750 = vrcp.pop %v734
        %v751 = vrcp.pop %v735
        %v752 = vrcp.pop %v736
        %v753 = vrcp.pop %v737
        %v754 = vrcp.pop %v738
        %v755 = vrcp.pop %v739
        %v756 = vrcp.pop %v740
        %v757 = vrcp.pop %v741
        %v758 = vrcp.pop %v742
        %v759 = vrcp.pop %v743
        %v760 = vrcp.pop %v744
        %v761 = vrcp.pop %v745
        %v762 = vrcp.pop %v746
        %v763 = vrcp.pop %v747
        %v764 = vrcp.pop %v748
        %v765 = vpack.c.bf16 %v750, %v749
        %v766 = vpack.c.bf16 %v752, %v751
        %v767 = vpack.c.bf16 %v754, %v753
        %v768 = vpack.c.bf16 %v756, %v755
        %v769 = vpack.c.bf16 %v758, %v757
        %v770 = vpack.c.bf16 %v760, %v759
        %v771 = vpack.c.bf16 %v762, %v761
        %v772 = vpack.c.bf16 %v764, %v763
        %v773 = vld [vmem:[%s3] sm:$0xf]
        %v774 = vld [vmem:[%s3 + $0x4] sm:$0xf]
        %v775 = vld [vmem:[%s3 + $0x8] sm:$0xf]
        %v776 = vld [vmem:[%s3 + $0xc] sm:$0xf]
        %v777 = vld [vmem:[%s3 + $0x10] sm:$0xf]
        %v778 = vld [vmem:[%s3 + $0x14] sm:$0xf]
        %v779 = vld [vmem:[%s3 + $0x18] sm:$0xf]
        %v780 = vld [vmem:[%s3 + $0x1c] sm:$0xf]
        %v781 = vld [vmem:[%s3 + $0x20] sm:$0xf]
        %v782 = vld [vmem:[%s3 + $0x24] sm:$0xf]
        %v783 = vld [vmem:[%s3 + $0x28] sm:$0xf]
        %v784 = vld [vmem:[%s3 + $0x2c] sm:$0xf]
        %v785 = vld [vmem:[%s3 + $0x30] sm:$0xf]
        %v786 = vld [vmem:[%s3 + $0x34] sm:$0xf]
        %v787 = vld [vmem:[%s3 + $0x38] sm:$0xf]
        %v788 = vld [vmem:[%s3 + $0x3c] sm:$0xf]
        %s789 = scalar_lea.vmem %s1, 4
        %v790 = vld [vmem:[%s789] sm:$0x7]
        %v791 = vlaneseq
        %v792 = vshrl.u32 %v791, 7
        %v793 = vsub.s32 0, %v792
        %v794 = vrot.slane %v790, %v793
        %v811 = vunpack.c.l.b16 %v773
        %v812 = vunpack.c.l.b16 %v774
        %v813 = vunpack.c.l.b16 %v775
        %v814 = vunpack.c.l.b16 %v776
        %v815 = vunpack.c.l.b16 %v777
        %v816 = vunpack.c.l.b16 %v778
        %v817 = vunpack.c.l.b16 %v779
        %v818 = vunpack.c.l.b16 %v780
        %v819 = vunpack.c.l.b16 %v781
        %v820 = vunpack.c.l.b16 %v782
        %v821 = vunpack.c.l.b16 %v783
        %v822 = vunpack.c.l.b16 %v784
        %v823 = vunpack.c.l.b16 %v785
        %v824 = vunpack.c.l.b16 %v786
        %v825 = vunpack.c.l.b16 %v787
        %v826 = vunpack.c.l.b16 %v788
        %v827 = vpack.c.b16 %v812, %v811
        %v828 = vpack.c.b16 %v814, %v813
        %v829 = vpack.c.b16 %v816, %v815
        %v830 = vpack.c.b16 %v818, %v817
        %v831 = vpack.c.b16 %v820, %v819
        %v832 = vpack.c.b16 %v822, %v821
        %v833 = vpack.c.b16 %v824, %v823
        %v834 = vpack.c.b16 %v826, %v825
        %843 = vmatprep.subr.bf16.mxu0 0
        %844 = vmatpush1.bf16.msra.mxu0 %v834
        %845 = vmatprep.subr.bf16.mxu0 0
        %846 = vmatpush1.bf16.msra.mxu0 %v833
        %847 = vmatprep.subr.bf16.mxu0 0
        %848 = vmatpush1.bf16.msra.mxu0 %v832
        %849 = vmatprep.subr.bf16.mxu0 0
        %850 = vmatpush1.bf16.msra.mxu0 %v831
        %851 = vmatprep.subr.bf16.mxu0 0
        %852 = vmatpush1.bf16.msra.mxu0 %v830
        %853 = vmatprep.subr.bf16.mxu0 0
        %854 = vmatpush1.bf16.msra.mxu0 %v829
        %855 = vmatprep.subr.bf16.mxu0 0
        %856 = vmatpush1.bf16.msra.mxu0 %v828
        %857 = vmatprep.subr.bf16.mxu0 0
        %858 = vmatpush1.bf16.msra.mxu0 %v827
        %859 = vmatprep.subr.bf16.mxu0 0
        %860 = vmatpush2.bf16.msra.mxu0 0
        %861 = vmatprep.subr.bf16.mxu0 0
        %862 = vmatpush2.bf16.msra.mxu0 0
        %863 = vmatprep.subr.bf16.mxu0 0
        %864 = vmatpush2.bf16.msra.mxu0 0
        %865 = vmatprep.subr.bf16.mxu0 0
        %866 = vmatpush2.bf16.msra.mxu0 0
        %867 = vmatprep.subr.bf16.mxu0 0
        %868 = vmatpush2.bf16.msra.mxu0 0
        %869 = vmatprep.subr.bf16.mxu0 0
        %870 = vmatpush2.bf16.msra.mxu0 0
        %871 = vmatprep.subr.bf16.mxu0 0
        %872 = vmatpush2.bf16.msra.mxu0 0
        %873 = vmatprep.subr.bf16.mxu0 0
        %874 = vmatpush2.bf16.msra.mxu0 0
        %875 = vmatprep.mubr.bf16.mxu0 0
        %876 = vmatmul.mubr.bf16.gmra.mxu0 %v765
        %v877 = vpop.f32.mrf.mxu0
        %v878 = vadd.f32 %v794, %v877
        %v879 = vpop.f32.mrf.mxu0
        %v880 = vpop.f32.mrf.mxu0
        %v881 = vadd.f32 %v794, %v880
        %v882 = vpop.f32.mrf.mxu0
        %883 = vmatprep.mubr.bf16.mxu0 0
        %884 = vmatmul.mubr.bf16.gmra.mxu0 %v766
        %v885 = vpop.f32.mrf.mxu0
        %v886 = vadd.f32 %v794, %v885
        %v887 = vpop.f32.mrf.mxu0
        %v888 = vpop.f32.mrf.mxu0
        %v889 = vadd.f32 %v794, %v888
        %v890 = vpop.f32.mrf.mxu0
        %891 = vmatprep.mubr.bf16.mxu0 0
        %892 = vmatmul.mubr.bf16.gmra.mxu0 %v767
        %v893 = vpop.f32.mrf.mxu0
        %v894 = vadd.f32 %v794, %v893
        %v895 = vpop.f32.mrf.mxu0
        %v896 = vpop.f32.mrf.mxu0
        %v897 = vadd.f32 %v794, %v896
        %v898 = vpop.f32.mrf.mxu0
        %899 = vmatprep.mubr.bf16.mxu0 0
        %900 = vmatmul.mubr.bf16.gmra.mxu0 %v768
        %v901 = vpop.f32.mrf.mxu0
        %v902 = vadd.f32 %v794, %v901
        %v903 = vpop.f32.mrf.mxu0
        %v904 = vpop.f32.mrf.mxu0
        %v905 = vadd.f32 %v794, %v904
        %v906 = vpop.f32.mrf.mxu0
        %907 = vmatprep.mubr.bf16.mxu0 0
        %908 = vmatmul.mubr.bf16.gmra.mxu0 %v769
        %v909 = vpop.f32.mrf.mxu0
        %v910 = vadd.f32 %v794, %v909
        %v911 = vpop.f32.mrf.mxu0
        %v912 = vpop.f32.mrf.mxu0
        %v913 = vadd.f32 %v794, %v912
        %v914 = vpop.f32.mrf.mxu0
        %915 = vmatprep.mubr.bf16.mxu0 0
        %916 = vmatmul.mubr.bf16.gmra.mxu0 %v770
        %v917 = vpop.f32.mrf.mxu0
        %v918 = vadd.f32 %v794, %v917
        %v919 = vpop.f32.mrf.mxu0
        %v920 = vpop.f32.mrf.mxu0
        %v921 = vadd.f32 %v794, %v920
        %v922 = vpop.f32.mrf.mxu0
        %923 = vmatprep.mubr.bf16.mxu0 0
        %924 = vmatmul.mubr.bf16.gmra.mxu0 %v771
        %v925 = vpop.f32.mrf.mxu0
        %v926 = vadd.f32 %v794, %v925
        %v927 = vpop.f32.mrf.mxu0
        %v928 = vpop.f32.mrf.mxu0
        %v929 = vadd.f32 %v794, %v928
        %v930 = vpop.f32.mrf.mxu0
        %931 = vmatprep.mubr.bf16.mxu0 0
        %932 = vmatmul.mubr.bf16.gmra.mxu0 %v772
        %v933 = vpop.f32.mrf.mxu0
        %v934 = vadd.f32 %v794, %v933
        %v935 = vpop.f32.mrf.mxu0
        %v936 = vpop.f32.mrf.mxu0
        %v937 = vadd.f32 %v794, %v936
        %v938 = vpop.f32.mrf.mxu0
        %939 = vdwg.mxu0
        %940 = vadd.xlane.f32.xlu0 %v878
        %v941 = vpop.xlane.xlu0 %940
        %942 = vadd.xlane.f32.xlu0 %v881
        %v943 = vpop.xlane.xlu0 %942
        %944 = vadd.xlane.f32.xlu0 %v886
        %v945 = vpop.xlane.xlu0 %944
        %946 = vadd.xlane.f32.xlu0 %v889
        %v947 = vpop.xlane.xlu0 %946
        %948 = vadd.xlane.f32.xlu0 %v894
        %v949 = vpop.xlane.xlu0 %948
        %950 = vadd.xlane.f32.xlu0 %v897
        %v951 = vpop.xlane.xlu0 %950
        %952 = vadd.xlane.f32.xlu0 %v902
        %v953 = vpop.xlane.xlu0 %952
        %954 = vadd.xlane.f32.xlu0 %v905
        %v955 = vpop.xlane.xlu0 %954
        %956 = vadd.xlane.f32.xlu0 %v910
        %v957 = vpop.xlane.xlu0 %956
        %958 = vadd.xlane.f32.xlu0 %v913
        %v959 = vpop.xlane.xlu0 %958
        %960 = vadd.xlane.f32.xlu0 %v918
        %v961 = vpop.xlane.xlu0 %960
        %962 = vadd.xlane.f32.xlu0 %v921
        %v963 = vpop.xlane.xlu0 %962
        %964 = vadd.xlane.f32.xlu0 %v926
        %v965 = vpop.xlane.xlu0 %964
        %966 = vadd.xlane.f32.xlu0 %v929
        %v967 = vpop.xlane.xlu0 %966
        %968 = vadd.xlane.f32.xlu0 %v934
        %v969 = vpop.xlane.xlu0 %968
        %970 = vadd.xlane.f32.xlu0 %v937
        %v971 = vpop.xlane.xlu0 %970
        %v972 = vmul.f32 %v941, %v500
        %v973 = vmul.f32 %v943, %v500
        %v974 = vmul.f32 %v945, %v500
        %v975 = vmul.f32 %v947, %v500
        %v976 = vmul.f32 %v949, %v500
        %v977 = vmul.f32 %v951, %v500
        %v978 = vmul.f32 %v953, %v500
        %v979 = vmul.f32 %v955, %v500
        %v980 = vmul.f32 %v957, %v500
        %v981 = vmul.f32 %v959, %v500
        %v982 = vmul.f32 %v961, %v500
        %v983 = vmul.f32 %v963, %v500
        %v984 = vmul.f32 %v965, %v500
        %v985 = vmul.f32 %v967, %v500
        %v986 = vmul.f32 %v969, %v500
        %v987 = vmul.f32 %v971, %v500
        %v988 = vsub.f32 %v878, %v972
        %v989 = vsub.f32 %v881, %v973
        %v990 = vsub.f32 %v886, %v974
        %v991 = vsub.f32 %v889, %v975
        %v992 = vsub.f32 %v894, %v976
        %v993 = vsub.f32 %v897, %v977
        %v994 = vsub.f32 %v902, %v978
        %v995 = vsub.f32 %v905, %v979
        %v996 = vsub.f32 %v910, %v980
        %v997 = vsub.f32 %v913, %v981
        %v998 = vsub.f32 %v918, %v982
        %v999 = vsub.f32 %v921, %v983
        %v1000 = vsub.f32 %v926, %v984
        %v1001 = vsub.f32 %v929, %v985
        %v1002 = vsub.f32 %v934, %v986
        %v1003 = vsub.f32 %v937, %v987
        %v1004 = vmul.f32 %v988, %v988
        %v1005 = vmul.f32 %v989, %v989
        %v1006 = vmul.f32 %v990, %v990
        %v1007 = vmul.f32 %v991, %v991
        %v1008 = vmul.f32 %v992, %v992
        %v1009 = vmul.f32 %v993, %v993
        %v1010 = vmul.f32 %v994, %v994
        %v1011 = vmul.f32 %v995, %v995
        %v1012 = vmul.f32 %v996, %v996
        %v1013 = vmul.f32 %v997, %v997
        %v1014 = vmul.f32 %v998, %v998
        %v1015 = vmul.f32 %v999, %v999
        %v1016 = vmul.f32 %v1000, %v1000
        %v1017 = vmul.f32 %v1001, %v1001
        %v1018 = vmul.f32 %v1002, %v1002
        %v1019 = vmul.f32 %v1003, %v1003
        %1020 = vadd.xlane.f32.xlu0 %v1004
        %v1021 = vpop.xlane.xlu0 %1020
        %1022 = vadd.xlane.f32.xlu0 %v1005
        %v1023 = vpop.xlane.xlu0 %1022
        %1024 = vadd.xlane.f32.xlu0 %v1006
        %v1025 = vpop.xlane.xlu0 %1024
        %1026 = vadd.xlane.f32.xlu0 %v1007
        %v1027 = vpop.xlane.xlu0 %1026
        %1028 = vadd.xlane.f32.xlu0 %v1008
        %v1029 = vpop.xlane.xlu0 %1028
        %1030 = vadd.xlane.f32.xlu0 %v1009
        %v1031 = vpop.xlane.xlu0 %1030
        %1032 = vadd.xlane.f32.xlu0 %v1010
        %v1033 = vpop.xlane.xlu0 %1032
        %1034 = vadd.xlane.f32.xlu0 %v1011
        %v1035 = vpop.xlane.xlu0 %1034
        %1036 = vadd.xlane.f32.xlu0 %v1012
        %v1037 = vpop.xlane.xlu0 %1036
        %1038 = vadd.xlane.f32.xlu0 %v1013
        %v1039 = vpop.xlane.xlu0 %1038
        %1040 = vadd.xlane.f32.xlu0 %v1014
        %v1041 = vpop.xlane.xlu0 %1040
        %1042 = vadd.xlane.f32.xlu0 %v1015
        %v1043 = vpop.xlane.xlu0 %1042
        %1044 = vadd.xlane.f32.xlu0 %v1016
        %v1045 = vpop.xlane.xlu0 %1044
        %1046 = vadd.xlane.f32.xlu0 %v1017
        %v1047 = vpop.xlane.xlu0 %1046
        %1048 = vadd.xlane.f32.xlu0 %v1018
        %v1049 = vpop.xlane.xlu0 %1048
        %1050 = vadd.xlane.f32.xlu0 %v1019
        %v1051 = vpop.xlane.xlu0 %1050
        %v1052 = vmul.f32 %v1021, %v500
        %v1053 = vmul.f32 %v1023, %v500
        %v1054 = vmul.f32 %v1025, %v500
        %v1055 = vmul.f32 %v1027, %v500
        %v1056 = vmul.f32 %v1029, %v500
        %v1057 = vmul.f32 %v1031, %v500
        %v1058 = vmul.f32 %v1033, %v500
        %v1059 = vmul.f32 %v1035, %v500
        %v1060 = vmul.f32 %v1037, %v500
        %v1061 = vmul.f32 %v1039, %v500
        %v1062 = vmul.f32 %v1041, %v500
        %v1063 = vmul.f32 %v1043, %v500
        %v1064 = vmul.f32 %v1045, %v500
        %v1065 = vmul.f32 %v1047, %v500
        %v1066 = vmul.f32 %v1049, %v500
        %v1067 = vmul.f32 %v1051, %v500
        %v1068 = vadd.f32 %v1052, 1e-05
        %v1069 = vadd.f32 %v1053, 1e-05
        %v1070 = vadd.f32 %v1054, 1e-05
        %v1071 = vadd.f32 %v1055, 1e-05
        %v1072 = vadd.f32 %v1056, 1e-05
        %v1073 = vadd.f32 %v1057, 1e-05
        %v1074 = vadd.f32 %v1058, 1e-05
        %v1075 = vadd.f32 %v1059, 1e-05
        %v1076 = vadd.f32 %v1060, 1e-05
        %v1077 = vadd.f32 %v1061, 1e-05
        %v1078 = vadd.f32 %v1062, 1e-05
        %v1079 = vadd.f32 %v1063, 1e-05
        %v1080 = vadd.f32 %v1064, 1e-05
        %v1081 = vadd.f32 %v1065, 1e-05
        %v1082 = vadd.f32 %v1066, 1e-05
        %v1083 = vadd.f32 %v1067, 1e-05
        %v1084 = vrsqrt.pop %v1068
        %v1085 = vrsqrt.pop %v1069
        %v1086 = vrsqrt.pop %v1070
        %v1087 = vrsqrt.pop %v1071
        %v1088 = vrsqrt.pop %v1072
        %v1089 = vrsqrt.pop %v1073
        %v1090 = vrsqrt.pop %v1074
        %v1091 = vrsqrt.pop %v1075
        %v1092 = vrsqrt.pop %v1076
        %v1093 = vrsqrt.pop %v1077
        %v1094 = vrsqrt.pop %v1078
        %v1095 = vrsqrt.pop %v1079
        %v1096 = vrsqrt.pop %v1080
        %v1097 = vrsqrt.pop %v1081
        %v1098 = vrsqrt.pop %v1082
        %v1099 = vrsqrt.pop %v1083
        %v1100 = vmul.f32 %v988, %v1084
        %v1101 = vmul.f32 %v989, %v1085
        %v1102 = vmul.f32 %v990, %v1086
        %v1103 = vmul.f32 %v991, %v1087
        %v1104 = vmul.f32 %v992, %v1088
        %v1105 = vmul.f32 %v993, %v1089
        %v1106 = vmul.f32 %v994, %v1090
        %v1107 = vmul.f32 %v995, %v1091
        %v1108 = vmul.f32 %v996, %v1092
        %v1109 = vmul.f32 %v997, %v1093
        %v1110 = vmul.f32 %v998, %v1094
        %v1111 = vmul.f32 %v999, %v1095
        %v1112 = vmul.f32 %v1000, %v1096
        %v1113 = vmul.f32 %v1001, %v1097
        %v1114 = vmul.f32 %v1002, %v1098
        %v1115 = vmul.f32 %v1003, %v1099
        %v1116 = vlaneseq
        %v1117 = vshrl.u32 %v1116, 7
        %v1118 = vsub.s32 1, %v1117
        %v1119 = vrot.slane %v790, %v1118
        %v1120 = vmul.f32 %v1100, %v1119
        %v1121 = vmul.f32 %v1101, %v1119
        %v1122 = vmul.f32 %v1102, %v1119
        %v1123 = vmul.f32 %v1103, %v1119
        %v1124 = vmul.f32 %v1104, %v1119
        %v1125 = vmul.f32 %v1105, %v1119
        %v1126 = vmul.f32 %v1106, %v1119
        %v1127 = vmul.f32 %v1107, %v1119
        %v1128 = vmul.f32 %v1108, %v1119
        %v1129 = vmul.f32 %v1109, %v1119
        %v1130 = vmul.f32 %v1110, %v1119
        %v1131 = vmul.f32 %v1111, %v1119
        %v1132 = vmul.f32 %v1112, %v1119
        %v1133 = vmul.f32 %v1113, %v1119
        %v1134 = vmul.f32 %v1114, %v1119
        %v1135 = vmul.f32 %v1115, %v1119
        %v1136 = vlaneseq
        %v1137 = vshrl.u32 %v1136, 7
        %v1138 = vsub.s32 2, %v1137
        %v1139 = vrot.slane %v790, %v1138
        %v1140 = vadd.f32 %v1120, %v1139
        %v1141 = vadd.f32 %v1121, %v1139
        %v1142 = vadd.f32 %v1122, %v1139
        %v1143 = vadd.f32 %v1123, %v1139
        %v1144 = vadd.f32 %v1124, %v1139
        %v1145 = vadd.f32 %v1125, %v1139
        %v1146 = vadd.f32 %v1126, %v1139
        %v1147 = vadd.f32 %v1127, %v1139
        %v1148 = vadd.f32 %v1128, %v1139
        %v1149 = vadd.f32 %v1129, %v1139
        %v1150 = vadd.f32 %v1130, %v1139
        %v1151 = vadd.f32 %v1131, %v1139
        %v1152 = vadd.f32 %v1132, %v1139
        %v1153 = vadd.f32 %v1133, %v1139
        %v1154 = vadd.f32 %v1134, %v1139
        %v1155 = vadd.f32 %v1135, %v1139
        %v1156 = vsub.f32 0.0, %v1140
        %v1157 = vsub.f32 0.0, %v1141
        %v1158 = vsub.f32 0.0, %v1142
        %v1159 = vsub.f32 0.0, %v1143
        %v1160 = vsub.f32 0.0, %v1144
        %v1161 = vsub.f32 0.0, %v1145
        %v1162 = vsub.f32 0.0, %v1146
        %v1163 = vsub.f32 0.0, %v1147
        %v1164 = vsub.f32 0.0, %v1148
        %v1165 = vsub.f32 0.0, %v1149
        %v1166 = vsub.f32 0.0, %v1150
        %v1167 = vsub.f32 0.0, %v1151
        %v1168 = vsub.f32 0.0, %v1152
        %v1169 = vsub.f32 0.0, %v1153
        %v1170 = vsub.f32 0.0, %v1154
        %v1171 = vsub.f32 0.0, %v1155
        %v1172 = vmul.f32 %v1156, 1.442695
        %v1173 = vpow.pop %v1172
        %v1174 = vmul.f32 %v1157, 1.442695
        %v1175 = vpow.pop %v1174
        %v1176 = vmul.f32 %v1158, 1.442695
        %v1177 = vpow.pop %v1176
        %v1178 = vmul.f32 %v1159, 1.442695
        %v1179 = vpow.pop %v1178
        %v1180 = vmul.f32 %v1160, 1.442695
        %v1181 = vpow.pop %v1180
        %v1182 = vmul.f32 %v1161, 1.442695
        %v1183 = vpow.pop %v1182
        %v1184 = vmul.f32 %v1162, 1.442695
        %v1185 = vpow.pop %v1184
        %v1186 = vmul.f32 %v1163, 1.442695
        %v1187 = vpow.pop %v1186
        %v1188 = vmul.f32 %v1164, 1.442695
        %v1189 = vpow.pop %v1188
        %v1190 = vmul.f32 %v1165, 1.442695
        %v1191 = vpow.pop %v1190
        %v1192 = vmul.f32 %v1166, 1.442695
        %v1193 = vpow.pop %v1192
        %v1194 = vmul.f32 %v1167, 1.442695
        %v1195 = vpow.pop %v1194
        %v1196 = vmul.f32 %v1168, 1.442695
        %v1197 = vpow.pop %v1196
        %v1198 = vmul.f32 %v1169, 1.442695
        %v1199 = vpow.pop %v1198
        %v1200 = vmul.f32 %v1170, 1.442695
        %v1201 = vpow.pop %v1200
        %v1202 = vmul.f32 %v1171, 1.442695
        %v1203 = vpow.pop %v1202
        %v1204 = vadd.f32 %v1173, 1.0
        %v1205 = vadd.f32 %v1175, 1.0
        %v1206 = vadd.f32 %v1177, 1.0
        %v1207 = vadd.f32 %v1179, 1.0
        %v1208 = vadd.f32 %v1181, 1.0
        %v1209 = vadd.f32 %v1183, 1.0
        %v1210 = vadd.f32 %v1185, 1.0
        %v1211 = vadd.f32 %v1187, 1.0
        %v1212 = vadd.f32 %v1189, 1.0
        %v1213 = vadd.f32 %v1191, 1.0
        %v1214 = vadd.f32 %v1193, 1.0
        %v1215 = vadd.f32 %v1195, 1.0
        %v1216 = vadd.f32 %v1197, 1.0
        %v1217 = vadd.f32 %v1199, 1.0
        %v1218 = vadd.f32 %v1201, 1.0
        %v1219 = vadd.f32 %v1203, 1.0
        %v1220 = vrcp.pop %v1204
        %v1221 = vrcp.pop %v1205
        %v1222 = vrcp.pop %v1206
        %v1223 = vrcp.pop %v1207
        %v1224 = vrcp.pop %v1208
        %v1225 = vrcp.pop %v1209
        %v1226 = vrcp.pop %v1210
        %v1227 = vrcp.pop %v1211
        %v1228 = vrcp.pop %v1212
        %v1229 = vrcp.pop %v1213
        %v1230 = vrcp.pop %v1214
        %v1231 = vrcp.pop %v1215
        %v1232 = vrcp.pop %v1216
        %v1233 = vrcp.pop %v1217
        %v1234 = vrcp.pop %v1218
        %v1235 = vrcp.pop %v1219
        %v1236 = vpack.c.bf16 %v1221, %v1220
        %v1237 = vpack.c.bf16 %v1223, %v1222
        %v1238 = vpack.c.bf16 %v1225, %v1224
        %v1239 = vpack.c.bf16 %v1227, %v1226
        %v1240 = vpack.c.bf16 %v1229, %v1228
        %v1241 = vpack.c.bf16 %v1231, %v1230
        %v1242 = vpack.c.bf16 %v1233, %v1232
        %v1243 = vpack.c.bf16 %v1235, %v1234
        %v1244 = vld [vmem:[%s4] sm:$0xf]
        %v1245 = vld [vmem:[%s4 + $0x4] sm:$0xf]
        %v1246 = vld [vmem:[%s4 + $0x8] sm:$0xf]
        %v1247 = vld [vmem:[%s4 + $0xc] sm:$0xf]
        %v1248 = vld [vmem:[%s4 + $0x10] sm:$0xf]
        %v1249 = vld [vmem:[%s4 + $0x14] sm:$0xf]
        %v1250 = vld [vmem:[%s4 + $0x18] sm:$0xf]
        %v1251 = vld [vmem:[%s4 + $0x1c] sm:$0xf]
        %v1252 = vld [vmem:[%s4 + $0x20] sm:$0xf]
        %v1253 = vld [vmem:[%s4 + $0x24] sm:$0xf]
        %v1254 = vld [vmem:[%s4 + $0x28] sm:$0xf]
        %v1255 = vld [vmem:[%s4 + $0x2c] sm:$0xf]
        %v1256 = vld [vmem:[%s4 + $0x30] sm:$0xf]
        %v1257 = vld [vmem:[%s4 + $0x34] sm:$0xf]
        %v1258 = vld [vmem:[%s4 + $0x38] sm:$0xf]
        %v1259 = vld [vmem:[%s4 + $0x3c] sm:$0xf]
        %s1260 = scalar_lea.vmem %s1, 8
        %v1261 = vld [vmem:[%s1260] sm:$0x7]
        %v1262 = vlaneseq
        %v1263 = vshrl.u32 %v1262, 7
        %v1264 = vsub.s32 0, %v1263
        %v1265 = vrot.slane %v1261, %v1264
        %v1282 = vunpack.c.l.b16 %v1244
        %v1283 = vunpack.c.l.b16 %v1245
        %v1284 = vunpack.c.l.b16 %v1246
        %v1285 = vunpack.c.l.b16 %v1247
        %v1286 = vunpack.c.l.b16 %v1248
        %v1287 = vunpack.c.l.b16 %v1249
        %v1288 = vunpack.c.l.b16 %v1250
        %v1289 = vunpack.c.l.b16 %v1251
        %v1290 = vunpack.c.l.b16 %v1252
        %v1291 = vunpack.c.l.b16 %v1253
        %v1292 = vunpack.c.l.b16 %v1254
        %v1293 = vunpack.c.l.b16 %v1255
        %v1294 = vunpack.c.l.b16 %v1256
        %v1295 = vunpack.c.l.b16 %v1257
        %v1296 = vunpack.c.l.b16 %v1258
        %v1297 = vunpack.c.l.b16 %v1259
        %v1298 = vpack.c.b16 %v1283, %v1282
        %v1299 = vpack.c.b16 %v1285, %v1284
        %v1300 = vpack.c.b16 %v1287, %v1286
        %v1301 = vpack.c.b16 %v1289, %v1288
        %v1302 = vpack.c.b16 %v1291, %v1290
        %v1303 = vpack.c.b16 %v1293, %v1292
        %v1304 = vpack.c.b16 %v1295, %v1294
        %v1305 = vpack.c.b16 %v1297, %v1296
        %1314 = vmatprep.subr.bf16.mxu0 0
        %1315 = vmatpush1.bf16.msra.mxu0 %v1305
        %1316 = vmatprep.subr.bf16.mxu0 0
        %1317 = vmatpush1.bf16.msra.mxu0 %v1304
        %1318 = vmatprep.subr.bf16.mxu0 0
        %1319 = vmatpush1.bf16.msra.mxu0 %v1303
        %1320 = vmatprep.subr.bf16.mxu0 0
        %1321 = vmatpush1.bf16.msra.mxu0 %v1302
        %1322 = vmatprep.subr.bf16.mxu0 0
        %1323 = vmatpush1.bf16.msra.mxu0 %v1301
        %1324 = vmatprep.subr.bf16.mxu0 0
        %1325 = vmatpush1.bf16.msra.mxu0 %v1300
        %1326 = vmatprep.subr.bf16.mxu0 0
        %1327 = vmatpush1.bf16.msra.mxu0 %v1299
        %1328 = vmatprep.subr.bf16.mxu0 0
        %1329 = vmatpush1.bf16.msra.mxu0 %v1298
        %1330 = vmatprep.subr.bf16.mxu0 0
        %1331 = vmatpush2.bf16.msra.mxu0 0
        %1332 = vmatprep.subr.bf16.mxu0 0
        %1333 = vmatpush2.bf16.msra.mxu0 0
        %1334 = vmatprep.subr.bf16.mxu0 0
        %1335 = vmatpush2.bf16.msra.mxu0 0
        %1336 = vmatprep.subr.bf16.mxu0 0
        %1337 = vmatpush2.bf16.msra.mxu0 0
        %1338 = vmatprep.subr.bf16.mxu0 0
        %1339 = vmatpush2.bf16.msra.mxu0 0
        %1340 = vmatprep.subr.bf16.mxu0 0
        %1341 = vmatpush2.bf16.msra.mxu0 0
        %1342 = vmatprep.subr.bf16.mxu0 0
        %1343 = vmatpush2.bf16.msra.mxu0 0
        %1344 = vmatprep.subr.bf16.mxu0 0
        %1345 = vmatpush2.bf16.msra.mxu0 0
        %1346 = vmatprep.mubr.bf16.mxu0 0
        %1347 = vmatmul.mubr.bf16.gmra.mxu0 %v1236
        %v1348 = vpop.f32.mrf.mxu0
        %v1349 = vadd.f32 %v1265, %v1348
        %v1350 = vpop.f32.mrf.mxu0
        %v1351 = vpop.f32.mrf.mxu0
        %v1352 = vadd.f32 %v1265, %v1351
        %v1353 = vpop.f32.mrf.mxu0
        %1354 = vmatprep.mubr.bf16.mxu0 0
        %1355 = vmatmul.mubr.bf16.gmra.mxu0 %v1237
        %v1356 = vpop.f32.mrf.mxu0
        %v1357 = vadd.f32 %v1265, %v1356
        %v1358 = vpop.f32.mrf.mxu0
        %v1359 = vpop.f32.mrf.mxu0
        %v1360 = vadd.f32 %v1265, %v1359
        %v1361 = vpop.f32.mrf.mxu0
        %1362 = vmatprep.mubr.bf16.mxu0 0
        %1363 = vmatmul.mubr.bf16.gmra.mxu0 %v1238
        %v1364 = vpop.f32.mrf.mxu0
        %v1365 = vadd.f32 %v1265, %v1364
        %v1366 = vpop.f32.mrf.mxu0
        %v1367 = vpop.f32.mrf.mxu0
        %v1368 = vadd.f32 %v1265, %v1367
        %v1369 = vpop.f32.mrf.mxu0
        %1370 = vmatprep.mubr.bf16.mxu0 0
        %1371 = vmatmul.mubr.bf16.gmra.mxu0 %v1239
        %v1372 = vpop.f32.mrf.mxu0
        %v1373 = vadd.f32 %v1265, %v1372
        %v1374 = vpop.f32.mrf.mxu0
        %v1375 = vpop.f32.mrf.mxu0
        %v1376 = vadd.f32 %v1265, %v1375
        %v1377 = vpop.f32.mrf.mxu0
        %1378 = vmatprep.mubr.bf16.mxu0 0
        %1379 = vmatmul.mubr.bf16.gmra.mxu0 %v1240
        %v1380 = vpop.f32.mrf.mxu0
        %v1381 = vadd.f32 %v1265, %v1380
        %v1382 = vpop.f32.mrf.mxu0
        %v1383 = vpop.f32.mrf.mxu0
        %v1384 = vadd.f32 %v1265, %v1383
        %v1385 = vpop.f32.mrf.mxu0
        %1386 = vmatprep.mubr.bf16.mxu0 0
        %1387 = vmatmul.mubr.bf16.gmra.mxu0 %v1241
        %v1388 = vpop.f32.mrf.mxu0
        %v1389 = vadd.f32 %v1265, %v1388
        %v1390 = vpop.f32.mrf.mxu0
        %v1391 = vpop.f32.mrf.mxu0
        %v1392 = vadd.f32 %v1265, %v1391
        %v1393 = vpop.f32.mrf.mxu0
        %1394 = vmatprep.mubr.bf16.mxu0 0
        %1395 = vmatmul.mubr.bf16.gmra.mxu0 %v1242
        %v1396 = vpop.f32.mrf.mxu0
        %v1397 = vadd.f32 %v1265, %v1396
        %v1398 = vpop.f32.mrf.mxu0
        %v1399 = vpop.f32.mrf.mxu0
        %v1400 = vadd.f32 %v1265, %v1399
        %v1401 = vpop.f32.mrf.mxu0
        %1402 = vmatprep.mubr.bf16.mxu0 0
        %1403 = vmatmul.mubr.bf16.gmra.mxu0 %v1243
        %v1404 = vpop.f32.mrf.mxu0
        %v1405 = vadd.f32 %v1265, %v1404
        %v1406 = vpop.f32.mrf.mxu0
        %v1407 = vpop.f32.mrf.mxu0
        %v1408 = vadd.f32 %v1265, %v1407
        %v1409 = vpop.f32.mrf.mxu0
        %1410 = vdwg.mxu0
        %1411 = vadd.xlane.f32.xlu0 %v1349
        %v1412 = vpop.xlane.xlu0 %1411
        %1413 = vadd.xlane.f32.xlu0 %v1352
        %v1414 = vpop.xlane.xlu0 %1413
        %1415 = vadd.xlane.f32.xlu0 %v1357
        %v1416 = vpop.xlane.xlu0 %1415
        %1417 = vadd.xlane.f32.xlu0 %v1360
        %v1418 = vpop.xlane.xlu0 %1417
        %1419 = vadd.xlane.f32.xlu0 %v1365
        %v1420 = vpop.xlane.xlu0 %1419
        %1421 = vadd.xlane.f32.xlu0 %v1368
        %v1422 = vpop.xlane.xlu0 %1421
        %1423 = vadd.xlane.f32.xlu0 %v1373
        %v1424 = vpop.xlane.xlu0 %1423
        %1425 = vadd.xlane.f32.xlu0 %v1376
        %v1426 = vpop.xlane.xlu0 %1425
        %1427 = vadd.xlane.f32.xlu0 %v1381
        %v1428 = vpop.xlane.xlu0 %1427
        %1429 = vadd.xlane.f32.xlu0 %v1384
        %v1430 = vpop.xlane.xlu0 %1429
        %1431 = vadd.xlane.f32.xlu0 %v1389
        %v1432 = vpop.xlane.xlu0 %1431
        %1433 = vadd.xlane.f32.xlu0 %v1392
        %v1434 = vpop.xlane.xlu0 %1433
        %1435 = vadd.xlane.f32.xlu0 %v1397
        %v1436 = vpop.xlane.xlu0 %1435
        %1437 = vadd.xlane.f32.xlu0 %v1400
        %v1438 = vpop.xlane.xlu0 %1437
        %1439 = vadd.xlane.f32.xlu0 %v1405
        %v1440 = vpop.xlane.xlu0 %1439
        %1441 = vadd.xlane.f32.xlu0 %v1408
        %v1442 = vpop.xlane.xlu0 %1441
        %v1443 = vmul.f32 %v1412, %v500
        %v1444 = vmul.f32 %v1414, %v500
        %v1445 = vmul.f32 %v1416, %v500
        %v1446 = vmul.f32 %v1418, %v500
        %v1447 = vmul.f32 %v1420, %v500
        %v1448 = vmul.f32 %v1422, %v500
        %v1449 = vmul.f32 %v1424, %v500
        %v1450 = vmul.f32 %v1426, %v500
        %v1451 = vmul.f32 %v1428, %v500
        %v1452 = vmul.f32 %v1430, %v500
        %v1453 = vmul.f32 %v1432, %v500
        %v1454 = vmul.f32 %v1434, %v500
        %v1455 = vmul.f32 %v1436, %v500
        %v1456 = vmul.f32 %v1438, %v500
        %v1457 = vmul.f32 %v1440, %v500
        %v1458 = vmul.f32 %v1442, %v500
        %v1459 = vsub.f32 %v1349, %v1443
        %v1460 = vsub.f32 %v1352, %v1444
        %v1461 = vsub.f32 %v1357, %v1445
        %v1462 = vsub.f32 %v1360, %v1446
        %v1463 = vsub.f32 %v1365, %v1447
        %v1464 = vsub.f32 %v1368, %v1448
        %v1465 = vsub.f32 %v1373, %v1449
        %v1466 = vsub.f32 %v1376, %v1450
        %v1467 = vsub.f32 %v1381, %v1451
        %v1468 = vsub.f32 %v1384, %v1452
        %v1469 = vsub.f32 %v1389, %v1453
        %v1470 = vsub.f32 %v1392, %v1454
        %v1471 = vsub.f32 %v1397, %v1455
        %v1472 = vsub.f32 %v1400, %v1456
        %v1473 = vsub.f32 %v1405, %v1457
        %v1474 = vsub.f32 %v1408, %v1458
        %v1475 = vmul.f32 %v1459, %v1459
        %v1476 = vmul.f32 %v1460, %v1460
        %v1477 = vmul.f32 %v1461, %v1461
        %v1478 = vmul.f32 %v1462, %v1462
        %v1479 = vmul.f32 %v1463, %v1463
        %v1480 = vmul.f32 %v1464, %v1464
        %v1481 = vmul.f32 %v1465, %v1465
        %v1482 = vmul.f32 %v1466, %v1466
        %v1483 = vmul.f32 %v1467, %v1467
        %v1484 = vmul.f32 %v1468, %v1468
        %v1485 = vmul.f32 %v1469, %v1469
        %v1486 = vmul.f32 %v1470, %v1470
        %v1487 = vmul.f32 %v1471, %v1471
        %v1488 = vmul.f32 %v1472, %v1472
        %v1489 = vmul.f32 %v1473, %v1473
        %v1490 = vmul.f32 %v1474, %v1474
        %1491 = vadd.xlane.f32.xlu0 %v1475
        %v1492 = vpop.xlane.xlu0 %1491
        %1493 = vadd.xlane.f32.xlu0 %v1476
        %v1494 = vpop.xlane.xlu0 %1493
        %1495 = vadd.xlane.f32.xlu0 %v1477
        %v1496 = vpop.xlane.xlu0 %1495
        %1497 = vadd.xlane.f32.xlu0 %v1478
        %v1498 = vpop.xlane.xlu0 %1497
        %1499 = vadd.xlane.f32.xlu0 %v1479
        %v1500 = vpop.xlane.xlu0 %1499
        %1501 = vadd.xlane.f32.xlu0 %v1480
        %v1502 = vpop.xlane.xlu0 %1501
        %1503 = vadd.xlane.f32.xlu0 %v1481
        %v1504 = vpop.xlane.xlu0 %1503
        %1505 = vadd.xlane.f32.xlu0 %v1482
        %v1506 = vpop.xlane.xlu0 %1505
        %1507 = vadd.xlane.f32.xlu0 %v1483
        %v1508 = vpop.xlane.xlu0 %1507
        %1509 = vadd.xlane.f32.xlu0 %v1484
        %v1510 = vpop.xlane.xlu0 %1509
        %1511 = vadd.xlane.f32.xlu0 %v1485
        %v1512 = vpop.xlane.xlu0 %1511
        %1513 = vadd.xlane.f32.xlu0 %v1486
        %v1514 = vpop.xlane.xlu0 %1513
        %1515 = vadd.xlane.f32.xlu0 %v1487
        %v1516 = vpop.xlane.xlu0 %1515
        %1517 = vadd.xlane.f32.xlu0 %v1488
        %v1518 = vpop.xlane.xlu0 %1517
        %1519 = vadd.xlane.f32.xlu0 %v1489
        %v1520 = vpop.xlane.xlu0 %1519
        %1521 = vadd.xlane.f32.xlu0 %v1490
        %v1522 = vpop.xlane.xlu0 %1521
        %v1523 = vmul.f32 %v1492, %v500
        %v1524 = vmul.f32 %v1494, %v500
        %v1525 = vmul.f32 %v1496, %v500
        %v1526 = vmul.f32 %v1498, %v500
        %v1527 = vmul.f32 %v1500, %v500
        %v1528 = vmul.f32 %v1502, %v500
        %v1529 = vmul.f32 %v1504, %v500
        %v1530 = vmul.f32 %v1506, %v500
        %v1531 = vmul.f32 %v1508, %v500
        %v1532 = vmul.f32 %v1510, %v500
        %v1533 = vmul.f32 %v1512, %v500
        %v1534 = vmul.f32 %v1514, %v500
        %v1535 = vmul.f32 %v1516, %v500
        %v1536 = vmul.f32 %v1518, %v500
        %v1537 = vmul.f32 %v1520, %v500
        %v1538 = vmul.f32 %v1522, %v500
        %v1539 = vadd.f32 %v1523, 1e-05
        %v1540 = vadd.f32 %v1524, 1e-05
        %v1541 = vadd.f32 %v1525, 1e-05
        %v1542 = vadd.f32 %v1526, 1e-05
        %v1543 = vadd.f32 %v1527, 1e-05
        %v1544 = vadd.f32 %v1528, 1e-05
        %v1545 = vadd.f32 %v1529, 1e-05
        %v1546 = vadd.f32 %v1530, 1e-05
        %v1547 = vadd.f32 %v1531, 1e-05
        %v1548 = vadd.f32 %v1532, 1e-05
        %v1549 = vadd.f32 %v1533, 1e-05
        %v1550 = vadd.f32 %v1534, 1e-05
        %v1551 = vadd.f32 %v1535, 1e-05
        %v1552 = vadd.f32 %v1536, 1e-05
        %v1553 = vadd.f32 %v1537, 1e-05
        %v1554 = vadd.f32 %v1538, 1e-05
        %v1555 = vrsqrt.pop %v1539
        %v1556 = vrsqrt.pop %v1540
        %v1557 = vrsqrt.pop %v1541
        %v1558 = vrsqrt.pop %v1542
        %v1559 = vrsqrt.pop %v1543
        %v1560 = vrsqrt.pop %v1544
        %v1561 = vrsqrt.pop %v1545
        %v1562 = vrsqrt.pop %v1546
        %v1563 = vrsqrt.pop %v1547
        %v1564 = vrsqrt.pop %v1548
        %v1565 = vrsqrt.pop %v1549
        %v1566 = vrsqrt.pop %v1550
        %v1567 = vrsqrt.pop %v1551
        %v1568 = vrsqrt.pop %v1552
        %v1569 = vrsqrt.pop %v1553
        %v1570 = vrsqrt.pop %v1554
        %v1571 = vmul.f32 %v1459, %v1555
        %v1572 = vmul.f32 %v1460, %v1556
        %v1573 = vmul.f32 %v1461, %v1557
        %v1574 = vmul.f32 %v1462, %v1558
        %v1575 = vmul.f32 %v1463, %v1559
        %v1576 = vmul.f32 %v1464, %v1560
        %v1577 = vmul.f32 %v1465, %v1561
        %v1578 = vmul.f32 %v1466, %v1562
        %v1579 = vmul.f32 %v1467, %v1563
        %v1580 = vmul.f32 %v1468, %v1564
        %v1581 = vmul.f32 %v1469, %v1565
        %v1582 = vmul.f32 %v1470, %v1566
        %v1583 = vmul.f32 %v1471, %v1567
        %v1584 = vmul.f32 %v1472, %v1568
        %v1585 = vmul.f32 %v1473, %v1569
        %v1586 = vmul.f32 %v1474, %v1570
        %v1587 = vlaneseq
        %v1588 = vshrl.u32 %v1587, 7
        %v1589 = vsub.s32 1, %v1588
        %v1590 = vrot.slane %v1261, %v1589
        %v1591 = vmul.f32 %v1571, %v1590
        %v1592 = vmul.f32 %v1572, %v1590
        %v1593 = vmul.f32 %v1573, %v1590
        %v1594 = vmul.f32 %v1574, %v1590
        %v1595 = vmul.f32 %v1575, %v1590
        %v1596 = vmul.f32 %v1576, %v1590
        %v1597 = vmul.f32 %v1577, %v1590
        %v1598 = vmul.f32 %v1578, %v1590
        %v1599 = vmul.f32 %v1579, %v1590
        %v1600 = vmul.f32 %v1580, %v1590
        %v1601 = vmul.f32 %v1581, %v1590
        %v1602 = vmul.f32 %v1582, %v1590
        %v1603 = vmul.f32 %v1583, %v1590
        %v1604 = vmul.f32 %v1584, %v1590
        %v1605 = vmul.f32 %v1585, %v1590
        %v1606 = vmul.f32 %v1586, %v1590
        %v1607 = vlaneseq
        %v1608 = vshrl.u32 %v1607, 7
        %v1609 = vsub.s32 2, %v1608
        %v1610 = vrot.slane %v1261, %v1609
        %v1611 = vadd.f32 %v1591, %v1610
        %v1612 = vadd.f32 %v1592, %v1610
        %v1613 = vadd.f32 %v1593, %v1610
        %v1614 = vadd.f32 %v1594, %v1610
        %v1615 = vadd.f32 %v1595, %v1610
        %v1616 = vadd.f32 %v1596, %v1610
        %v1617 = vadd.f32 %v1597, %v1610
        %v1618 = vadd.f32 %v1598, %v1610
        %v1619 = vadd.f32 %v1599, %v1610
        %v1620 = vadd.f32 %v1600, %v1610
        %v1621 = vadd.f32 %v1601, %v1610
        %v1622 = vadd.f32 %v1602, %v1610
        %v1623 = vadd.f32 %v1603, %v1610
        %v1624 = vadd.f32 %v1604, %v1610
        %v1625 = vadd.f32 %v1605, %v1610
        %v1626 = vadd.f32 %v1606, %v1610
        %v1627 = vsub.f32 0.0, %v1611
        %v1628 = vsub.f32 0.0, %v1612
        %v1629 = vsub.f32 0.0, %v1613
        %v1630 = vsub.f32 0.0, %v1614
        %v1631 = vsub.f32 0.0, %v1615
        %v1632 = vsub.f32 0.0, %v1616
        %v1633 = vsub.f32 0.0, %v1617
        %v1634 = vsub.f32 0.0, %v1618
        %v1635 = vsub.f32 0.0, %v1619
        %v1636 = vsub.f32 0.0, %v1620
        %v1637 = vsub.f32 0.0, %v1621
        %v1638 = vsub.f32 0.0, %v1622
        %v1639 = vsub.f32 0.0, %v1623
        %v1640 = vsub.f32 0.0, %v1624
        %v1641 = vsub.f32 0.0, %v1625
        %v1642 = vsub.f32 0.0, %v1626
        %v1643 = vmul.f32 %v1627, 1.442695
        %v1644 = vpow.pop %v1643
        %v1645 = vmul.f32 %v1628, 1.442695
        %v1646 = vpow.pop %v1645
        %v1647 = vmul.f32 %v1629, 1.442695
        %v1648 = vpow.pop %v1647
        %v1649 = vmul.f32 %v1630, 1.442695
        %v1650 = vpow.pop %v1649
        %v1651 = vmul.f32 %v1631, 1.442695
        %v1652 = vpow.pop %v1651
        %v1653 = vmul.f32 %v1632, 1.442695
        %v1654 = vpow.pop %v1653
        %v1655 = vmul.f32 %v1633, 1.442695
        %v1656 = vpow.pop %v1655
        %v1657 = vmul.f32 %v1634, 1.442695
        %v1658 = vpow.pop %v1657
        %v1659 = vmul.f32 %v1635, 1.442695
        %v1660 = vpow.pop %v1659
        %v1661 = vmul.f32 %v1636, 1.442695
        %v1662 = vpow.pop %v1661
        %v1663 = vmul.f32 %v1637, 1.442695
        %v1664 = vpow.pop %v1663
        %v1665 = vmul.f32 %v1638, 1.442695
        %v1666 = vpow.pop %v1665
        %v1667 = vmul.f32 %v1639, 1.442695
        %v1668 = vpow.pop %v1667
        %v1669 = vmul.f32 %v1640, 1.442695
        %v1670 = vpow.pop %v1669
        %v1671 = vmul.f32 %v1641, 1.442695
        %v1672 = vpow.pop %v1671
        %v1673 = vmul.f32 %v1642, 1.442695
        %v1674 = vpow.pop %v1673
        %v1675 = vadd.f32 %v1644, 1.0
        %v1676 = vadd.f32 %v1646, 1.0
        %v1677 = vadd.f32 %v1648, 1.0
        %v1678 = vadd.f32 %v1650, 1.0
        %v1679 = vadd.f32 %v1652, 1.0
        %v1680 = vadd.f32 %v1654, 1.0
        %v1681 = vadd.f32 %v1656, 1.0
        %v1682 = vadd.f32 %v1658, 1.0
        %v1683 = vadd.f32 %v1660, 1.0
        %v1684 = vadd.f32 %v1662, 1.0
        %v1685 = vadd.f32 %v1664, 1.0
        %v1686 = vadd.f32 %v1666, 1.0
        %v1687 = vadd.f32 %v1668, 1.0
        %v1688 = vadd.f32 %v1670, 1.0
        %v1689 = vadd.f32 %v1672, 1.0
        %v1690 = vadd.f32 %v1674, 1.0
        %v1691 = vrcp.pop %v1675
        %v1692 = vrcp.pop %v1676
        %v1693 = vrcp.pop %v1677
        %v1694 = vrcp.pop %v1678
        %v1695 = vrcp.pop %v1679
        %v1696 = vrcp.pop %v1680
        %v1697 = vrcp.pop %v1681
        %v1698 = vrcp.pop %v1682
        %v1699 = vrcp.pop %v1683
        %v1700 = vrcp.pop %v1684
        %v1701 = vrcp.pop %v1685
        %v1702 = vrcp.pop %v1686
        %v1703 = vrcp.pop %v1687
        %v1704 = vrcp.pop %v1688
        %v1705 = vrcp.pop %v1689
        %v1706 = vrcp.pop %v1690
        %v1707 = vpack.c.bf16 %v1692, %v1691
        %v1708 = vpack.c.bf16 %v1694, %v1693
        %v1709 = vpack.c.bf16 %v1696, %v1695
        %v1710 = vpack.c.bf16 %v1698, %v1697
        %v1711 = vpack.c.bf16 %v1700, %v1699
        %v1712 = vpack.c.bf16 %v1702, %v1701
        %v1713 = vpack.c.bf16 %v1704, %v1703
        %v1714 = vpack.c.bf16 %v1706, %v1705
        %v1715 = vld [vmem:[%s5] sm:$0xf]
        %v1716 = vld [vmem:[%s5 + $0x4] sm:$0xf]
        %v1717 = vld [vmem:[%s5 + $0x8] sm:$0xf]
        %v1718 = vld [vmem:[%s5 + $0xc] sm:$0xf]
        %v1719 = vld [vmem:[%s5 + $0x10] sm:$0xf]
        %v1720 = vld [vmem:[%s5 + $0x14] sm:$0xf]
        %v1721 = vld [vmem:[%s5 + $0x18] sm:$0xf]
        %v1722 = vld [vmem:[%s5 + $0x1c] sm:$0xf]
        %v1723 = vld [vmem:[%s5 + $0x20] sm:$0xf]
        %v1724 = vld [vmem:[%s5 + $0x24] sm:$0xf]
        %v1725 = vld [vmem:[%s5 + $0x28] sm:$0xf]
        %v1726 = vld [vmem:[%s5 + $0x2c] sm:$0xf]
        %v1727 = vld [vmem:[%s5 + $0x30] sm:$0xf]
        %v1728 = vld [vmem:[%s5 + $0x34] sm:$0xf]
        %v1729 = vld [vmem:[%s5 + $0x38] sm:$0xf]
        %v1730 = vld [vmem:[%s5 + $0x3c] sm:$0xf]
        %s1731 = scalar_lea.vmem %s1, 12
        %v1732 = vld [vmem:[%s1731] sm:$0x7]
        %v1733 = vlaneseq
        %v1734 = vshrl.u32 %v1733, 7
        %v1735 = vsub.s32 0, %v1734
        %v1736 = vrot.slane %v1732, %v1735
        %v1753 = vunpack.c.l.b16 %v1715
        %v1754 = vunpack.c.l.b16 %v1716
        %v1755 = vunpack.c.l.b16 %v1717
        %v1756 = vunpack.c.l.b16 %v1718
        %v1757 = vunpack.c.l.b16 %v1719
        %v1758 = vunpack.c.l.b16 %v1720
        %v1759 = vunpack.c.l.b16 %v1721
        %v1760 = vunpack.c.l.b16 %v1722
        %v1761 = vunpack.c.l.b16 %v1723
        %v1762 = vunpack.c.l.b16 %v1724
        %v1763 = vunpack.c.l.b16 %v1725
        %v1764 = vunpack.c.l.b16 %v1726
        %v1765 = vunpack.c.l.b16 %v1727
        %v1766 = vunpack.c.l.b16 %v1728
        %v1767 = vunpack.c.l.b16 %v1729
        %v1768 = vunpack.c.l.b16 %v1730
        %v1769 = vpack.c.b16 %v1754, %v1753
        %v1770 = vpack.c.b16 %v1756, %v1755
        %v1771 = vpack.c.b16 %v1758, %v1757
        %v1772 = vpack.c.b16 %v1760, %v1759
        %v1773 = vpack.c.b16 %v1762, %v1761
        %v1774 = vpack.c.b16 %v1764, %v1763
        %v1775 = vpack.c.b16 %v1766, %v1765
        %v1776 = vpack.c.b16 %v1768, %v1767
        %1785 = vmatprep.subr.bf16.mxu0 0
        %1786 = vmatpush1.bf16.msra.mxu0 %v1776
        %1787 = vmatprep.subr.bf16.mxu0 0
        %1788 = vmatpush1.bf16.msra.mxu0 %v1775
        %1789 = vmatprep.subr.bf16.mxu0 0
        %1790 = vmatpush1.bf16.msra.mxu0 %v1774
        %1791 = vmatprep.subr.bf16.mxu0 0
        %1792 = vmatpush1.bf16.msra.mxu0 %v1773
        %1793 = vmatprep.subr.bf16.mxu0 0
        %1794 = vmatpush1.bf16.msra.mxu0 %v1772
        %1795 = vmatprep.subr.bf16.mxu0 0
        %1796 = vmatpush1.bf16.msra.mxu0 %v1771
        %1797 = vmatprep.subr.bf16.mxu0 0
        %1798 = vmatpush1.bf16.msra.mxu0 %v1770
        %1799 = vmatprep.subr.bf16.mxu0 0
        %1800 = vmatpush1.bf16.msra.mxu0 %v1769
        %1801 = vmatprep.subr.bf16.mxu0 0
        %1802 = vmatpush2.bf16.msra.mxu0 0
        %1803 = vmatprep.subr.bf16.mxu0 0
        %1804 = vmatpush2.bf16.msra.mxu0 0
        %1805 = vmatprep.subr.bf16.mxu0 0
        %1806 = vmatpush2.bf16.msra.mxu0 0
        %1807 = vmatprep.subr.bf16.mxu0 0
        %1808 = vmatpush2.bf16.msra.mxu0 0
        %1809 = vmatprep.subr.bf16.mxu0 0
        %1810 = vmatpush2.bf16.msra.mxu0 0
        %1811 = vmatprep.subr.bf16.mxu0 0
        %1812 = vmatpush2.bf16.msra.mxu0 0
        %1813 = vmatprep.subr.bf16.mxu0 0
        %1814 = vmatpush2.bf16.msra.mxu0 0
        %1815 = vmatprep.subr.bf16.mxu0 0
        %1816 = vmatpush2.bf16.msra.mxu0 0
        %1817 = vmatprep.mubr.bf16.mxu0 0
        %1818 = vmatmul.mubr.bf16.gmra.mxu0 %v1707
        %v1819 = vpop.f32.mrf.mxu0
        %v1820 = vadd.f32 %v1736, %v1819
        %v1821 = vpop.f32.mrf.mxu0
        %v1822 = vpop.f32.mrf.mxu0
        %v1823 = vadd.f32 %v1736, %v1822
        %v1824 = vpop.f32.mrf.mxu0
        %1825 = vmatprep.mubr.bf16.mxu0 0
        %1826 = vmatmul.mubr.bf16.gmra.mxu0 %v1708
        %v1827 = vpop.f32.mrf.mxu0
        %v1828 = vadd.f32 %v1736, %v1827
        %v1829 = vpop.f32.mrf.mxu0
        %v1830 = vpop.f32.mrf.mxu0
        %v1831 = vadd.f32 %v1736, %v1830
        %v1832 = vpop.f32.mrf.mxu0
        %1833 = vmatprep.mubr.bf16.mxu0 0
        %1834 = vmatmul.mubr.bf16.gmra.mxu0 %v1709
        %v1835 = vpop.f32.mrf.mxu0
        %v1836 = vadd.f32 %v1736, %v1835
        %v1837 = vpop.f32.mrf.mxu0
        %v1838 = vpop.f32.mrf.mxu0
        %v1839 = vadd.f32 %v1736, %v1838
        %v1840 = vpop.f32.mrf.mxu0
        %1841 = vmatprep.mubr.bf16.mxu0 0
        %1842 = vmatmul.mubr.bf16.gmra.mxu0 %v1710
        %v1843 = vpop.f32.mrf.mxu0
        %v1844 = vadd.f32 %v1736, %v1843
        %v1845 = vpop.f32.mrf.mxu0
        %v1846 = vpop.f32.mrf.mxu0
        %v1847 = vadd.f32 %v1736, %v1846
        %v1848 = vpop.f32.mrf.mxu0
        %1849 = vmatprep.mubr.bf16.mxu0 0
        %1850 = vmatmul.mubr.bf16.gmra.mxu0 %v1711
        %v1851 = vpop.f32.mrf.mxu0
        %v1852 = vadd.f32 %v1736, %v1851
        %v1853 = vpop.f32.mrf.mxu0
        %v1854 = vpop.f32.mrf.mxu0
        %v1855 = vadd.f32 %v1736, %v1854
        %v1856 = vpop.f32.mrf.mxu0
        %1857 = vmatprep.mubr.bf16.mxu0 0
        %1858 = vmatmul.mubr.bf16.gmra.mxu0 %v1712
        %v1859 = vpop.f32.mrf.mxu0
        %v1860 = vadd.f32 %v1736, %v1859
        %v1861 = vpop.f32.mrf.mxu0
        %v1862 = vpop.f32.mrf.mxu0
        %v1863 = vadd.f32 %v1736, %v1862
        %v1864 = vpop.f32.mrf.mxu0
        %1865 = vmatprep.mubr.bf16.mxu0 0
        %1866 = vmatmul.mubr.bf16.gmra.mxu0 %v1713
        %v1867 = vpop.f32.mrf.mxu0
        %v1868 = vadd.f32 %v1736, %v1867
        %v1869 = vpop.f32.mrf.mxu0
        %v1870 = vpop.f32.mrf.mxu0
        %v1871 = vadd.f32 %v1736, %v1870
        %v1872 = vpop.f32.mrf.mxu0
        %1873 = vmatprep.mubr.bf16.mxu0 0
        %1874 = vmatmul.mubr.bf16.gmra.mxu0 %v1714
        %v1875 = vpop.f32.mrf.mxu0
        %v1876 = vadd.f32 %v1736, %v1875
        %v1877 = vpop.f32.mrf.mxu0
        %v1878 = vpop.f32.mrf.mxu0
        %v1879 = vadd.f32 %v1736, %v1878
        %v1880 = vpop.f32.mrf.mxu0
        %1881 = vdwg.mxu0
        %1882 = vadd.xlane.f32.xlu0 %v1820
        %v1883 = vpop.xlane.xlu0 %1882
        %1884 = vadd.xlane.f32.xlu0 %v1823
        %v1885 = vpop.xlane.xlu0 %1884
        %1886 = vadd.xlane.f32.xlu0 %v1828
        %v1887 = vpop.xlane.xlu0 %1886
        %1888 = vadd.xlane.f32.xlu0 %v1831
        %v1889 = vpop.xlane.xlu0 %1888
        %1890 = vadd.xlane.f32.xlu0 %v1836
        %v1891 = vpop.xlane.xlu0 %1890
        %1892 = vadd.xlane.f32.xlu0 %v1839
        %v1893 = vpop.xlane.xlu0 %1892
        %1894 = vadd.xlane.f32.xlu0 %v1844
        %v1895 = vpop.xlane.xlu0 %1894
        %1896 = vadd.xlane.f32.xlu0 %v1847
        %v1897 = vpop.xlane.xlu0 %1896
        %1898 = vadd.xlane.f32.xlu0 %v1852
        %v1899 = vpop.xlane.xlu0 %1898
        %1900 = vadd.xlane.f32.xlu0 %v1855
        %v1901 = vpop.xlane.xlu0 %1900
        %1902 = vadd.xlane.f32.xlu0 %v1860
        %v1903 = vpop.xlane.xlu0 %1902
        %1904 = vadd.xlane.f32.xlu0 %v1863
        %v1905 = vpop.xlane.xlu0 %1904
        %1906 = vadd.xlane.f32.xlu0 %v1868
        %v1907 = vpop.xlane.xlu0 %1906
        %1908 = vadd.xlane.f32.xlu0 %v1871
        %v1909 = vpop.xlane.xlu0 %1908
        %1910 = vadd.xlane.f32.xlu0 %v1876
        %v1911 = vpop.xlane.xlu0 %1910
        %1912 = vadd.xlane.f32.xlu0 %v1879
        %v1913 = vpop.xlane.xlu0 %1912
        %v1914 = vrcp.pop 64.0
        %v1915 = vmul.f32 %v1883, %v1914
        %v1916 = vmul.f32 %v1885, %v1914
        %v1917 = vmul.f32 %v1887, %v1914
        %v1918 = vmul.f32 %v1889, %v1914
        %v1919 = vmul.f32 %v1891, %v1914
        %v1920 = vmul.f32 %v1893, %v1914
        %v1921 = vmul.f32 %v1895, %v1914
        %v1922 = vmul.f32 %v1897, %v1914
        %v1923 = vmul.f32 %v1899, %v1914
        %v1924 = vmul.f32 %v1901, %v1914
        %v1925 = vmul.f32 %v1903, %v1914
        %v1926 = vmul.f32 %v1905, %v1914
        %v1927 = vmul.f32 %v1907, %v1914
        %v1928 = vmul.f32 %v1909, %v1914
        %v1929 = vmul.f32 %v1911, %v1914
        %v1930 = vmul.f32 %v1913, %v1914
        %v1931 = vmul.f32 %v1820, %v1820
        %v1932 = vmul.f32 %v1823, %v1823
        %v1933 = vmul.f32 %v1828, %v1828
        %v1934 = vmul.f32 %v1831, %v1831
        %v1935 = vmul.f32 %v1836, %v1836
        %v1936 = vmul.f32 %v1839, %v1839
        %v1937 = vmul.f32 %v1844, %v1844
        %v1938 = vmul.f32 %v1847, %v1847
        %v1939 = vmul.f32 %v1852, %v1852
        %v1940 = vmul.f32 %v1855, %v1855
        %v1941 = vmul.f32 %v1860, %v1860
        %v1942 = vmul.f32 %v1863, %v1863
        %v1943 = vmul.f32 %v1868, %v1868
        %v1944 = vmul.f32 %v1871, %v1871
        %v1945 = vmul.f32 %v1876, %v1876
        %v1946 = vmul.f32 %v1879, %v1879
        %1947 = vadd.xlane.f32.xlu0 %v1931
        %v1948 = vpop.xlane.xlu0 %1947
        %1949 = vadd.xlane.f32.xlu0 %v1932
        %v1950 = vpop.xlane.xlu0 %1949
        %1951 = vadd.xlane.f32.xlu0 %v1933
        %v1952 = vpop.xlane.xlu0 %1951
        %1953 = vadd.xlane.f32.xlu0 %v1934
        %v1954 = vpop.xlane.xlu0 %1953
        %1955 = vadd.xlane.f32.xlu0 %v1935
        %v1956 = vpop.xlane.xlu0 %1955
        %1957 = vadd.xlane.f32.xlu0 %v1936
        %v1958 = vpop.xlane.xlu0 %1957
        %1959 = vadd.xlane.f32.xlu0 %v1937
        %v1960 = vpop.xlane.xlu0 %1959
        %1961 = vadd.xlane.f32.xlu0 %v1938
        %v1962 = vpop.xlane.xlu0 %1961
        %1963 = vadd.xlane.f32.xlu0 %v1939
        %v1964 = vpop.xlane.xlu0 %1963
        %1965 = vadd.xlane.f32.xlu0 %v1940
        %v1966 = vpop.xlane.xlu0 %1965
        %1967 = vadd.xlane.f32.xlu0 %v1941
        %v1968 = vpop.xlane.xlu0 %1967
        %1969 = vadd.xlane.f32.xlu0 %v1942
        %v1970 = vpop.xlane.xlu0 %1969
        %1971 = vadd.xlane.f32.xlu0 %v1943
        %v1972 = vpop.xlane.xlu0 %1971
        %1973 = vadd.xlane.f32.xlu0 %v1944
        %v1974 = vpop.xlane.xlu0 %1973
        %1975 = vadd.xlane.f32.xlu0 %v1945
        %v1976 = vpop.xlane.xlu0 %1975
        %1977 = vadd.xlane.f32.xlu0 %v1946
        %v1978 = vpop.xlane.xlu0 %1977
        %v1979 = vmul.f32 %v1948, %v1914
        %v1980 = vmul.f32 %v1950, %v1914
        %v1981 = vmul.f32 %v1952, %v1914
        %v1982 = vmul.f32 %v1954, %v1914
        %v1983 = vmul.f32 %v1956, %v1914
        %v1984 = vmul.f32 %v1958, %v1914
        %v1985 = vmul.f32 %v1960, %v1914
        %v1986 = vmul.f32 %v1962, %v1914
        %v1987 = vmul.f32 %v1964, %v1914
        %v1988 = vmul.f32 %v1966, %v1914
        %v1989 = vmul.f32 %v1968, %v1914
        %v1990 = vmul.f32 %v1970, %v1914
        %v1991 = vmul.f32 %v1972, %v1914
        %v1992 = vmul.f32 %v1974, %v1914
        %v1993 = vmul.f32 %v1976, %v1914
        %v1994 = vmul.f32 %v1978, %v1914
        %v1995 = vmul.f32 %v1915, %v1915
        %v1996 = vmul.f32 %v1916, %v1916
        %v1997 = vmul.f32 %v1917, %v1917
        %v1998 = vmul.f32 %v1918, %v1918
        %v1999 = vmul.f32 %v1919, %v1919
        %v2000 = vmul.f32 %v1920, %v1920
        %v2001 = vmul.f32 %v1921, %v1921
        %v2002 = vmul.f32 %v1922, %v1922
        %v2003 = vmul.f32 %v1923, %v1923
        %v2004 = vmul.f32 %v1924, %v1924
        %v2005 = vmul.f32 %v1925, %v1925
        %v2006 = vmul.f32 %v1926, %v1926
        %v2007 = vmul.f32 %v1927, %v1927
        %v2008 = vmul.f32 %v1928, %v1928
        %v2009 = vmul.f32 %v1929, %v1929
        %v2010 = vmul.f32 %v1930, %v1930
        %v2011 = vsub.f32 %v1979, %v1995
        %v2012 = vsub.f32 %v1980, %v1996
        %v2013 = vsub.f32 %v1981, %v1997
        %v2014 = vsub.f32 %v1982, %v1998
        %v2015 = vsub.f32 %v1983, %v1999
        %v2016 = vsub.f32 %v1984, %v2000
        %v2017 = vsub.f32 %v1985, %v2001
        %v2018 = vsub.f32 %v1986, %v2002
        %v2019 = vsub.f32 %v1987, %v2003
        %v2020 = vsub.f32 %v1988, %v2004
        %v2021 = vsub.f32 %v1989, %v2005
        %v2022 = vsub.f32 %v1990, %v2006
        %v2023 = vsub.f32 %v1991, %v2007
        %v2024 = vsub.f32 %v1992, %v2008
        %v2025 = vsub.f32 %v1993, %v2009
        %v2026 = vsub.f32 %v1994, %v2010
        %v2027 = vsub.f32 %v1820, %v1915
        %v2028 = vsub.f32 %v1823, %v1916
        %v2029 = vsub.f32 %v1828, %v1917
        %v2030 = vsub.f32 %v1831, %v1918
        %v2031 = vsub.f32 %v1836, %v1919
        %v2032 = vsub.f32 %v1839, %v1920
        %v2033 = vsub.f32 %v1844, %v1921
        %v2034 = vsub.f32 %v1847, %v1922
        %v2035 = vsub.f32 %v1852, %v1923
        %v2036 = vsub.f32 %v1855, %v1924
        %v2037 = vsub.f32 %v1860, %v1925
        %v2038 = vsub.f32 %v1863, %v1926
        %v2039 = vsub.f32 %v1868, %v1927
        %v2040 = vsub.f32 %v1871, %v1928
        %v2041 = vsub.f32 %v1876, %v1929
        %v2042 = vsub.f32 %v1879, %v1930
        %v2043 = vadd.f32 %v2011, 1e-05
        %v2044 = vadd.f32 %v2012, 1e-05
        %v2045 = vadd.f32 %v2013, 1e-05
        %v2046 = vadd.f32 %v2014, 1e-05
        %v2047 = vadd.f32 %v2015, 1e-05
        %v2048 = vadd.f32 %v2016, 1e-05
        %v2049 = vadd.f32 %v2017, 1e-05
        %v2050 = vadd.f32 %v2018, 1e-05
        %v2051 = vadd.f32 %v2019, 1e-05
        %v2052 = vadd.f32 %v2020, 1e-05
        %v2053 = vadd.f32 %v2021, 1e-05
        %v2054 = vadd.f32 %v2022, 1e-05
        %v2055 = vadd.f32 %v2023, 1e-05
        %v2056 = vadd.f32 %v2024, 1e-05
        %v2057 = vadd.f32 %v2025, 1e-05
        %v2058 = vadd.f32 %v2026, 1e-05
        %v2059 = vrsqrt.pop %v2043
        %v2060 = vrsqrt.pop %v2044
        %v2061 = vrsqrt.pop %v2045
        %v2062 = vrsqrt.pop %v2046
        %v2063 = vrsqrt.pop %v2047
        %v2064 = vrsqrt.pop %v2048
        %v2065 = vrsqrt.pop %v2049
        %v2066 = vrsqrt.pop %v2050
        %v2067 = vrsqrt.pop %v2051
        %v2068 = vrsqrt.pop %v2052
        %v2069 = vrsqrt.pop %v2053
        %v2070 = vrsqrt.pop %v2054
        %v2071 = vrsqrt.pop %v2055
        %v2072 = vrsqrt.pop %v2056
        %v2073 = vrsqrt.pop %v2057
        %v2074 = vrsqrt.pop %v2058
        %v2075 = vmul.f32 %v2027, %v2059
        %v2076 = vmul.f32 %v2028, %v2060
        %v2077 = vmul.f32 %v2029, %v2061
        %v2078 = vmul.f32 %v2030, %v2062
        %v2079 = vmul.f32 %v2031, %v2063
        %v2080 = vmul.f32 %v2032, %v2064
        %v2081 = vmul.f32 %v2033, %v2065
        %v2082 = vmul.f32 %v2034, %v2066
        %v2083 = vmul.f32 %v2035, %v2067
        %v2084 = vmul.f32 %v2036, %v2068
        %v2085 = vmul.f32 %v2037, %v2069
        %v2086 = vmul.f32 %v2038, %v2070
        %v2087 = vmul.f32 %v2039, %v2071
        %v2088 = vmul.f32 %v2040, %v2072
        %v2089 = vmul.f32 %v2041, %v2073
        %v2090 = vmul.f32 %v2042, %v2074
        %v2091 = vlaneseq
        %v2092 = vshrl.u32 %v2091, 7
        %v2093 = vsub.s32 1, %v2092
        %v2094 = vrot.slane %v1732, %v2093
        %v2095 = vmul.f32 %v2075, %v2094
        %v2096 = vmul.f32 %v2076, %v2094
        %v2097 = vmul.f32 %v2077, %v2094
        %v2098 = vmul.f32 %v2078, %v2094
        %v2099 = vmul.f32 %v2079, %v2094
        %v2100 = vmul.f32 %v2080, %v2094
        %v2101 = vmul.f32 %v2081, %v2094
        %v2102 = vmul.f32 %v2082, %v2094
        %v2103 = vmul.f32 %v2083, %v2094
        %v2104 = vmul.f32 %v2084, %v2094
        %v2105 = vmul.f32 %v2085, %v2094
        %v2106 = vmul.f32 %v2086, %v2094
        %v2107 = vmul.f32 %v2087, %v2094
        %v2108 = vmul.f32 %v2088, %v2094
        %v2109 = vmul.f32 %v2089, %v2094
        %v2110 = vmul.f32 %v2090, %v2094
        %v2111 = vlaneseq
        %v2112 = vshrl.u32 %v2111, 7
        %v2113 = vsub.s32 2, %v2112
        %v2114 = vrot.slane %v1732, %v2113
        %v2115 = vadd.f32 %v2095, %v2114
        %v2116 = vadd.f32 %v2096, %v2114
        %v2117 = vadd.f32 %v2097, %v2114
        %v2118 = vadd.f32 %v2098, %v2114
        %v2119 = vadd.f32 %v2099, %v2114
        %v2120 = vadd.f32 %v2100, %v2114
        %v2121 = vadd.f32 %v2101, %v2114
        %v2122 = vadd.f32 %v2102, %v2114
        %v2123 = vadd.f32 %v2103, %v2114
        %v2124 = vadd.f32 %v2104, %v2114
        %v2125 = vadd.f32 %v2105, %v2114
        %v2126 = vadd.f32 %v2106, %v2114
        %v2127 = vadd.f32 %v2107, %v2114
        %v2128 = vadd.f32 %v2108, %v2114
        %v2129 = vadd.f32 %v2109, %v2114
        %v2130 = vadd.f32 %v2110, %v2114
        %v2131 = vsub.f32 0.0, %v2115
        %v2132 = vsub.f32 0.0, %v2116
        %v2133 = vsub.f32 0.0, %v2117
        %v2134 = vsub.f32 0.0, %v2118
        %v2135 = vsub.f32 0.0, %v2119
        %v2136 = vsub.f32 0.0, %v2120
        %v2137 = vsub.f32 0.0, %v2121
        %v2138 = vsub.f32 0.0, %v2122
        %v2139 = vsub.f32 0.0, %v2123
        %v2140 = vsub.f32 0.0, %v2124
        %v2141 = vsub.f32 0.0, %v2125
        %v2142 = vsub.f32 0.0, %v2126
        %v2143 = vsub.f32 0.0, %v2127
        %v2144 = vsub.f32 0.0, %v2128
        %v2145 = vsub.f32 0.0, %v2129
        %v2146 = vsub.f32 0.0, %v2130
        %v2147 = vmul.f32 %v2131, 1.442695
        %v2148 = vpow.pop %v2147
        %v2149 = vmul.f32 %v2132, 1.442695
        %v2150 = vpow.pop %v2149
        %v2151 = vmul.f32 %v2133, 1.442695
        %v2152 = vpow.pop %v2151
        %v2153 = vmul.f32 %v2134, 1.442695
        %v2154 = vpow.pop %v2153
        %v2155 = vmul.f32 %v2135, 1.442695
        %v2156 = vpow.pop %v2155
        %v2157 = vmul.f32 %v2136, 1.442695
        %v2158 = vpow.pop %v2157
        %v2159 = vmul.f32 %v2137, 1.442695
        %v2160 = vpow.pop %v2159
        %v2161 = vmul.f32 %v2138, 1.442695
        %v2162 = vpow.pop %v2161
        %v2163 = vmul.f32 %v2139, 1.442695
        %v2164 = vpow.pop %v2163
        %v2165 = vmul.f32 %v2140, 1.442695
        %v2166 = vpow.pop %v2165
        %v2167 = vmul.f32 %v2141, 1.442695
        %v2168 = vpow.pop %v2167
        %v2169 = vmul.f32 %v2142, 1.442695
        %v2170 = vpow.pop %v2169
        %v2171 = vmul.f32 %v2143, 1.442695
        %v2172 = vpow.pop %v2171
        %v2173 = vmul.f32 %v2144, 1.442695
        %v2174 = vpow.pop %v2173
        %v2175 = vmul.f32 %v2145, 1.442695
        %v2176 = vpow.pop %v2175
        %v2177 = vmul.f32 %v2146, 1.442695
        %v2178 = vpow.pop %v2177
        %v2179 = vadd.f32 %v2148, 1.0
        %v2180 = vadd.f32 %v2150, 1.0
        %v2181 = vadd.f32 %v2152, 1.0
        %v2182 = vadd.f32 %v2154, 1.0
        %v2183 = vadd.f32 %v2156, 1.0
        %v2184 = vadd.f32 %v2158, 1.0
        %v2185 = vadd.f32 %v2160, 1.0
        %v2186 = vadd.f32 %v2162, 1.0
        %v2187 = vadd.f32 %v2164, 1.0
        %v2188 = vadd.f32 %v2166, 1.0
        %v2189 = vadd.f32 %v2168, 1.0
        %v2190 = vadd.f32 %v2170, 1.0
        %v2191 = vadd.f32 %v2172, 1.0
        %v2192 = vadd.f32 %v2174, 1.0
        %v2193 = vadd.f32 %v2176, 1.0
        %v2194 = vadd.f32 %v2178, 1.0
        %v2195 = vrcp.pop %v2179
        %v2196 = vrcp.pop %v2180
        %v2197 = vrcp.pop %v2181
        %v2198 = vrcp.pop %v2182
        %v2199 = vrcp.pop %v2183
        %v2200 = vrcp.pop %v2184
        %v2201 = vrcp.pop %v2185
        %v2202 = vrcp.pop %v2186
        %v2203 = vrcp.pop %v2187
        %v2204 = vrcp.pop %v2188
        %v2205 = vrcp.pop %v2189
        %v2206 = vrcp.pop %v2190
        %v2207 = vrcp.pop %v2191
        %v2208 = vrcp.pop %v2192
        %v2209 = vrcp.pop %v2193
        %v2210 = vrcp.pop %v2194
        %2211 = vst [vmem:[%s260] sm:$0xff] %v2195
        %2212 = vst [vmem:[%s260 + $0x8] sm:$0xff] %v2196
        %2213 = vst [vmem:[%s260 + $0x10] sm:$0xff] %v2197
        %2214 = vst [vmem:[%s260 + $0x18] sm:$0xff] %v2198
        %2215 = vst [vmem:[%s260 + $0x20] sm:$0xff] %v2199
        %2216 = vst [vmem:[%s260 + $0x28] sm:$0xff] %v2200
        %2217 = vst [vmem:[%s260 + $0x30] sm:$0xff] %v2201
        %2218 = vst [vmem:[%s260 + $0x38] sm:$0xff] %v2202
        %2219 = vst [vmem:[%s260 + $0x40] sm:$0xff] %v2203
        %2220 = vst [vmem:[%s260 + $0x48] sm:$0xff] %v2204
        %2221 = vst [vmem:[%s260 + $0x50] sm:$0xff] %v2205
        %2222 = vst [vmem:[%s260 + $0x58] sm:$0xff] %v2206
        %2223 = vst [vmem:[%s260 + $0x60] sm:$0xff] %v2207
        %2224 = vst [vmem:[%s260 + $0x68] sm:$0xff] %v2208
        %2225 = vst [vmem:[%s260 + $0x70] sm:$0xff] %v2209
        %2226 = vst [vmem:[%s260 + $0x78] sm:$0xff] %v2210
        %s2227 = sand.u32 %s160, 1
        %s2228 = scalar_lea.sflag [#allocation4], %s2227
        %s2229 = sand.u32 %s160, 1
        %s2230 = smul.addr %s2229, 128
        %s2231 = scalar_lea.vmem [#allocation5], %s2230
        // Predicated region
        $region49: #{tpu_custom_call.1} parent=43 // pred_check
          %p2232 = pneg %p170
        $region50: #{tpu_custom_call.1} parent=43 // pred_check_branch
          %2234 = sbr.rel (%p2232) target = $region52
        $region51: #{tpu_custom_call.1} parent=43 // pred_region
          %s2235 = smul.u32 16, %s21
          %s2237 = ssub.s32 2048, 2048
          %2238 = vsyncadd %s2228, %s2237
          %s2239 = smul.addr %s2235, 128
          %s2240 = scalar_lea.hbm %s6, %s2239
          %s2241 = sshll.u32 %s2231, 4
          %s2242 = int_to_ptr.vmem [resolvable:$true] %s2241
          %2247 = dma.vmem_to_hbm [thread:$0]  %s2242, 2048, %s2240, %s2228, 128, 128, 8
        $region52: #{tpu_custom_call.1} parent=43 // pred_fallthru
          _
      $region44: #{tpu_custom_call.1} parent=5 // pred_fallthru
        _
      %p2248 = scmp.le.s32.totalorder 2, %s16
      // Predicated region
      $region53: #{tpu_custom_call.1} parent=5 // pred_check
        %p2249 = pneg %p2248
      $region54: #{tpu_custom_call.1} parent=5 // pred_check_branch
        %2251 = sbr.rel (%p2249) target = $region56
      $region55: #{tpu_custom_call.1} parent=5 // pred_region
        %s2252 = ssub.s32 %s16, 2
        // Predicated region
        $region57: #{tpu_custom_call.1} parent=55 // pred_check
          %p2253 = pneg %p176
        $region58: #{tpu_custom_call.1} parent=55 // pred_check_branch
          %2255 = sbr.rel (%p2253) target = $region60
        $region59: #{tpu_custom_call.1} parent=55 // pred_region
          %s2256 = sand.u32 %s161, 1
          %s2257 = scalar_lea.sflag [#allocation4], %s2256
          %s2258 = sand.u32 %s161, 1
          %s2259 = smul.addr %s2258, 128
          %s2260 = scalar_lea.vmem [#allocation5], %s2259
          %2261 = dma.done %s2257, 2048
        $region60: #{tpu_custom_call.1} parent=55 // pred_fallthru
          _
      $region56: #{tpu_custom_call.1} parent=5 // pred_fallthru
        _
    $region6: #{tpu_custom_call.1} parent=1 // loop_footer
      %s20 = sadd.s32 1, %s16
    $region7: #{tpu_custom_call.1} parent=1 // loop_footer_branch
      %15 = sbr.rel target = $region3
    $region8: #{tpu_custom_call.1} parent=1 // loop_exit
      _
    %2262 = vsyncpa [#allocation3], 1
    %s2263 = scalar_lea.sflag [#allocation3], 1
    %2264 = vsyncpa %s2263, 1
    %2265 = vsyncpa [#allocation4], 1
    %s2266 = scalar_lea.sflag [#allocation4], 1
    %2267 = vsyncpa %s2266, 1

</llo_original>
